<compile_context>
chip_gen: v7x
topology: tpu7x:2x2x1
jax: 0.10.0
libtpu: 0.0.40
codegen_flags: <defaults>
</compile_context>

<pallas_src>
import numpy as np
import jax
import jax.numpy as jnp
from jax.experimental import pallas as pl
from jax.experimental.pallas import tpu as pltpu


def _round_up(x, m):
    return (x + m - 1) // m * m


# --------------------------------------------------------------------------
# numpy helpers (trace-time constants)
# --------------------------------------------------------------------------

def _bilinear_matrix_1d(n_in, n_out):
    """align_corners=True 1-D interpolation matrix (n_out, n_in)."""
    i = np.arange(n_out, dtype=np.float64)
    src = np.zeros(n_out) if n_in == 1 else i * (n_in - 1) / (n_out - 1)
    i0 = np.clip(np.floor(src).astype(np.int64), 0, n_in - 1)
    i1 = np.minimum(i0 + 1, n_in - 1)
    w1 = src - i0
    w0 = 1.0 - w1
    a = np.zeros((n_out, n_in), np.float32)
    np.add.at(a, (np.arange(n_out), i0), w0)
    np.add.at(a, (np.arange(n_out), i1), w1)
    return a


def _upsample_matrix(hin, win, pref, length, wr):
    """(hin*win, length): x_flat @ M == bilinear x2 upsample laid out in the
    zero-padded flat-row layout (pixel (i,j) at column pref + i*wr + j)."""
    ho, wo = 2 * hin, 2 * win
    ah = _bilinear_matrix_1d(hin, ho)
    aw = _bilinear_matrix_1d(win, wo)
    m = np.zeros((hin * win, length), np.float32)
    for i in range(ho):
        for j in range(wo):
            m[:, pref + i * wr + j] = np.outer(ah[i], aw[j]).reshape(-1)
    return m


def _valid_mask(length, pref, ho, wo, wr):
    """1 where a flat-layout column holds a real pixel, 0 on pad/garbage."""
    l = np.arange(length)
    ok = (l >= pref) & (l - pref < ho * wr) & (((l - pref) % wr) < wo)
    return ok.astype(np.float32)[None, :]


# --------------------------------------------------------------------------
# Fused block kernel: [optional upsample matmul] + chain of 3x3 convs
# --------------------------------------------------------------------------

def _make_block_kernel(n, entry, acts, cins, lens, wr, taps_phase):
    offs = tuple(dy * wr + dx for dy in range(3) for dx in range(3))

    def kernel(*refs):
        it = iter(refs)
        x_ref = next(it)
        m_ref = next(it) if entry == "upsample" else None
        ws, bs = [], []
        for _ in range(n):
            ws.append(next(it))
            bs.append(next(it))
        masks = [next(it) for _ in range(n - 1)]
        o_ref = next(it)
        buf0_ref = next(it) if entry == "upsample" else None
        p_refs = [next(it) for _ in range(n)]
        buf_refs = [next(it) for _ in range(n - 1)]

        if entry == "upsample":
            # Single matmul: bilinear x2 directly into the padded flat layout.
            up = jnp.dot(x_ref[0], m_ref[...], preferred_element_type=jnp.float32)
            buf0_ref[...] = up.astype(jnp.bfloat16)

        for k in range(n):
            lo = lens[k + 1]
            cin = cins[k]
            p_ref = p_refs[k]
            # im2col in VMEM: 9 shifted windows stacked along K.
            for t in range(9):
                if k == 0 and entry == "phases":
                    ph, off = taps_phase[t]
                    win = x_ref[0, ph, :, off:off + lo]
                elif k == 0 and entry == "flat":
                    win = x_ref[0, :, offs[t]:offs[t] + lo]
                else:
                    src = buf0_ref if k == 0 else buf_refs[k - 1]
                    win = src[:, offs[t]:offs[t] + lo]
                p_ref[t * cin:(t + 1) * cin, :] = win
            # One MXU matmul per conv, f32 accumulate.
            acc = jnp.dot(ws[k][...], p_ref[...],
                          preferred_element_type=jnp.float32)
            acc = acc + bs[k][...]
            if acts[k] == "relu":
                acc = jnp.maximum(acc, 0.0)
            else:  # sigmoid, exact, on the EUP
                acc = 0.5 * (jnp.tanh(0.5 * acc) + 1.0)
            if k < n - 1:
                # Zero pad ring / garbage cols so the next conv's taps see a
                # correctly padded image, then keep it bf16 in VMEM.
                buf_refs[k][...] = (acc * masks[k][...]).astype(buf_refs[k].dtype)
            else:
                o_ref[0] = acc.astype(o_ref.dtype)

    return kernel


# --------------------------------------------------------------------------
# Wrapper: layout prep (XLA glue, tiny) + pallas_call
# --------------------------------------------------------------------------

def _w2d(w, cin_pad):
    """(Cout,Cin,3,3) torch-layout -> (Cout, 9*cin_pad) bf16, tap-major K."""
    cout, cin = w.shape[0], w.shape[1]
    wt = jnp.transpose(jnp.asarray(w, jnp.float32), (0, 2, 3, 1))  # (Cout,3,3,Cin)
    if cin_pad != cin:
        wt = jnp.pad(wt, ((0, 0), (0, 0), (0, 0), (0, cin_pad - cin)))
    return wt.reshape(cout, 9 * cin_pad).astype(jnp.bfloat16)


def fused_block(x, convs, *, entry, final_act, out_dtype):
    """Run [optional 2x-upsample] + a chain of 3x3 convs as one pallas_call.

    x      : (B, Cin, H, W)
    convs  : list of (w (Cout,Cin,3,3), b (Cout,)) applied in order
    entry  : 'flat'     -> first conv stride 1 (input at output resolution)
             'phases'   -> first conv stride 2 (polyphase split of the input)
             'upsample' -> bilinear x2 first, then stride-1 convs
    Returns (B, Cout_last, Ho, Wo) in out_dtype.
    """
    n = len(convs)
    bsz, cin0 = x.shape[0], x.shape[1]
    if entry == "flat":
        ho, wo = x.shape[2], x.shape[3]
    elif entry == "phases":
        ho, wo = x.shape[2] // 2, x.shape[3] // 2
    else:
        ho, wo = 2 * x.shape[2], 2 * x.shape[3]
    wr = wo + 2          # flat row width (image + 2 halo columns)
    pp = wr + 1          # per-conv prefix shift (one halo row + one column)

    # lens[k] = length of conv k's input buffer; lens[n] = lane-dense output.
    lens = [0] * (n + 1)
    lens[n] = _round_up(ho * wr, 128)
    for k in range(n - 1, -1, -1):
        lens[k] = lens[k + 1] + 2 * wr + 2

    cins, couts, weights, biases = [], [], [], []
    for k, (w, b) in enumerate(convs):
        cout, cin = w.shape[0], w.shape[1]
        cp = _round_up(cin, 8) if k == 0 else cin    # sublane-align entry cin
        cins.append(cp)
        couts.append(cout)
        weights.append(_w2d(w, cp))
        biases.append(jnp.asarray(b, jnp.float32).reshape(cout, 1))

    x = x.astype(jnp.bfloat16)
    cp0 = cins[0]
    taps_phase = None

    if entry == "flat":
        pref_in = n * pp
        xin = jnp.pad(x, ((0, 0), (0, cp0 - cin0), (0, 0), (0, wr - wo)))
        xin = xin.reshape(bsz, cp0, ho * wr)
        xin = jnp.pad(xin, ((0, 0), (0, 0),
                            (pref_in, lens[0] - pref_in - ho * wr)))
    elif entry == "phases":
        pref_in = (n - 1) * pp
        len_ph = lens[1] + wr + 2
        xp = jnp.pad(x, ((0, 0), (0, cp0 - cin0), (1, 1), (1, 3)))
        phases = [xp[:, :, py::2, px::2] for py in (0, 1) for px in (0, 1)]
        xin = jnp.stack(phases, axis=1)                    # (B,4,cp0,ho+1,wr)
        xin = xin.reshape(bsz, 4, cp0, (ho + 1) * wr)
        xin = jnp.pad(xin, ((0, 0), (0, 0), (0, 0),
                            (pref_in, len_ph - pref_in - (ho + 1) * wr)))
        taps_phase = tuple(((dy % 2) * 2 + (dx % 2), (dy // 2) * wr + (dx // 2))
                           for dy in range(3) for dx in range(3))
    else:  # upsample
        hin, win = x.shape[2], x.shape[3]
        xin = jnp.pad(x, ((0, 0), (0, cp0 - cin0), (0, 0), (0, 0)))
        xin = xin.reshape(bsz, cp0, hin * win)

    inputs = [xin]
    in_specs = [pl.BlockSpec((1,) + xin.shape[1:],
                             lambda i, nd=xin.ndim: (i,) + (0,) * (nd - 1))]

    if entry == "upsample":
        m_np = _upsample_matrix(hin, win, n * pp, lens[0], wr)
        m_arr = jnp.asarray(m_np, jnp.bfloat16)
        inputs.append(m_arr)
        in_specs.append(pl.BlockSpec(m_arr.shape, lambda i: (0, 0)))

    for wk, bk in zip(weights, biases):
        inputs.append(wk)
        in_specs.append(pl.BlockSpec(wk.shape, lambda i: (0, 0)))
        inputs.append(bk)
        in_specs.append(pl.BlockSpec(bk.shape, lambda i: (0, 0)))

    for k in range(n - 1):
        mk = jnp.asarray(_valid_mask(lens[k + 1], (n - 1 - k) * pp, ho, wo, wr))
        inputs.append(mk)
        in_specs.append(pl.BlockSpec(mk.shape, lambda i: (0, 0)))

    scratch = []
    if entry == "upsample":
        scratch.append(pltpu.VMEM((cp0, lens[0]), jnp.bfloat16))      # upsampled
    for k in range(n):
        scratch.append(pltpu.VMEM((9 * cins[k], lens[k + 1]), jnp.bfloat16))
    for k in range(n - 1):
        scratch.append(pltpu.VMEM((couts[k], lens[k + 1]), jnp.bfloat16))

    acts = ["relu"] * (n - 1) + [final_act]
    kernel = _make_block_kernel(n, entry, acts, cins, lens, wr, taps_phase)

    out = pl.pallas_call(
        kernel,
        out_shape=jax.ShapeDtypeStruct((bsz, couts[-1], lens[n]), out_dtype),
        grid=(bsz,),
        in_specs=in_specs,
        out_specs=pl.BlockSpec((1, couts[-1], lens[n]), lambda i: (i, 0, 0)),
        scratch_shapes=scratch,
        compiler_params=pltpu.CompilerParams(
            dimension_semantics=("parallel",)),
    )(*inputs)

    # Drop halo columns / 128-rounding tail (tiny XLA slice).
    out = out[:, :, :ho * wr].reshape(bsz, couts[-1], ho, wr)[:, :, :, :wo]
    return out


# --------------------------------------------------------------------------
# Parameters (deterministic, synthetic) and forward pass
# --------------------------------------------------------------------------

def init_params(key, num_layers, start_channels):
    c = start_channels
    keys = iter(jax.random.split(key, 4 * num_layers + 2))

    def conv(cin, cout):
        k1, k2 = jax.random.split(next(keys))
        s = 1.0 / np.sqrt(9 * cin)
        w = jax.random.uniform(k1, (cout, cin, 3, 3), jnp.float32, -s, s)
        b = jax.random.uniform(k2, (cout,), jnp.float32, -s, s)
        return (w, b)

    params = {"conv_in": conv(3, c), "down": [], "up": []}
    for i in range(num_layers):
        cin, cout = c * 2 ** i, c * 2 ** (i + 1)
        params["down"].append((conv(cin, cout), conv(cout, cout)))
    io = [(c * 2 ** (num_layers + 1), c * 2 ** num_layers)]
    io += [(c * 2 ** (i + 1), c * 2 ** i) for i in range(num_layers - 1, 0, -1)]
    for cin, cout in io:
        params["up"].append((conv(cin, cout), conv(cout, cout)))
    params["conv_out"] = conv(2 * c, 3)
    return params


@jax.jit
def net_forward(params, frame1_nchw, frame2_nchw):
    b = frame1_nchw.shape[0]
    # frame1 and frame2 share the down path -> batch them together.
    x = jnp.concatenate([frame1_nchw, frame2_nchw], axis=0).astype(jnp.float32)
    x = fused_block(x, [params["conv_in"]], entry="flat",
                    final_act="relu", out_dtype=jnp.bfloat16)
    for layer in params["down"]:                       # DownConv (strided conv)
        x = fused_block(x, list(layer), entry="phases",
                        final_act="relu", out_dtype=jnp.bfloat16)
    x = jnp.concatenate([x[:b], x[b:]], axis=1)        # torch.cat(dim=1)
    ups = params["up"]
    for layer in ups[:-1]:                             # UpConv (bilinear)
        x = fused_block(x, list(layer), entry="upsample",
                        final_act="relu", out_dtype=jnp.bfloat16)
    # Last UpConv fused with conv_out + sigmoid output activation.
    x = fused_block(x, list(ups[-1]) + [params["conv_out"]], entry="upsample",
                    final_act="sigmoid", out_dtype=jnp.float32)
    return x


# --------------------------------------------------------------------------
if __name__ == "__main__":
    NUM_LAYERS = 2
    START_CHANNELS = 4
    B, H, W = 2, 16, 16

    key = jax.random.PRNGKey(0)
    kp, k1, k2 = jax.random.split(key, 3)
    params = init_params(kp, NUM_LAYERS, START_CHANNELS)

    frame1 = jax.random.normal(k1, (B, 3, H, W), jnp.float32)   # NCHW, like torch
    frame2 = jax.random.normal(k2, (B, 3, H, W), jnp.float32)

    out = jax.block_until_ready(net_forward(params, frame1, frame2))

    assert out.shape == (B, 3, H, W), out.shape
    assert bool(jnp.all(jnp.isfinite(out)))
    assert bool(jnp.all((out >= 0.0) & (out <= 1.0)))            # sigmoid range
    print("KERNEL_OK")
</pallas_src>

<mosaic_0001>
module attributes {stable_mosaic.version = 11 : i64} {
  func.func @kernel(%arg0: i32, %arg1: memref<1x8x422xbf16, #tpu.memory_space<vmem>>, %arg2: memref<4x72xbf16, #tpu.memory_space<vmem>>, %arg3: memref<4x1xf32, #tpu.memory_space<vmem>>, %arg4: memref<1x4x384xbf16, #tpu.memory_space<vmem>>, %arg5: memref<72x384xbf16, #tpu.memory_space<vmem>>) attributes {dimension_semantics = [#tpu.dimension_semantics<parallel>], iteration_bounds = array<i64: 4>, scalar_prefetch = 0 : i64, scratch_operands = 1 : i64, tpu.core_type = #tpu.core_type<tc>, window_params = [{transform_indices = @transform_0, window_bounds = array<i64: 1, 8, 422>}, {pipeline_mode = #tpu.pipeline_mode<synchronous>, transform_indices = @transform_1, window_bounds = array<i64: 4, 72>}, {pipeline_mode = #tpu.pipeline_mode<synchronous>, transform_indices = @transform_2, window_bounds = array<i64: 4, 1>}, {transform_indices = @transform_3, window_bounds = array<i64: 1, 4, 384>}]} {
    %c0 = arith.constant 0 : index
    %c0_0 = arith.constant 0 : index
    %c0_1 = arith.constant 0 : index
    %0 = vector.load %arg1[%c0, %c0_0, %c0_1] : memref<1x8x422xbf16, #tpu.memory_space<vmem>>, vector<1x8x384xbf16>
    %1 = vector.shape_cast %0 : vector<1x8x384xbf16> to vector<8x384xbf16>
    %c0_2 = arith.constant 0 : index
    %c0_3 = arith.constant 0 : index
    %2 = vector.load %arg5[%c0_2, %c0_3] : memref<72x384xbf16, #tpu.memory_space<vmem>>, vector<8x384xbf16>
    tpu.vector_store %arg5[%c0_2, %c0_3], %1 {strides = array<i32>} : memref<72x384xbf16, #tpu.memory_space<vmem>>, vector<8x384xbf16>,
    %c0_4 = arith.constant 0 : index
    %c0_5 = arith.constant 0 : index
    %c1 = arith.constant 1 : index
    %3 = vector.load %arg1[%c0_4, %c0_5, %c1] : memref<1x8x422xbf16, #tpu.memory_space<vmem>>, vector<1x8x384xbf16>
    %4 = vector.shape_cast %3 : vector<1x8x384xbf16> to vector<8x384xbf16>
    %c8 = arith.constant 8 : index
    %c0_6 = arith.constant 0 : index
    %5 = vector.load %arg5[%c8, %c0_6] : memref<72x384xbf16, #tpu.memory_space<vmem>>, vector<8x384xbf16>
    tpu.vector_store %arg5[%c8, %c0_6], %4 {strides = array<i32>} : memref<72x384xbf16, #tpu.memory_space<vmem>>, vector<8x384xbf16>,
    %c0_7 = arith.constant 0 : index
    %c0_8 = arith.constant 0 : index
    %c2 = arith.constant 2 : index
    %6 = vector.load %arg1[%c0_7, %c0_8, %c2] : memref<1x8x422xbf16, #tpu.memory_space<vmem>>, vector<1x8x384xbf16>
    %7 = vector.shape_cast %6 : vector<1x8x384xbf16> to vector<8x384xbf16>
    %c16 = arith.constant 16 : index
    %c0_9 = arith.constant 0 : index
    %8 = vector.load %arg5[%c16, %c0_9] : memref<72x384xbf16, #tpu.memory_space<vmem>>, vector<8x384xbf16>
    tpu.vector_store %arg5[%c16, %c0_9], %7 {strides = array<i32>} : memref<72x384xbf16, #tpu.memory_space<vmem>>, vector<8x384xbf16>,
    %c0_10 = arith.constant 0 : index
    %c0_11 = arith.constant 0 : index
    %c18 = arith.constant 18 : index
    %9 = vector.load %arg1[%c0_10, %c0_11, %c18] : memref<1x8x422xbf16, #tpu.memory_space<vmem>>, vector<1x8x384xbf16>
    %10 = vector.shape_cast %9 : vector<1x8x384xbf16> to vector<8x384xbf16>
    %c24 = arith.constant 24 : index
    %c0_12 = arith.constant 0 : index
    %11 = vector.load %arg5[%c24, %c0_12] : memref<72x384xbf16, #tpu.memory_space<vmem>>, vector<8x384xbf16>
    tpu.vector_store %arg5[%c24, %c0_12], %10 {strides = array<i32>} : memref<72x384xbf16, #tpu.memory_space<vmem>>, vector<8x384xbf16>,
    %c0_13 = arith.constant 0 : index
    %c0_14 = arith.constant 0 : index
    %c19 = arith.constant 19 : index
    %12 = vector.load %arg1[%c0_13, %c0_14, %c19] : memref<1x8x422xbf16, #tpu.memory_space<vmem>>, vector<1x8x384xbf16>
    %13 = vector.shape_cast %12 : vector<1x8x384xbf16> to vector<8x384xbf16>
    %c32 = arith.constant 32 : index
    %c0_15 = arith.constant 0 : index
    %14 = vector.load %arg5[%c32, %c0_15] : memref<72x384xbf16, #tpu.memory_space<vmem>>, vector<8x384xbf16>
    tpu.vector_store %arg5[%c32, %c0_15], %13 {strides = array<i32>} : memref<72x384xbf16, #tpu.memory_space<vmem>>, vector<8x384xbf16>,
    %c0_16 = arith.constant 0 : index
    %c0_17 = arith.constant 0 : index
    %c20 = arith.constant 20 : index
    %15 = vector.load %arg1[%c0_16, %c0_17, %c20] : memref<1x8x422xbf16, #tpu.memory_space<vmem>>, vector<1x8x384xbf16>
    %16 = vector.shape_cast %15 : vector<1x8x384xbf16> to vector<8x384xbf16>
    %c40 = arith.constant 40 : index
    %c0_18 = arith.constant 0 : index
    %17 = vector.load %arg5[%c40, %c0_18] : memref<72x384xbf16, #tpu.memory_space<vmem>>, vector<8x384xbf16>
    tpu.vector_store %arg5[%c40, %c0_18], %16 {strides = array<i32>} : memref<72x384xbf16, #tpu.memory_space<vmem>>, vector<8x384xbf16>,
    %c0_19 = arith.constant 0 : index
    %c0_20 = arith.constant 0 : index
    %c36 = arith.constant 36 : index
    %18 = vector.load %arg1[%c0_19, %c0_20, %c36] : memref<1x8x422xbf16, #tpu.memory_space<vmem>>, vector<1x8x384xbf16>
    %19 = vector.shape_cast %18 : vector<1x8x384xbf16> to vector<8x384xbf16>
    %c48 = arith.constant 48 : index
    %c0_21 = arith.constant 0 : index
    %20 = vector.load %arg5[%c48, %c0_21] : memref<72x384xbf16, #tpu.memory_space<vmem>>, vector<8x384xbf16>
    tpu.vector_store %arg5[%c48, %c0_21], %19 {strides = array<i32>} : memref<72x384xbf16, #tpu.memory_space<vmem>>, vector<8x384xbf16>,
    %c0_22 = arith.constant 0 : index
    %c0_23 = arith.constant 0 : index
    %c37 = arith.constant 37 : index
    %21 = vector.load %arg1[%c0_22, %c0_23, %c37] : memref<1x8x422xbf16, #tpu.memory_space<vmem>>, vector<1x8x384xbf16>
    %22 = vector.shape_cast %21 : vector<1x8x384xbf16> to vector<8x384xbf16>
    %c56 = arith.constant 56 : index
    %c0_24 = arith.constant 0 : index
    %23 = vector.load %arg5[%c56, %c0_24] : memref<72x384xbf16, #tpu.memory_space<vmem>>, vector<8x384xbf16>
    tpu.vector_store %arg5[%c56, %c0_24], %22 {strides = array<i32>} : memref<72x384xbf16, #tpu.memory_space<vmem>>, vector<8x384xbf16>,
    %c0_25 = arith.constant 0 : index
    %c0_26 = arith.constant 0 : index
    %c38 = arith.constant 38 : index
    %24 = vector.load %arg1[%c0_25, %c0_26, %c38] : memref<1x8x422xbf16, #tpu.memory_space<vmem>>, vector<1x8x384xbf16>
    %25 = vector.shape_cast %24 : vector<1x8x384xbf16> to vector<8x384xbf16>
    %c64 = arith.constant 64 : index
    %c0_27 = arith.constant 0 : index
    %26 = vector.load %arg5[%c64, %c0_27] : memref<72x384xbf16, #tpu.memory_space<vmem>>, vector<8x384xbf16>
    tpu.vector_store %arg5[%c64, %c0_27], %25 {strides = array<i32>} : memref<72x384xbf16, #tpu.memory_space<vmem>>, vector<8x384xbf16>,
    %c0_28 = arith.constant 0 : index
    %c0_29 = arith.constant 0 : index
    %27 = vector.load %arg2[%c0_28, %c0_29] : memref<4x72xbf16, #tpu.memory_space<vmem>>, vector<4x72xbf16>
    %c0_30 = arith.constant 0 : index
    %c0_31 = arith.constant 0 : index
    %28 = vector.load %arg5[%c0_30, %c0_31] : memref<72x384xbf16, #tpu.memory_space<vmem>>, vector<72x384xbf16>
    %cst = arith.constant dense<0.000000e+00> : vector<4x384xf32>
    %29 = tpu.matmul %27, %28, %cst {dimension_numbers = #tpu.dot_dimension_numbers<[1], [0], [0], [1], [0, 0, 1, 1], [], []>} : vector<4x72xbf16>, vector<72x384xbf16>, vector<4x384xf32> -> vector<4x384xf32>
    %c0_32 = arith.constant 0 : index
    %c0_33 = arith.constant 0 : index
    %30 = vector.load %arg3[%c0_32, %c0_33] : memref<4x1xf32, #tpu.memory_space<vmem>>, vector<4x1xf32>
    %31 = vector.broadcast %30 : vector<4x1xf32> to vector<4x384xf32>
    %32 = arith.addf %29, %31 : vector<4x384xf32>
    %cst_34 = arith.constant 0.000000e+00 : f32
    %33 = vector.broadcast %cst_34 : f32 to vector<4x384xf32>
    %34 = arith.maximumf %32, %33 : vector<4x384xf32>
    %35 = arith.truncf %34 : vector<4x384xf32> to vector<4x384xbf16>
    %c0_35 = arith.constant 0 : index
    %c0_36 = arith.constant 0 : index
    %c0_37 = arith.constant 0 : index
    %36 = vector.load %arg4[%c0_35, %c0_36, %c0_37] : memref<1x4x384xbf16, #tpu.memory_space<vmem>>, vector<1x4x384xbf16>
    %37 = vector.shape_cast %36 : vector<1x4x384xbf16> to vector<4x384xbf16>
    %38 = vector.shape_cast %35 : vector<4x384xbf16> to vector<1x4x384xbf16>
    tpu.vector_store %arg4[%c0_35, %c0_36, %c0_37], %38 {strides = array<i32>} : memref<1x4x384xbf16, #tpu.memory_space<vmem>>, vector<1x4x384xbf16>,
    return
  }
  func.func @transform_0(%arg0: i32) -> (i32, i32, i32) {
    %c0_i32 = arith.constant 0 : i32
    %c0_i32_0 = arith.constant 0 : i32
    %c0_i32_1 = arith.constant 0 : i32
    return %arg0, %c0_i32, %c0_i32_0 : i32, i32, i32
  }
  func.func @transform_1(%arg0: i32) -> (i32, i32) {
    %c0_i32 = arith.constant 0 : i32
    %c0_i32_0 = arith.constant 0 : i32
    %c0_i32_1 = arith.constant 0 : i32
    return %c0_i32, %c0_i32_0 : i32, i32
  }
  func.func @transform_2(%arg0: i32) -> (i32, i32) {
    %c0_i32 = arith.constant 0 : i32
    %c0_i32_0 = arith.constant 0 : i32
    %c0_i32_1 = arith.constant 0 : i32
    return %c0_i32, %c0_i32_0 : i32, i32
  }
  func.func @transform_3(%arg0: i32) -> (i32, i32, i32) {
    %c0_i32 = arith.constant 0 : i32
    %c0_i32_0 = arith.constant 0 : i32
    %c0_i32_1 = arith.constant 0 : i32
    return %arg0, %c0_i32, %c0_i32_0 : i32, i32, i32
  }
}

module attributes {stable_mosaic.version = 11 : i64} {
  func.func @kernel(%arg0: i32, %arg1: memref<1x4x8x162xbf16, #tpu.memory_space<vmem>>, %arg2: memref<8x72xbf16, #tpu.memory_space<vmem>>, %arg3: memref<8x1xf32, #tpu.memory_space<vmem>>, %arg4: memref<8x72xbf16, #tpu.memory_space<vmem>>, %arg5: memref<8x1xf32, #tpu.memory_space<vmem>>, %arg6: memref<1x150xf32, #tpu.memory_space<vmem>>, %arg7: memref<1x8x128xbf16, #tpu.memory_space<vmem>>, %arg8: memref<72x150xbf16, #tpu.memory_space<vmem>>, %arg9: memref<72x128xbf16, #tpu.memory_space<vmem>>, %arg10: memref<8x150xbf16, #tpu.memory_space<vmem>>) attributes {dimension_semantics = [#tpu.dimension_semantics<parallel>], iteration_bounds = array<i64: 4>, scalar_prefetch = 0 : i64, scratch_operands = 3 : i64, tpu.core_type = #tpu.core_type<tc>, window_params = [{transform_indices = @transform_0, window_bounds = array<i64: 1, 4, 8, 162>}, {pipeline_mode = #tpu.pipeline_mode<synchronous>, transform_indices = @transform_1, window_bounds = array<i64: 8, 72>}, {pipeline_mode = #tpu.pipeline_mode<synchronous>, transform_indices = @transform_2, window_bounds = array<i64: 8, 1>}, {pipeline_mode = #tpu.pipeline_mode<synchronous>, transform_indices = @transform_3, window_bounds = array<i64: 8, 72>}, {pipeline_mode = #tpu.pipeline_mode<synchronous>, transform_indices = @transform_4, window_bounds = array<i64: 8, 1>}, {pipeline_mode = #tpu.pipeline_mode<synchronous>, transform_indices = @transform_5, window_bounds = array<i64: 1, 150>}, {transform_indices = @transform_6, window_bounds = array<i64: 1, 8, 128>}]} {
    %c0 = arith.constant 0 : index
    %c0_0 = arith.constant 0 : index
    %c0_1 = arith.constant 0 : index
    %c0_2 = arith.constant 0 : index
    %0 = vector.load %arg1[%c0, %c0_0, %c0_1, %c0_2] : memref<1x4x8x162xbf16, #tpu.memory_space<vmem>>, vector<1x1x8x150xbf16>
    %1 = vector.shape_cast %0 : vector<1x1x8x150xbf16> to vector<8x150xbf16>
    %c0_3 = arith.constant 0 : index
    %c0_4 = arith.constant 0 : index
    %2 = vector.load %arg8[%c0_3, %c0_4] : memref<72x150xbf16, #tpu.memory_space<vmem>>, vector<8x150xbf16>
    tpu.vector_store %arg8[%c0_3, %c0_4], %1 {strides = array<i32>} : memref<72x150xbf16, #tpu.memory_space<vmem>>, vector<8x150xbf16>,
    %c0_5 = arith.constant 0 : index
    %c1 = arith.constant 1 : index
    %c0_6 = arith.constant 0 : index
    %c0_7 = arith.constant 0 : index
    %3 = vector.load %arg1[%c0_5, %c1, %c0_6, %c0_7] : memref<1x4x8x162xbf16, #tpu.memory_space<vmem>>, vector<1x1x8x150xbf16>
    %4 = vector.shape_cast %3 : vector<1x1x8x150xbf16> to vector<8x150xbf16>
    %c8 = arith.constant 8 : index
    %c0_8 = arith.constant 0 : index
    %5 = vector.load %arg8[%c8, %c0_8] : memref<72x150xbf16, #tpu.memory_space<vmem>>, vector<8x150xbf16>
    tpu.vector_store %arg8[%c8, %c0_8], %4 {strides = array<i32>} : memref<72x150xbf16, #tpu.memory_space<vmem>>, vector<8x150xbf16>,
    %c0_9 = arith.constant 0 : index
    %c0_10 = arith.constant 0 : index
    %c0_11 = arith.constant 0 : index
    %c1_12 = arith.constant 1 : index
    %6 = vector.load %arg1[%c0_9, %c0_10, %c0_11, %c1_12] : memref<1x4x8x162xbf16, #tpu.memory_space<vmem>>, vector<1x1x8x150xbf16>
    %7 = vector.shape_cast %6 : vector<1x1x8x150xbf16> to vector<8x150xbf16>
    %c16 = arith.constant 16 : index
    %c0_13 = arith.constant 0 : index
    %8 = vector.load %arg8[%c16, %c0_13] : memref<72x150xbf16, #tpu.memory_space<vmem>>, vector<8x150xbf16>
    tpu.vector_store %arg8[%c16, %c0_13], %7 {strides = array<i32>} : memref<72x150xbf16, #tpu.memory_space<vmem>>, vector<8x150xbf16>,
    %c0_14 = arith.constant 0 : index
    %c2 = arith.constant 2 : index
    %c0_15 = arith.constant 0 : index
    %c0_16 = arith.constant 0 : index
    %9 = vector.load %arg1[%c0_14, %c2, %c0_15, %c0_16] : memref<1x4x8x162xbf16, #tpu.memory_space<vmem>>, vector<1x1x8x150xbf16>
    %10 = vector.shape_cast %9 : vector<1x1x8x150xbf16> to vector<8x150xbf16>
    %c24 = arith.constant 24 : index
    %c0_17 = arith.constant 0 : index
    %11 = vector.load %arg8[%c24, %c0_17] : memref<72x150xbf16, #tpu.memory_space<vmem>>, vector<8x150xbf16>
    tpu.vector_store %arg8[%c24, %c0_17], %10 {strides = array<i32>} : memref<72x150xbf16, #tpu.memory_space<vmem>>, vector<8x150xbf16>,
    %c0_18 = arith.constant 0 : index
    %c3 = arith.constant 3 : index
    %c0_19 = arith.constant 0 : index
    %c0_20 = arith.constant 0 : index
    %12 = vector.load %arg1[%c0_18, %c3, %c0_19, %c0_20] : memref<1x4x8x162xbf16, #tpu.memory_space<vmem>>, vector<1x1x8x150xbf16>
    %13 = vector.shape_cast %12 : vector<1x1x8x150xbf16> to vector<8x150xbf16>
    %c32 = arith.constant 32 : index
    %c0_21 = arith.constant 0 : index
    %14 = vector.load %arg8[%c32, %c0_21] : memref<72x150xbf16, #tpu.memory_space<vmem>>, vector<8x150xbf16>
    tpu.vector_store %arg8[%c32, %c0_21], %13 {strides = array<i32>} : memref<72x150xbf16, #tpu.memory_space<vmem>>, vector<8x150xbf16>,
    %c0_22 = arith.constant 0 : index
    %c2_23 = arith.constant 2 : index
    %c0_24 = arith.constant 0 : index
    %c1_25 = arith.constant 1 : index
    %15 = vector.load %arg1[%c0_22, %c2_23, %c0_24, %c1_25] : memref<1x4x8x162xbf16, #tpu.memory_space<vmem>>, vector<1x1x8x150xbf16>
    %16 = vector.shape_cast %15 : vector<1x1x8x150xbf16> to vector<8x150xbf16>
    %c40 = arith.constant 40 : index
    %c0_26 = arith.constant 0 : index
    %17 = vector.load %arg8[%c40, %c0_26] : memref<72x150xbf16, #tpu.memory_space<vmem>>, vector<8x150xbf16>
    tpu.vector_store %arg8[%c40, %c0_26], %16 {strides = array<i32>} : memref<72x150xbf16, #tpu.memory_space<vmem>>, vector<8x150xbf16>,
    %c0_27 = arith.constant 0 : index
    %c0_28 = arith.constant 0 : index
    %c0_29 = arith.constant 0 : index
    %c10 = arith.constant 10 : index
    %18 = vector.load %arg1[%c0_27, %c0_28, %c0_29, %c10] : memref<1x4x8x162xbf16, #tpu.memory_space<vmem>>, vector<1x1x8x150xbf16>
    %19 = vector.shape_cast %18 : vector<1x1x8x150xbf16> to vector<8x150xbf16>
    %c48 = arith.constant 48 : index
    %c0_30 = arith.constant 0 : index
    %20 = vector.load %arg8[%c48, %c0_30] : memref<72x150xbf16, #tpu.memory_space<vmem>>, vector<8x150xbf16>
    tpu.vector_store %arg8[%c48, %c0_30], %19 {strides = array<i32>} : memref<72x150xbf16, #tpu.memory_space<vmem>>, vector<8x150xbf16>,
    %c0_31 = arith.constant 0 : index
    %c1_32 = arith.constant 1 : index
    %c0_33 = arith.constant 0 : index
    %c10_34 = arith.constant 10 : index
    %21 = vector.load %arg1[%c0_31, %c1_32, %c0_33, %c10_34] : memref<1x4x8x162xbf16, #tpu.memory_space<vmem>>, vector<1x1x8x150xbf16>
    %22 = vector.shape_cast %21 : vector<1x1x8x150xbf16> to vector<8x150xbf16>
    %c56 = arith.constant 56 : index
    %c0_35 = arith.constant 0 : index
    %23 = vector.load %arg8[%c56, %c0_35] : memref<72x150xbf16, #tpu.memory_space<vmem>>, vector<8x150xbf16>
    tpu.vector_store %arg8[%c56, %c0_35], %22 {strides = array<i32>} : memref<72x150xbf16, #tpu.memory_space<vmem>>, vector<8x150xbf16>,
    %c0_36 = arith.constant 0 : index
    %c0_37 = arith.constant 0 : index
    %c0_38 = arith.constant 0 : index
    %c11 = arith.constant 11 : index
    %24 = vector.load %arg1[%c0_36, %c0_37, %c0_38, %c11] : memref<1x4x8x162xbf16, #tpu.memory_space<vmem>>, vector<1x1x8x150xbf16>
    %25 = vector.shape_cast %24 : vector<1x1x8x150xbf16> to vector<8x150xbf16>
    %c64 = arith.constant 64 : index
    %c0_39 = arith.constant 0 : index
    %26 = vector.load %arg8[%c64, %c0_39] : memref<72x150xbf16, #tpu.memory_space<vmem>>, vector<8x150xbf16>
    tpu.vector_store %arg8[%c64, %c0_39], %25 {strides = array<i32>} : memref<72x150xbf16, #tpu.memory_space<vmem>>, vector<8x150xbf16>,
    %c0_40 = arith.constant 0 : index
    %c0_41 = arith.constant 0 : index
    %27 = vector.load %arg2[%c0_40, %c0_41] : memref<8x72xbf16, #tpu.memory_space<vmem>>, vector<8x72xbf16>
    %c0_42 = arith.constant 0 : index
    %c0_43 = arith.constant 0 : index
    %28 = vector.load %arg8[%c0_42, %c0_43] : memref<72x150xbf16, #tpu.memory_space<vmem>>, vector<72x150xbf16>
    %cst = arith.constant dense<0.000000e+00> : vector<8x150xf32>
    %29 = tpu.matmul %27, %28, %cst {dimension_numbers = #tpu.dot_dimension_numbers<[1], [0], [0], [1], [0, 0, 1, 1], [], []>} : vector<8x72xbf16>, vector<72x150xbf16>, vector<8x150xf32> -> vector<8x150xf32>
    %c0_44 = arith.constant 0 : index
    %c0_45 = arith.constant 0 : index
    %30 = vector.load %arg3[%c0_44, %c0_45] : memref<8x1xf32, #tpu.memory_space<vmem>>, vector<8x1xf32>
    %31 = vector.broadcast %30 : vector<8x1xf32> to vector<8x150xf32>
    %32 = arith.addf %29, %31 : vector<8x150xf32>
    %cst_46 = arith.constant 0.000000e+00 : f32
    %33 = vector.broadcast %cst_46 : f32 to vector<8x150xf32>
    %34 = arith.maximumf %32, %33 : vector<8x150xf32>
    %c0_47 = arith.constant 0 : index
    %c0_48 = arith.constant 0 : index
    %35 = vector.load %arg6[%c0_47, %c0_48] : memref<1x150xf32, #tpu.memory_space<vmem>>, vector<1x150xf32>
    %36 = vector.broadcast %35 : vector<1x150xf32> to vector<8x150xf32>
    %37 = arith.mulf %34, %36 : vector<8x150xf32>
    %38 = arith.truncf %37 : vector<8x150xf32> to vector<8x150xbf16>
    %c0_49 = arith.constant 0 : index
    %c0_50 = arith.constant 0 : index
    %39 = vector.load %arg10[%c0_49, %c0_50] : memref<8x150xbf16, #tpu.memory_space<vmem>>, vector<8x150xbf16>
    tpu.vector_store %arg10[%c0_49, %c0_50], %38 {strides = array<i32>} : memref<8x150xbf16, #tpu.memory_space<vmem>>, vector<8x150xbf16>,
    %c0_51 = arith.constant 0 : index
    %c0_52 = arith.constant 0 : index
    %40 = vector.load %arg10[%c0_51, %c0_52] : memref<8x150xbf16, #tpu.memory_space<vmem>>, vector<8x128xbf16>
    %c0_53 = arith.constant 0 : index
    %c0_54 = arith.constant 0 : index
    %41 = vector.load %arg9[%c0_53, %c0_54] : memref<72x128xbf16, #tpu.memory_space<vmem>>, vector<8x128xbf16>
    tpu.vector_store %arg9[%c0_53, %c0_54], %40 {strides = array<i32>} : memref<72x128xbf16, #tpu.memory_space<vmem>>, vector<8x128xbf16>,
    %c0_55 = arith.constant 0 : index
    %c1_56 = arith.constant 1 : index
    %42 = vector.load %arg10[%c0_55, %c1_56] : memref<8x150xbf16, #tpu.memory_space<vmem>>, vector<8x128xbf16>
    %c8_57 = arith.constant 8 : index
    %c0_58 = arith.constant 0 : index
    %43 = vector.load %arg9[%c8_57, %c0_58] : memref<72x128xbf16, #tpu.memory_space<vmem>>, vector<8x128xbf16>
    tpu.vector_store %arg9[%c8_57, %c0_58], %42 {strides = array<i32>} : memref<72x128xbf16, #tpu.memory_space<vmem>>, vector<8x128xbf16>,
    %c0_59 = arith.constant 0 : index
    %c2_60 = arith.constant 2 : index
    %44 = vector.load %arg10[%c0_59, %c2_60] : memref<8x150xbf16, #tpu.memory_space<vmem>>, vector<8x128xbf16>
    %c16_61 = arith.constant 16 : index
    %c0_62 = arith.constant 0 : index
    %45 = vector.load %arg9[%c16_61, %c0_62] : memref<72x128xbf16, #tpu.memory_space<vmem>>, vector<8x128xbf16>
    tpu.vector_store %arg9[%c16_61, %c0_62], %44 {strides = array<i32>} : memref<72x128xbf16, #tpu.memory_space<vmem>>, vector<8x128xbf16>,
    %c0_63 = arith.constant 0 : index
    %c10_64 = arith.constant 10 : index
    %46 = vector.load %arg10[%c0_63, %c10_64] : memref<8x150xbf16, #tpu.memory_space<vmem>>, vector<8x128xbf16>
    %c24_65 = arith.constant 24 : index
    %c0_66 = arith.constant 0 : index
    %47 = vector.load %arg9[%c24_65, %c0_66] : memref<72x128xbf16, #tpu.memory_space<vmem>>, vector<8x128xbf16>
    tpu.vector_store %arg9[%c24_65, %c0_66], %46 {strides = array<i32>} : memref<72x128xbf16, #tpu.memory_space<vmem>>, vector<8x128xbf16>,
    %c0_67 = arith.constant 0 : index
    %c11_68 = arith.constant 11 : index
    %48 = vector.load %arg10[%c0_67, %c11_68] : memref<8x150xbf16, #tpu.memory_space<vmem>>, vector<8x128xbf16>
    %c32_69 = arith.constant 32 : index
    %c0_70 = arith.constant 0 : index
    %49 = vector.load %arg9[%c32_69, %c0_70] : memref<72x128xbf16, #tpu.memory_space<vmem>>, vector<8x128xbf16>
    tpu.vector_store %arg9[%c32_69, %c0_70], %48 {strides = array<i32>} : memref<72x128xbf16, #tpu.memory_space<vmem>>, vector<8x128xbf16>,
    %c0_71 = arith.constant 0 : index
    %c12 = arith.constant 12 : index
    %50 = vector.load %arg10[%c0_71, %c12] : memref<8x150xbf16, #tpu.memory_space<vmem>>, vector<8x128xbf16>
    %c40_72 = arith.constant 40 : index
    %c0_73 = arith.constant 0 : index
    %51 = vector.load %arg9[%c40_72, %c0_73] : memref<72x128xbf16, #tpu.memory_space<vmem>>, vector<8x128xbf16>
    tpu.vector_store %arg9[%c40_72, %c0_73], %50 {strides = array<i32>} : memref<72x128xbf16, #tpu.memory_space<vmem>>, vector<8x128xbf16>,
    %c0_74 = arith.constant 0 : index
    %c20 = arith.constant 20 : index
    %52 = vector.load %arg10[%c0_74, %c20] : memref<8x150xbf16, #tpu.memory_space<vmem>>, vector<8x128xbf16>
    %c48_75 = arith.constant 48 : index
    %c0_76 = arith.constant 0 : index
    %53 = vector.load %arg9[%c48_75, %c0_76] : memref<72x128xbf16, #tpu.memory_space<vmem>>, vector<8x128xbf16>
    tpu.vector_store %arg9[%c48_75, %c0_76], %52 {strides = array<i32>} : memref<72x128xbf16, #tpu.memory_space<vmem>>, vector<8x128xbf16>,
    %c0_77 = arith.constant 0 : index
    %c21 = arith.constant 21 : index
    %54 = vector.load %arg10[%c0_77, %c21] : memref<8x150xbf16, #tpu.memory_space<vmem>>, vector<8x128xbf16>
    %c56_78 = arith.constant 56 : index
    %c0_79 = arith.constant 0 : index
    %55 = vector.load %arg9[%c56_78, %c0_79] : memref<72x128xbf16, #tpu.memory_space<vmem>>, vector<8x128xbf16>
    tpu.vector_store %arg9[%c56_78, %c0_79], %54 {strides = array<i32>} : memref<72x128xbf16, #tpu.memory_space<vmem>>, vector<8x128xbf16>,
    %c0_80 = arith.constant 0 : index
    %c22 = arith.constant 22 : index
    %56 = vector.load %arg10[%c0_80, %c22] : memref<8x150xbf16, #tpu.memory_space<vmem>>, vector<8x128xbf16>
    %c64_81 = arith.constant 64 : index
    %c0_82 = arith.constant 0 : index
    %57 = vector.load %arg9[%c64_81, %c0_82] : memref<72x128xbf16, #tpu.memory_space<vmem>>, vector<8x128xbf16>
    tpu.vector_store %arg9[%c64_81, %c0_82], %56 {strides = array<i32>} : memref<72x128xbf16, #tpu.memory_space<vmem>>, vector<8x128xbf16>,
    %c0_83 = arith.constant 0 : index
    %c0_84 = arith.constant 0 : index
    %58 = vector.load %arg4[%c0_83, %c0_84] : memref<8x72xbf16, #tpu.memory_space<vmem>>, vector<8x72xbf16>
    %c0_85 = arith.constant 0 : index
    %c0_86 = arith.constant 0 : index
    %59 = vector.load %arg9[%c0_85, %c0_86] : memref<72x128xbf16, #tpu.memory_space<vmem>>, vector<72x128xbf16>
    %cst_87 = arith.constant dense<0.000000e+00> : vector<8x128xf32>
    %60 = tpu.matmul %58, %59, %cst_87 {dimension_numbers = #tpu.dot_dimension_numbers<[1], [0], [0], [1], [0, 0, 1, 1], [], []>} : vector<8x72xbf16>, vector<72x128xbf16>, vector<8x128xf32> -> vector<8x128xf32>
    %c0_88 = arith.constant 0 : index
    %c0_89 = arith.constant 0 : index
    %61 = vector.load %arg5[%c0_88, %c0_89] : memref<8x1xf32, #tpu.memory_space<vmem>>, vector<8x1xf32>
    %62 = vector.broadcast %61 : vector<8x1xf32> to vector<8x128xf32>
    %63 = arith.addf %60, %62 : vector<8x128xf32>
    %cst_90 = arith.constant 0.000000e+00 : f32
    %64 = vector.broadcast %cst_90 : f32 to vector<8x128xf32>
    %65 = arith.maximumf %63, %64 : vector<8x128xf32>
    %66 = arith.truncf %65 : vector<8x128xf32> to vector<8x128xbf16>
    %c0_91 = arith.constant 0 : index
    %c0_92 = arith.constant 0 : index
    %c0_93 = arith.constant 0 : index
    %67 = vector.load %arg7[%c0_91, %c0_92, %c0_93] : memref<1x8x128xbf16, #tpu.memory_space<vmem>>, vector<1x8x128xbf16>
    %68 = vector.shape_cast %67 : vector<1x8x128xbf16> to vector<8x128xbf16>
    %69 = vector.shape_cast %66 : vector<8x128xbf16> to vector<1x8x128xbf16>
    tpu.vector_store %arg7[%c0_91, %c0_92, %c0_93], %69 {strides = array<i32>} : memref<1x8x128xbf16, #tpu.memory_space<vmem>>, vector<1x8x128xbf16>,
    return
  }
  func.func @transform_0(%arg0: i32) -> (i32, i32, i32, i32) {
    %c0_i32 = arith.constant 0 : i32
    %c0_i32_0 = arith.constant 0 : i32
    %c0_i32_1 = arith.constant 0 : i32
    %c0_i32_2 = arith.constant 0 : i32
    return %arg0, %c0_i32, %c0_i32_0, %c0_i32_1 : i32, i32, i32, i32
  }
  func.func @transform_1(%arg0: i32) -> (i32, i32) {
    %c0_i32 = arith.constant 0 : i32
    %c0_i32_0 = arith.constant 0 : i32
    %c0_i32_1 = arith.constant 0 : i32
    return %c0_i32, %c0_i32_0 : i32, i32
  }
  func.func @transform_2(%arg0: i32) -> (i32, i32) {
    %c0_i32 = arith.constant 0 : i32
    %c0_i32_0 = arith.constant 0 : i32
    %c0_i32_1 = arith.constant 0 : i32
    return %c0_i32, %c0_i32_0 : i32, i32
  }
  func.func @transform_3(%arg0: i32) -> (i32, i32) {
    %c0_i32 = arith.constant 0 : i32
    %c0_i32_0 = arith.constant 0 : i32
    %c0_i32_1 = arith.constant 0 : i32
    return %c0_i32, %c0_i32_0 : i32, i32
  }
  func.func @transform_4(%arg0: i32) -> (i32, i32) {
    %c0_i32 = arith.constant 0 : i32
    %c0_i32_0 = arith.constant 0 : i32
    %c0_i32_1 = arith.constant 0 : i32
    return %c0_i32, %c0_i32_0 : i32, i32
  }
  func.func @transform_5(%arg0: i32) -> (i32, i32) {
    %c0_i32 = arith.constant 0 : i32
    %c0_i32_0 = arith.constant 0 : i32
    %c0_i32_1 = arith.constant 0 : i32
    return %c0_i32, %c0_i32_0 : i32, i32
  }
  func.func @transform_6(%arg0: i32) -> (i32, i32, i32) {
    %c0_i32 = arith.constant 0 : i32
    %c0_i32_0 = arith.constant 0 : i32
    %c0_i32_1 = arith.constant 0 : i32
    return %arg0, %c0_i32, %c0_i32_0 : i32, i32, i32
  }
}

module attributes {stable_mosaic.version = 11 : i64} {
  func.func @kernel(%arg0: i32, %arg1: memref<1x4x8x150xbf16, #tpu.memory_space<vmem>>, %arg2: memref<16x72xbf16, #tpu.memory_space<vmem>>, %arg3: memref<16x1xf32, #tpu.memory_space<vmem>>, %arg4: memref<16x144xbf16, #tpu.memory_space<vmem>>, %arg5: memref<16x1xf32, #tpu.memory_space<vmem>>, %arg6: memref<1x142xf32, #tpu.memory_space<vmem>>, %arg7: memref<1x16x128xbf16, #tpu.memory_space<vmem>>, %arg8: memref<72x142xbf16, #tpu.memory_space<vmem>>, %arg9: memref<144x128xbf16, #tpu.memory_space<vmem>>, %arg10: memref<16x142xbf16, #tpu.memory_space<vmem>>) attributes {dimension_semantics = [#tpu.dimension_semantics<parallel>], iteration_bounds = array<i64: 4>, scalar_prefetch = 0 : i64, scratch_operands = 3 : i64, tpu.core_type = #tpu.core_type<tc>, window_params = [{transform_indices = @transform_0, window_bounds = array<i64: 1, 4, 8, 150>}, {pipeline_mode = #tpu.pipeline_mode<synchronous>, transform_indices = @transform_1, window_bounds = array<i64: 16, 72>}, {pipeline_mode = #tpu.pipeline_mode<synchronous>, transform_indices = @transform_2, window_bounds = array<i64: 16, 1>}, {pipeline_mode = #tpu.pipeline_mode<synchronous>, transform_indices = @transform_3, window_bounds = array<i64: 16, 144>}, {pipeline_mode = #tpu.pipeline_mode<synchronous>, transform_indices = @transform_4, window_bounds = array<i64: 16, 1>}, {pipeline_mode = #tpu.pipeline_mode<synchronous>, transform_indices = @transform_5, window_bounds = array<i64: 1, 142>}, {transform_indices = @transform_6, window_bounds = array<i64: 1, 16, 128>}]} {
    %c0 = arith.constant 0 : index
    %c0_0 = arith.constant 0 : index
    %c0_1 = arith.constant 0 : index
    %c0_2 = arith.constant 0 : index
    %0 = vector.load %arg1[%c0, %c0_0, %c0_1, %c0_2] : memref<1x4x8x150xbf16, #tpu.memory_space<vmem>>, vector<1x1x8x142xbf16>
    %1 = vector.shape_cast %0 : vector<1x1x8x142xbf16> to vector<8x142xbf16>
    %c0_3 = arith.constant 0 : index
    %c0_4 = arith.constant 0 : index
    %2 = vector.load %arg8[%c0_3, %c0_4] : memref<72x142xbf16, #tpu.memory_space<vmem>>, vector<8x142xbf16>
    tpu.vector_store %arg8[%c0_3, %c0_4], %1 {strides = array<i32>} : memref<72x142xbf16, #tpu.memory_space<vmem>>, vector<8x142xbf16>,
    %c0_5 = arith.constant 0 : index
    %c1 = arith.constant 1 : index
    %c0_6 = arith.constant 0 : index
    %c0_7 = arith.constant 0 : index
    %3 = vector.load %arg1[%c0_5, %c1, %c0_6, %c0_7] : memref<1x4x8x150xbf16, #tpu.memory_space<vmem>>, vector<1x1x8x142xbf16>
    %4 = vector.shape_cast %3 : vector<1x1x8x142xbf16> to vector<8x142xbf16>
    %c8 = arith.constant 8 : index
    %c0_8 = arith.constant 0 : index
    %5 = vector.load %arg8[%c8, %c0_8] : memref<72x142xbf16, #tpu.memory_space<vmem>>, vector<8x142xbf16>
    tpu.vector_store %arg8[%c8, %c0_8], %4 {strides = array<i32>} : memref<72x142xbf16, #tpu.memory_space<vmem>>, vector<8x142xbf16>,
    %c0_9 = arith.constant 0 : index
    %c0_10 = arith.constant 0 : index
    %c0_11 = arith.constant 0 : index
    %c1_12 = arith.constant 1 : index
    %6 = vector.load %arg1[%c0_9, %c0_10, %c0_11, %c1_12] : memref<1x4x8x150xbf16, #tpu.memory_space<vmem>>, vector<1x1x8x142xbf16>
    %7 = vector.shape_cast %6 : vector<1x1x8x142xbf16> to vector<8x142xbf16>
    %c16 = arith.constant 16 : index
    %c0_13 = arith.constant 0 : index
    %8 = vector.load %arg8[%c16, %c0_13] : memref<72x142xbf16, #tpu.memory_space<vmem>>, vector<8x142xbf16>
    tpu.vector_store %arg8[%c16, %c0_13], %7 {strides = array<i32>} : memref<72x142xbf16, #tpu.memory_space<vmem>>, vector<8x142xbf16>,
    %c0_14 = arith.constant 0 : index
    %c2 = arith.constant 2 : index
    %c0_15 = arith.constant 0 : index
    %c0_16 = arith.constant 0 : index
    %9 = vector.load %arg1[%c0_14, %c2, %c0_15, %c0_16] : memref<1x4x8x150xbf16, #tpu.memory_space<vmem>>, vector<1x1x8x142xbf16>
    %10 = vector.shape_cast %9 : vector<1x1x8x142xbf16> to vector<8x142xbf16>
    %c24 = arith.constant 24 : index
    %c0_17 = arith.constant 0 : index
    %11 = vector.load %arg8[%c24, %c0_17] : memref<72x142xbf16, #tpu.memory_space<vmem>>, vector<8x142xbf16>
    tpu.vector_store %arg8[%c24, %c0_17], %10 {strides = array<i32>} : memref<72x142xbf16, #tpu.memory_space<vmem>>, vector<8x142xbf16>,
    %c0_18 = arith.constant 0 : index
    %c3 = arith.constant 3 : index
    %c0_19 = arith.constant 0 : index
    %c0_20 = arith.constant 0 : index
    %12 = vector.load %arg1[%c0_18, %c3, %c0_19, %c0_20] : memref<1x4x8x150xbf16, #tpu.memory_space<vmem>>, vector<1x1x8x142xbf16>
    %13 = vector.shape_cast %12 : vector<1x1x8x142xbf16> to vector<8x142xbf16>
    %c32 = arith.constant 32 : index
    %c0_21 = arith.constant 0 : index
    %14 = vector.load %arg8[%c32, %c0_21] : memref<72x142xbf16, #tpu.memory_space<vmem>>, vector<8x142xbf16>
    tpu.vector_store %arg8[%c32, %c0_21], %13 {strides = array<i32>} : memref<72x142xbf16, #tpu.memory_space<vmem>>, vector<8x142xbf16>,
    %c0_22 = arith.constant 0 : index
    %c2_23 = arith.constant 2 : index
    %c0_24 = arith.constant 0 : index
    %c1_25 = arith.constant 1 : index
    %15 = vector.load %arg1[%c0_22, %c2_23, %c0_24, %c1_25] : memref<1x4x8x150xbf16, #tpu.memory_space<vmem>>, vector<1x1x8x142xbf16>
    %16 = vector.shape_cast %15 : vector<1x1x8x142xbf16> to vector<8x142xbf16>
    %c40 = arith.constant 40 : index
    %c0_26 = arith.constant 0 : index
    %17 = vector.load %arg8[%c40, %c0_26] : memref<72x142xbf16, #tpu.memory_space<vmem>>, vector<8x142xbf16>
    tpu.vector_store %arg8[%c40, %c0_26], %16 {strides = array<i32>} : memref<72x142xbf16, #tpu.memory_space<vmem>>, vector<8x142xbf16>,
    %c0_27 = arith.constant 0 : index
    %c0_28 = arith.constant 0 : index
    %c0_29 = arith.constant 0 : index
    %c6 = arith.constant 6 : index
    %18 = vector.load %arg1[%c0_27, %c0_28, %c0_29, %c6] : memref<1x4x8x150xbf16, #tpu.memory_space<vmem>>, vector<1x1x8x142xbf16>
    %19 = vector.shape_cast %18 : vector<1x1x8x142xbf16> to vector<8x142xbf16>
    %c48 = arith.constant 48 : index
    %c0_30 = arith.constant 0 : index
    %20 = vector.load %arg8[%c48, %c0_30] : memref<72x142xbf16, #tpu.memory_space<vmem>>, vector<8x142xbf16>
    tpu.vector_store %arg8[%c48, %c0_30], %19 {strides = array<i32>} : memref<72x142xbf16, #tpu.memory_space<vmem>>, vector<8x142xbf16>,
    %c0_31 = arith.constant 0 : index
    %c1_32 = arith.constant 1 : index
    %c0_33 = arith.constant 0 : index
    %c6_34 = arith.constant 6 : index
    %21 = vector.load %arg1[%c0_31, %c1_32, %c0_33, %c6_34] : memref<1x4x8x150xbf16, #tpu.memory_space<vmem>>, vector<1x1x8x142xbf16>
    %22 = vector.shape_cast %21 : vector<1x1x8x142xbf16> to vector<8x142xbf16>
    %c56 = arith.constant 56 : index
    %c0_35 = arith.constant 0 : index
    %23 = vector.load %arg8[%c56, %c0_35] : memref<72x142xbf16, #tpu.memory_space<vmem>>, vector<8x142xbf16>
    tpu.vector_store %arg8[%c56, %c0_35], %22 {strides = array<i32>} : memref<72x142xbf16, #tpu.memory_space<vmem>>, vector<8x142xbf16>,
    %c0_36 = arith.constant 0 : index
    %c0_37 = arith.constant 0 : index
    %c0_38 = arith.constant 0 : index
    %c7 = arith.constant 7 : index
    %24 = vector.load %arg1[%c0_36, %c0_37, %c0_38, %c7] : memref<1x4x8x150xbf16, #tpu.memory_space<vmem>>, vector<1x1x8x142xbf16>
    %25 = vector.shape_cast %24 : vector<1x1x8x142xbf16> to vector<8x142xbf16>
    %c64 = arith.constant 64 : index
    %c0_39 = arith.constant 0 : index
    %26 = vector.load %arg8[%c64, %c0_39] : memref<72x142xbf16, #tpu.memory_space<vmem>>, vector<8x142xbf16>
    tpu.vector_store %arg8[%c64, %c0_39], %25 {strides = array<i32>} : memref<72x142xbf16, #tpu.memory_space<vmem>>, vector<8x142xbf16>,
    %c0_40 = arith.constant 0 : index
    %c0_41 = arith.constant 0 : index
    %27 = vector.load %arg2[%c0_40, %c0_41] : memref<16x72xbf16, #tpu.memory_space<vmem>>, vector<16x72xbf16>
    %c0_42 = arith.constant 0 : index
    %c0_43 = arith.constant 0 : index
    %28 = vector.load %arg8[%c0_42, %c0_43] : memref<72x142xbf16, #tpu.memory_space<vmem>>, vector<72x142xbf16>
    %cst = arith.constant dense<0.000000e+00> : vector<16x142xf32>
    %29 = tpu.matmul %27, %28, %cst {dimension_numbers = #tpu.dot_dimension_numbers<[1], [0], [0], [1], [0, 0, 1, 1], [], []>} : vector<16x72xbf16>, vector<72x142xbf16>, vector<16x142xf32> -> vector<16x142xf32>
    %c0_44 = arith.constant 0 : index
    %c0_45 = arith.constant 0 : index
    %30 = vector.load %arg3[%c0_44, %c0_45] : memref<16x1xf32, #tpu.memory_space<vmem>>, vector<16x1xf32>
    %31 = vector.broadcast %30 : vector<16x1xf32> to vector<16x142xf32>
    %32 = arith.addf %29, %31 : vector<16x142xf32>
    %cst_46 = arith.constant 0.000000e+00 : f32
    %33 = vector.broadcast %cst_46 : f32 to vector<16x142xf32>
    %34 = arith.maximumf %32, %33 : vector<16x142xf32>
    %c0_47 = arith.constant 0 : index
    %c0_48 = arith.constant 0 : index
    %35 = vector.load %arg6[%c0_47, %c0_48] : memref<1x142xf32, #tpu.memory_space<vmem>>, vector<1x142xf32>
    %36 = vector.broadcast %35 : vector<1x142xf32> to vector<16x142xf32>
    %37 = arith.mulf %34, %36 : vector<16x142xf32>
    %38 = arith.truncf %37 : vector<16x142xf32> to vector<16x142xbf16>
    %c0_49 = arith.constant 0 : index
    %c0_50 = arith.constant 0 : index
    %39 = vector.load %arg10[%c0_49, %c0_50] : memref<16x142xbf16, #tpu.memory_space<vmem>>, vector<16x142xbf16>
    tpu.vector_store %arg10[%c0_49, %c0_50], %38 {strides = array<i32>} : memref<16x142xbf16, #tpu.memory_space<vmem>>, vector<16x142xbf16>,
    %c0_51 = arith.constant 0 : index
    %c0_52 = arith.constant 0 : index
    %40 = vector.load %arg10[%c0_51, %c0_52] : memref<16x142xbf16, #tpu.memory_space<vmem>>, vector<16x128xbf16>
    %c0_53 = arith.constant 0 : index
    %c0_54 = arith.constant 0 : index
    %41 = vector.load %arg9[%c0_53, %c0_54] : memref<144x128xbf16, #tpu.memory_space<vmem>>, vector<16x128xbf16>
    tpu.vector_store %arg9[%c0_53, %c0_54], %40 {strides = array<i32>} : memref<144x128xbf16, #tpu.memory_space<vmem>>, vector<16x128xbf16>,
    %c0_55 = arith.constant 0 : index
    %c1_56 = arith.constant 1 : index
    %42 = vector.load %arg10[%c0_55, %c1_56] : memref<16x142xbf16, #tpu.memory_space<vmem>>, vector<16x128xbf16>
    %c16_57 = arith.constant 16 : index
    %c0_58 = arith.constant 0 : index
    %43 = vector.load %arg9[%c16_57, %c0_58] : memref<144x128xbf16, #tpu.memory_space<vmem>>, vector<16x128xbf16>
    tpu.vector_store %arg9[%c16_57, %c0_58], %42 {strides = array<i32>} : memref<144x128xbf16, #tpu.memory_space<vmem>>, vector<16x128xbf16>,
    %c0_59 = arith.constant 0 : index
    %c2_60 = arith.constant 2 : index
    %44 = vector.load %arg10[%c0_59, %c2_60] : memref<16x142xbf16, #tpu.memory_space<vmem>>, vector<16x128xbf16>
    %c32_61 = arith.constant 32 : index
    %c0_62 = arith.constant 0 : index
    %45 = vector.load %arg9[%c32_61, %c0_62] : memref<144x128xbf16, #tpu.memory_space<vmem>>, vector<16x128xbf16>
    tpu.vector_store %arg9[%c32_61, %c0_62], %44 {strides = array<i32>} : memref<144x128xbf16, #tpu.memory_space<vmem>>, vector<16x128xbf16>,
    %c0_63 = arith.constant 0 : index
    %c6_64 = arith.constant 6 : index
    %46 = vector.load %arg10[%c0_63, %c6_64] : memref<16x142xbf16, #tpu.memory_space<vmem>>, vector<16x128xbf16>
    %c48_65 = arith.constant 48 : index
    %c0_66 = arith.constant 0 : index
    %47 = vector.load %arg9[%c48_65, %c0_66] : memref<144x128xbf16, #tpu.memory_space<vmem>>, vector<16x128xbf16>
    tpu.vector_store %arg9[%c48_65, %c0_66], %46 {strides = array<i32>} : memref<144x128xbf16, #tpu.memory_space<vmem>>, vector<16x128xbf16>,
    %c0_67 = arith.constant 0 : index
    %c7_68 = arith.constant 7 : index
    %48 = vector.load %arg10[%c0_67, %c7_68] : memref<16x142xbf16, #tpu.memory_space<vmem>>, vector<16x128xbf16>
    %c64_69 = arith.constant 64 : index
    %c0_70 = arith.constant 0 : index
    %49 = vector.load %arg9[%c64_69, %c0_70] : memref<144x128xbf16, #tpu.memory_space<vmem>>, vector<16x128xbf16>
    tpu.vector_store %arg9[%c64_69, %c0_70], %48 {strides = array<i32>} : memref<144x128xbf16, #tpu.memory_space<vmem>>, vector<16x128xbf16>,
    %c0_71 = arith.constant 0 : index
    %c8_72 = arith.constant 8 : index
    %50 = vector.load %arg10[%c0_71, %c8_72] : memref<16x142xbf16, #tpu.memory_space<vmem>>, vector<16x128xbf16>
    %c80 = arith.constant 80 : index
    %c0_73 = arith.constant 0 : index
    %51 = vector.load %arg9[%c80, %c0_73] : memref<144x128xbf16, #tpu.memory_space<vmem>>, vector<16x128xbf16>
    tpu.vector_store %arg9[%c80, %c0_73], %50 {strides = array<i32>} : memref<144x128xbf16, #tpu.memory_space<vmem>>, vector<16x128xbf16>,
    %c0_74 = arith.constant 0 : index
    %c12 = arith.constant 12 : index
    %52 = vector.load %arg10[%c0_74, %c12] : memref<16x142xbf16, #tpu.memory_space<vmem>>, vector<16x128xbf16>
    %c96 = arith.constant 96 : index
    %c0_75 = arith.constant 0 : index
    %53 = vector.load %arg9[%c96, %c0_75] : memref<144x128xbf16, #tpu.memory_space<vmem>>, vector<16x128xbf16>
    tpu.vector_store %arg9[%c96, %c0_75], %52 {strides = array<i32>} : memref<144x128xbf16, #tpu.memory_space<vmem>>, vector<16x128xbf16>,
    %c0_76 = arith.constant 0 : index
    %c13 = arith.constant 13 : index
    %54 = vector.load %arg10[%c0_76, %c13] : memref<16x142xbf16, #tpu.memory_space<vmem>>, vector<16x128xbf16>
    %c112 = arith.constant 112 : index
    %c0_77 = arith.constant 0 : index
    %55 = vector.load %arg9[%c112, %c0_77] : memref<144x128xbf16, #tpu.memory_space<vmem>>, vector<16x128xbf16>
    tpu.vector_store %arg9[%c112, %c0_77], %54 {strides = array<i32>} : memref<144x128xbf16, #tpu.memory_space<vmem>>, vector<16x128xbf16>,
    %c0_78 = arith.constant 0 : index
    %c14 = arith.constant 14 : index
    %56 = vector.load %arg10[%c0_78, %c14] : memref<16x142xbf16, #tpu.memory_space<vmem>>, vector<16x128xbf16>
    %c128 = arith.constant 128 : index
    %c0_79 = arith.constant 0 : index
    %57 = vector.load %arg9[%c128, %c0_79] : memref<144x128xbf16, #tpu.memory_space<vmem>>, vector<16x128xbf16>
    tpu.vector_store %arg9[%c128, %c0_79], %56 {strides = array<i32>} : memref<144x128xbf16, #tpu.memory_space<vmem>>, vector<16x128xbf16>,
    %c0_80 = arith.constant 0 : index
    %c0_81 = arith.constant 0 : index
    %58 = vector.load %arg4[%c0_80, %c0_81] : memref<16x144xbf16, #tpu.memory_space<vmem>>, vector<16x144xbf16>
    %c0_82 = arith.constant 0 : index
    %c0_83 = arith.constant 0 : index
    %59 = vector.load %arg9[%c0_82, %c0_83] : memref<144x128xbf16, #tpu.memory_space<vmem>>, vector<144x128xbf16>
    %cst_84 = arith.constant dense<0.000000e+00> : vector<16x128xf32>
    %60 = tpu.matmul %58, %59, %cst_84 {dimension_numbers = #tpu.dot_dimension_numbers<[1], [0], [0], [1], [0, 0, 1, 1], [], []>} : vector<16x144xbf16>, vector<144x128xbf16>, vector<16x128xf32> -> vector<16x128xf32>
    %c0_85 = arith.constant 0 : index
    %c0_86 = arith.constant 0 : index
    %61 = vector.load %arg5[%c0_85, %c0_86] : memref<16x1xf32, #tpu.memory_space<vmem>>, vector<16x1xf32>
    %62 = vector.broadcast %61 : vector<16x1xf32> to vector<16x128xf32>
    %63 = arith.addf %60, %62 : vector<16x128xf32>
    %cst_87 = arith.constant 0.000000e+00 : f32
    %64 = vector.broadcast %cst_87 : f32 to vector<16x128xf32>
    %65 = arith.maximumf %63, %64 : vector<16x128xf32>
    %66 = arith.truncf %65 : vector<16x128xf32> to vector<16x128xbf16>
    %c0_88 = arith.constant 0 : index
    %c0_89 = arith.constant 0 : index
    %c0_90 = arith.constant 0 : index
    %67 = vector.load %arg7[%c0_88, %c0_89, %c0_90] : memref<1x16x128xbf16, #tpu.memory_space<vmem>>, vector<1x16x128xbf16>
    %68 = vector.shape_cast %67 : vector<1x16x128xbf16> to vector<16x128xbf16>
    %69 = vector.shape_cast %66 : vector<16x128xbf16> to vector<1x16x128xbf16>
    tpu.vector_store %arg7[%c0_88, %c0_89, %c0_90], %69 {strides = array<i32>} : memref<1x16x128xbf16, #tpu.memory_space<vmem>>, vector<1x16x128xbf16>,
    return
  }
  func.func @transform_0(%arg0: i32) -> (i32, i32, i32, i32) {
    %c0_i32 = arith.constant 0 : i32
    %c0_i32_0 = arith.constant 0 : i32
    %c0_i32_1 = arith.constant 0 : i32
    %c0_i32_2 = arith.constant 0 : i32
    return %arg0, %c0_i32, %c0_i32_0, %c0_i32_1 : i32, i32, i32, i32
  }
  func.func @transform_1(%arg0: i32) -> (i32, i32) {
    %c0_i32 = arith.constant 0 : i32
    %c0_i32_0 = arith.constant 0 : i32
    %c0_i32_1 = arith.constant 0 : i32
    return %c0_i32, %c0_i32_0 : i32, i32
  }
  func.func @transform_2(%arg0: i32) -> (i32, i32) {
    %c0_i32 = arith.constant 0 : i32
    %c0_i32_0 = arith.constant 0 : i32
    %c0_i32_1 = arith.constant 0 : i32
    return %c0_i32, %c0_i32_0 : i32, i32
  }
  func.func @transform_3(%arg0: i32) -> (i32, i32) {
    %c0_i32 = arith.constant 0 : i32
    %c0_i32_0 = arith.constant 0 : i32
    %c0_i32_1 = arith.constant 0 : i32
    return %c0_i32, %c0_i32_0 : i32, i32
  }
  func.func @transform_4(%arg0: i32) -> (i32, i32) {
    %c0_i32 = arith.constant 0 : i32
    %c0_i32_0 = arith.constant 0 : i32
    %c0_i32_1 = arith.constant 0 : i32
    return %c0_i32, %c0_i32_0 : i32, i32
  }
  func.func @transform_5(%arg0: i32) -> (i32, i32) {
    %c0_i32 = arith.constant 0 : i32
    %c0_i32_0 = arith.constant 0 : i32
    %c0_i32_1 = arith.constant 0 : i32
    return %c0_i32, %c0_i32_0 : i32, i32
  }
  func.func @transform_6(%arg0: i32) -> (i32, i32, i32) {
    %c0_i32 = arith.constant 0 : i32
    %c0_i32_0 = arith.constant 0 : i32
    %c0_i32_1 = arith.constant 0 : i32
    return %arg0, %c0_i32, %c0_i32_0 : i32, i32, i32
  }
}

module attributes {stable_mosaic.version = 11 : i64} {
  func.func @kernel(%arg0: i32, %arg1: memref<1x32x16xbf16, #tpu.memory_space<vmem>>, %arg2: memref<16x172xbf16, #tpu.memory_space<vmem>>, %arg3: memref<16x288xbf16, #tpu.memory_space<vmem>>, %arg4: memref<16x1xf32, #tpu.memory_space<vmem>>, %arg5: memref<16x144xbf16, #tpu.memory_space<vmem>>, %arg6: memref<16x1xf32, #tpu.memory_space<vmem>>, %arg7: memref<1x150xf32, #tpu.memory_space<vmem>>, %arg8: memref<1x16x128xbf16, #tpu.memory_space<vmem>>, %arg9: memref<32x172xbf16, #tpu.memory_space<vmem>>, %arg10: memref<288x150xbf16, #tpu.memory_space<vmem>>, %arg11: memref<144x128xbf16, #tpu.memory_space<vmem>>, %arg12: memref<16x150xbf16, #tpu.memory_space<vmem>>) attributes {dimension_semantics = [#tpu.dimension_semantics<parallel>], iteration_bounds = array<i64: 2>, scalar_prefetch = 0 : i64, scratch_operands = 4 : i64, tpu.core_type = #tpu.core_type<tc>, window_params = [{transform_indices = @transform_0, window_bounds = array<i64: 1, 32, 16>}, {pipeline_mode = #tpu.pipeline_mode<synchronous>, transform_indices = @transform_1, window_bounds = array<i64: 16, 172>}, {pipeline_mode = #tpu.pipeline_mode<synchronous>, transform_indices = @transform_2, window_bounds = array<i64: 16, 288>}, {pipeline_mode = #tpu.pipeline_mode<synchronous>, transform_indices = @transform_3, window_bounds = array<i64: 16, 1>}, {pipeline_mode = #tpu.pipeline_mode<synchronous>, transform_indices = @transform_4, window_bounds = array<i64: 16, 144>}, {pipeline_mode = #tpu.pipeline_mode<synchronous>, transform_indices = @transform_5, window_bounds = array<i64: 16, 1>}, {pipeline_mode = #tpu.pipeline_mode<synchronous>, transform_indices = @transform_6, window_bounds = array<i64: 1, 150>}, {transform_indices = @transform_7, window_bounds = array<i64: 1, 16, 128>}]} {
    %c0 = arith.constant 0 : index
    %c0_0 = arith.constant 0 : index
    %c0_1 = arith.constant 0 : index
    %0 = vector.load %arg1[%c0, %c0_0, %c0_1] : memref<1x32x16xbf16, #tpu.memory_space<vmem>>, vector<1x32x16xbf16>
    %1 = vector.shape_cast %0 : vector<1x32x16xbf16> to vector<32x16xbf16>
    %c0_2 = arith.constant 0 : index
    %c0_3 = arith.constant 0 : index
    %2 = vector.load %arg2[%c0_2, %c0_3] : memref<16x172xbf16, #tpu.memory_space<vmem>>, vector<16x172xbf16>
    %cst = arith.constant dense<0.000000e+00> : vector<32x172xf32>
    %3 = tpu.matmul %1, %2, %cst {dimension_numbers = #tpu.dot_dimension_numbers<[1], [0], [0], [1], [0, 0, 1, 1], [], []>} : vector<32x16xbf16>, vector<16x172xbf16>, vector<32x172xf32> -> vector<32x172xf32>
    %4 = arith.truncf %3 : vector<32x172xf32> to vector<32x172xbf16>
    %c0_4 = arith.constant 0 : index
    %c0_5 = arith.constant 0 : index
    %5 = vector.load %arg9[%c0_4, %c0_5] : memref<32x172xbf16, #tpu.memory_space<vmem>>, vector<32x172xbf16>
    tpu.vector_store %arg9[%c0_4, %c0_5], %4 {strides = array<i32>} : memref<32x172xbf16, #tpu.memory_space<vmem>>, vector<32x172xbf16>,
    %c0_6 = arith.constant 0 : index
    %c0_7 = arith.constant 0 : index
    %6 = vector.load %arg9[%c0_6, %c0_7] : memref<32x172xbf16, #tpu.memory_space<vmem>>, vector<32x150xbf16>
    %c0_8 = arith.constant 0 : index
    %c0_9 = arith.constant 0 : index
    %7 = vector.load %arg10[%c0_8, %c0_9] : memref<288x150xbf16, #tpu.memory_space<vmem>>, vector<32x150xbf16>
    tpu.vector_store %arg10[%c0_8, %c0_9], %6 {strides = array<i32>} : memref<288x150xbf16, #tpu.memory_space<vmem>>, vector<32x150xbf16>,
    %c0_10 = arith.constant 0 : index
    %c1 = arith.constant 1 : index
    %8 = vector.load %arg9[%c0_10, %c1] : memref<32x172xbf16, #tpu.memory_space<vmem>>, vector<32x150xbf16>
    %c32 = arith.constant 32 : index
    %c0_11 = arith.constant 0 : index
    %9 = vector.load %arg10[%c32, %c0_11] : memref<288x150xbf16, #tpu.memory_space<vmem>>, vector<32x150xbf16>
    tpu.vector_store %arg10[%c32, %c0_11], %8 {strides = array<i32>} : memref<288x150xbf16, #tpu.memory_space<vmem>>, vector<32x150xbf16>,
    %c0_12 = arith.constant 0 : index
    %c2 = arith.constant 2 : index
    %10 = vector.load %arg9[%c0_12, %c2] : memref<32x172xbf16, #tpu.memory_space<vmem>>, vector<32x150xbf16>
    %c64 = arith.constant 64 : index
    %c0_13 = arith.constant 0 : index
    %11 = vector.load %arg10[%c64, %c0_13] : memref<288x150xbf16, #tpu.memory_space<vmem>>, vector<32x150xbf16>
    tpu.vector_store %arg10[%c64, %c0_13], %10 {strides = array<i32>} : memref<288x150xbf16, #tpu.memory_space<vmem>>, vector<32x150xbf16>,
    %c0_14 = arith.constant 0 : index
    %c10 = arith.constant 10 : index
    %12 = vector.load %arg9[%c0_14, %c10] : memref<32x172xbf16, #tpu.memory_space<vmem>>, vector<32x150xbf16>
    %c96 = arith.constant 96 : index
    %c0_15 = arith.constant 0 : index
    %13 = vector.load %arg10[%c96, %c0_15] : memref<288x150xbf16, #tpu.memory_space<vmem>>, vector<32x150xbf16>
    tpu.vector_store %arg10[%c96, %c0_15], %12 {strides = array<i32>} : memref<288x150xbf16, #tpu.memory_space<vmem>>, vector<32x150xbf16>,
    %c0_16 = arith.constant 0 : index
    %c11 = arith.constant 11 : index
    %14 = vector.load %arg9[%c0_16, %c11] : memref<32x172xbf16, #tpu.memory_space<vmem>>, vector<32x150xbf16>
    %c128 = arith.constant 128 : index
    %c0_17 = arith.constant 0 : index
    %15 = vector.load %arg10[%c128, %c0_17] : memref<288x150xbf16, #tpu.memory_space<vmem>>, vector<32x150xbf16>
    tpu.vector_store %arg10[%c128, %c0_17], %14 {strides = array<i32>} : memref<288x150xbf16, #tpu.memory_space<vmem>>, vector<32x150xbf16>,
    %c0_18 = arith.constant 0 : index
    %c12 = arith.constant 12 : index
    %16 = vector.load %arg9[%c0_18, %c12] : memref<32x172xbf16, #tpu.memory_space<vmem>>, vector<32x150xbf16>
    %c160 = arith.constant 160 : index
    %c0_19 = arith.constant 0 : index
    %17 = vector.load %arg10[%c160, %c0_19] : memref<288x150xbf16, #tpu.memory_space<vmem>>, vector<32x150xbf16>
    tpu.vector_store %arg10[%c160, %c0_19], %16 {strides = array<i32>} : memref<288x150xbf16, #tpu.memory_space<vmem>>, vector<32x150xbf16>,
    %c0_20 = arith.constant 0 : index
    %c20 = arith.constant 20 : index
    %18 = vector.load %arg9[%c0_20, %c20] : memref<32x172xbf16, #tpu.memory_space<vmem>>, vector<32x150xbf16>
    %c192 = arith.constant 192 : index
    %c0_21 = arith.constant 0 : index
    %19 = vector.load %arg10[%c192, %c0_21] : memref<288x150xbf16, #tpu.memory_space<vmem>>, vector<32x150xbf16>
    tpu.vector_store %arg10[%c192, %c0_21], %18 {strides = array<i32>} : memref<288x150xbf16, #tpu.memory_space<vmem>>, vector<32x150xbf16>,
    %c0_22 = arith.constant 0 : index
    %c21 = arith.constant 21 : index
    %20 = vector.load %arg9[%c0_22, %c21] : memref<32x172xbf16, #tpu.memory_space<vmem>>, vector<32x150xbf16>
    %c224 = arith.constant 224 : index
    %c0_23 = arith.constant 0 : index
    %21 = vector.load %arg10[%c224, %c0_23] : memref<288x150xbf16, #tpu.memory_space<vmem>>, vector<32x150xbf16>
    tpu.vector_store %arg10[%c224, %c0_23], %20 {strides = array<i32>} : memref<288x150xbf16, #tpu.memory_space<vmem>>, vector<32x150xbf16>,
    %c0_24 = arith.constant 0 : index
    %c22 = arith.constant 22 : index
    %22 = vector.load %arg9[%c0_24, %c22] : memref<32x172xbf16, #tpu.memory_space<vmem>>, vector<32x150xbf16>
    %c256 = arith.constant 256 : index
    %c0_25 = arith.constant 0 : index
    %23 = vector.load %arg10[%c256, %c0_25] : memref<288x150xbf16, #tpu.memory_space<vmem>>, vector<32x150xbf16>
    tpu.vector_store %arg10[%c256, %c0_25], %22 {strides = array<i32>} : memref<288x150xbf16, #tpu.memory_space<vmem>>, vector<32x150xbf16>,
    %c0_26 = arith.constant 0 : index
    %c0_27 = arith.constant 0 : index
    %24 = vector.load %arg3[%c0_26, %c0_27] : memref<16x288xbf16, #tpu.memory_space<vmem>>, vector<16x288xbf16>
    %c0_28 = arith.constant 0 : index
    %c0_29 = arith.constant 0 : index
    %25 = vector.load %arg10[%c0_28, %c0_29] : memref<288x150xbf16, #tpu.memory_space<vmem>>, vector<288x150xbf16>
    %cst_30 = arith.constant dense<0.000000e+00> : vector<16x150xf32>
    %26 = tpu.matmul %24, %25, %cst_30 {dimension_numbers = #tpu.dot_dimension_numbers<[1], [0], [0], [1], [0, 0, 1, 1], [], []>} : vector<16x288xbf16>, vector<288x150xbf16>, vector<16x150xf32> -> vector<16x150xf32>
    %c0_31 = arith.constant 0 : index
    %c0_32 = arith.constant 0 : index
    %27 = vector.load %arg4[%c0_31, %c0_32] : memref<16x1xf32, #tpu.memory_space<vmem>>, vector<16x1xf32>
    %28 = vector.broadcast %27 : vector<16x1xf32> to vector<16x150xf32>
    %29 = arith.addf %26, %28 : vector<16x150xf32>
    %cst_33 = arith.constant 0.000000e+00 : f32
    %30 = vector.broadcast %cst_33 : f32 to vector<16x150xf32>
    %31 = arith.maximumf %29, %30 : vector<16x150xf32>
    %c0_34 = arith.constant 0 : index
    %c0_35 = arith.constant 0 : index
    %32 = vector.load %arg7[%c0_34, %c0_35] : memref<1x150xf32, #tpu.memory_space<vmem>>, vector<1x150xf32>
    %33 = vector.broadcast %32 : vector<1x150xf32> to vector<16x150xf32>
    %34 = arith.mulf %31, %33 : vector<16x150xf32>
    %35 = arith.truncf %34 : vector<16x150xf32> to vector<16x150xbf16>
    %c0_36 = arith.constant 0 : index
    %c0_37 = arith.constant 0 : index
    %36 = vector.load %arg12[%c0_36, %c0_37] : memref<16x150xbf16, #tpu.memory_space<vmem>>, vector<16x150xbf16>
    tpu.vector_store %arg12[%c0_36, %c0_37], %35 {strides = array<i32>} : memref<16x150xbf16, #tpu.memory_space<vmem>>, vector<16x150xbf16>,
    %c0_38 = arith.constant 0 : index
    %c0_39 = arith.constant 0 : index
    %37 = vector.load %arg12[%c0_38, %c0_39] : memref<16x150xbf16, #tpu.memory_space<vmem>>, vector<16x128xbf16>
    %c0_40 = arith.constant 0 : index
    %c0_41 = arith.constant 0 : index
    %38 = vector.load %arg11[%c0_40, %c0_41] : memref<144x128xbf16, #tpu.memory_space<vmem>>, vector<16x128xbf16>
    tpu.vector_store %arg11[%c0_40, %c0_41], %37 {strides = array<i32>} : memref<144x128xbf16, #tpu.memory_space<vmem>>, vector<16x128xbf16>,
    %c0_42 = arith.constant 0 : index
    %c1_43 = arith.constant 1 : index
    %39 = vector.load %arg12[%c0_42, %c1_43] : memref<16x150xbf16, #tpu.memory_space<vmem>>, vector<16x128xbf16>
    %c16 = arith.constant 16 : index
    %c0_44 = arith.constant 0 : index
    %40 = vector.load %arg11[%c16, %c0_44] : memref<144x128xbf16, #tpu.memory_space<vmem>>, vector<16x128xbf16>
    tpu.vector_store %arg11[%c16, %c0_44], %39 {strides = array<i32>} : memref<144x128xbf16, #tpu.memory_space<vmem>>, vector<16x128xbf16>,
    %c0_45 = arith.constant 0 : index
    %c2_46 = arith.constant 2 : index
    %41 = vector.load %arg12[%c0_45, %c2_46] : memref<16x150xbf16, #tpu.memory_space<vmem>>, vector<16x128xbf16>
    %c32_47 = arith.constant 32 : index
    %c0_48 = arith.constant 0 : index
    %42 = vector.load %arg11[%c32_47, %c0_48] : memref<144x128xbf16, #tpu.memory_space<vmem>>, vector<16x128xbf16>
    tpu.vector_store %arg11[%c32_47, %c0_48], %41 {strides = array<i32>} : memref<144x128xbf16, #tpu.memory_space<vmem>>, vector<16x128xbf16>,
    %c0_49 = arith.constant 0 : index
    %c10_50 = arith.constant 10 : index
    %43 = vector.load %arg12[%c0_49, %c10_50] : memref<16x150xbf16, #tpu.memory_space<vmem>>, vector<16x128xbf16>
    %c48 = arith.constant 48 : index
    %c0_51 = arith.constant 0 : index
    %44 = vector.load %arg11[%c48, %c0_51] : memref<144x128xbf16, #tpu.memory_space<vmem>>, vector<16x128xbf16>
    tpu.vector_store %arg11[%c48, %c0_51], %43 {strides = array<i32>} : memref<144x128xbf16, #tpu.memory_space<vmem>>, vector<16x128xbf16>,
    %c0_52 = arith.constant 0 : index
    %c11_53 = arith.constant 11 : index
    %45 = vector.load %arg12[%c0_52, %c11_53] : memref<16x150xbf16, #tpu.memory_space<vmem>>, vector<16x128xbf16>
    %c64_54 = arith.constant 64 : index
    %c0_55 = arith.constant 0 : index
    %46 = vector.load %arg11[%c64_54, %c0_55] : memref<144x128xbf16, #tpu.memory_space<vmem>>, vector<16x128xbf16>
    tpu.vector_store %arg11[%c64_54, %c0_55], %45 {strides = array<i32>} : memref<144x128xbf16, #tpu.memory_space<vmem>>, vector<16x128xbf16>,
    %c0_56 = arith.constant 0 : index
    %c12_57 = arith.constant 12 : index
    %47 = vector.load %arg12[%c0_56, %c12_57] : memref<16x150xbf16, #tpu.memory_space<vmem>>, vector<16x128xbf16>
    %c80 = arith.constant 80 : index
    %c0_58 = arith.constant 0 : index
    %48 = vector.load %arg11[%c80, %c0_58] : memref<144x128xbf16, #tpu.memory_space<vmem>>, vector<16x128xbf16>
    tpu.vector_store %arg11[%c80, %c0_58], %47 {strides = array<i32>} : memref<144x128xbf16, #tpu.memory_space<vmem>>, vector<16x128xbf16>,
    %c0_59 = arith.constant 0 : index
    %c20_60 = arith.constant 20 : index
    %49 = vector.load %arg12[%c0_59, %c20_60] : memref<16x150xbf16, #tpu.memory_space<vmem>>, vector<16x128xbf16>
    %c96_61 = arith.constant 96 : index
    %c0_62 = arith.constant 0 : index
    %50 = vector.load %arg11[%c96_61, %c0_62] : memref<144x128xbf16, #tpu.memory_space<vmem>>, vector<16x128xbf16>
    tpu.vector_store %arg11[%c96_61, %c0_62], %49 {strides = array<i32>} : memref<144x128xbf16, #tpu.memory_space<vmem>>, vector<16x128xbf16>,
    %c0_63 = arith.constant 0 : index
    %c21_64 = arith.constant 21 : index
    %51 = vector.load %arg12[%c0_63, %c21_64] : memref<16x150xbf16, #tpu.memory_space<vmem>>, vector<16x128xbf16>
    %c112 = arith.constant 112 : index
    %c0_65 = arith.constant 0 : index
    %52 = vector.load %arg11[%c112, %c0_65] : memref<144x128xbf16, #tpu.memory_space<vmem>>, vector<16x128xbf16>
    tpu.vector_store %arg11[%c112, %c0_65], %51 {strides = array<i32>} : memref<144x128xbf16, #tpu.memory_space<vmem>>, vector<16x128xbf16>,
    %c0_66 = arith.constant 0 : index
    %c22_67 = arith.constant 22 : index
    %53 = vector.load %arg12[%c0_66, %c22_67] : memref<16x150xbf16, #tpu.memory_space<vmem>>, vector<16x128xbf16>
    %c128_68 = arith.constant 128 : index
    %c0_69 = arith.constant 0 : index
    %54 = vector.load %arg11[%c128_68, %c0_69] : memref<144x128xbf16, #tpu.memory_space<vmem>>, vector<16x128xbf16>
    tpu.vector_store %arg11[%c128_68, %c0_69], %53 {strides = array<i32>} : memref<144x128xbf16, #tpu.memory_space<vmem>>, vector<16x128xbf16>,
    %c0_70 = arith.constant 0 : index
    %c0_71 = arith.constant 0 : index
    %55 = vector.load %arg5[%c0_70, %c0_71] : memref<16x144xbf16, #tpu.memory_space<vmem>>, vector<16x144xbf16>
    %c0_72 = arith.constant 0 : index
    %c0_73 = arith.constant 0 : index
    %56 = vector.load %arg11[%c0_72, %c0_73] : memref<144x128xbf16, #tpu.memory_space<vmem>>, vector<144x128xbf16>
    %cst_74 = arith.constant dense<0.000000e+00> : vector<16x128xf32>
    %57 = tpu.matmul %55, %56, %cst_74 {dimension_numbers = #tpu.dot_dimension_numbers<[1], [0], [0], [1], [0, 0, 1, 1], [], []>} : vector<16x144xbf16>, vector<144x128xbf16>, vector<16x128xf32> -> vector<16x128xf32>
    %c0_75 = arith.constant 0 : index
    %c0_76 = arith.constant 0 : index
    %58 = vector.load %arg6[%c0_75, %c0_76] : memref<16x1xf32, #tpu.memory_space<vmem>>, vector<16x1xf32>
    %59 = vector.broadcast %58 : vector<16x1xf32> to vector<16x128xf32>
    %60 = arith.addf %57, %59 : vector<16x128xf32>
    %cst_77 = arith.constant 0.000000e+00 : f32
    %61 = vector.broadcast %cst_77 : f32 to vector<16x128xf32>
    %62 = arith.maximumf %60, %61 : vector<16x128xf32>
    %63 = arith.truncf %62 : vector<16x128xf32> to vector<16x128xbf16>
    %c0_78 = arith.constant 0 : index
    %c0_79 = arith.constant 0 : index
    %c0_80 = arith.constant 0 : index
    %64 = vector.load %arg8[%c0_78, %c0_79, %c0_80] : memref<1x16x128xbf16, #tpu.memory_space<vmem>>, vector<1x16x128xbf16>
    %65 = vector.shape_cast %64 : vector<1x16x128xbf16> to vector<16x128xbf16>
    %66 = vector.shape_cast %63 : vector<16x128xbf16> to vector<1x16x128xbf16>
    tpu.vector_store %arg8[%c0_78, %c0_79, %c0_80], %66 {strides = array<i32>} : memref<1x16x128xbf16, #tpu.memory_space<vmem>>, vector<1x16x128xbf16>,
    return
  }
  func.func @transform_0(%arg0: i32) -> (i32, i32, i32) {
    %c0_i32 = arith.constant 0 : i32
    %c0_i32_0 = arith.constant 0 : i32
    %c0_i32_1 = arith.constant 0 : i32
    return %arg0, %c0_i32, %c0_i32_0 : i32, i32, i32
  }
  func.func @transform_1(%arg0: i32) -> (i32, i32) {
    %c0_i32 = arith.constant 0 : i32
    %c0_i32_0 = arith.constant 0 : i32
    %c0_i32_1 = arith.constant 0 : i32
    return %c0_i32, %c0_i32_0 : i32, i32
  }
  func.func @transform_2(%arg0: i32) -> (i32, i32) {
    %c0_i32 = arith.constant 0 : i32
    %c0_i32_0 = arith.constant 0 : i32
    %c0_i32_1 = arith.constant 0 : i32
    return %c0_i32, %c0_i32_0 : i32, i32
  }
  func.func @transform_3(%arg0: i32) -> (i32, i32) {
    %c0_i32 = arith.constant 0 : i32
    %c0_i32_0 = arith.constant 0 : i32
    %c0_i32_1 = arith.constant 0 : i32
    return %c0_i32, %c0_i32_0 : i32, i32
  }
  func.func @transform_4(%arg0: i32) -> (i32, i32) {
    %c0_i32 = arith.constant 0 : i32
    %c0_i32_0 = arith.constant 0 : i32
    %c0_i32_1 = arith.constant 0 : i32
    return %c0_i32, %c0_i32_0 : i32, i32
  }
  func.func @transform_5(%arg0: i32) -> (i32, i32) {
    %c0_i32 = arith.constant 0 : i32
    %c0_i32_0 = arith.constant 0 : i32
    %c0_i32_1 = arith.constant 0 : i32
    return %c0_i32, %c0_i32_0 : i32, i32
  }
  func.func @transform_6(%arg0: i32) -> (i32, i32) {
    %c0_i32 = arith.constant 0 : i32
    %c0_i32_0 = arith.constant 0 : i32
    %c0_i32_1 = arith.constant 0 : i32
    return %c0_i32, %c0_i32_0 : i32, i32
  }
  func.func @transform_7(%arg0: i32) -> (i32, i32, i32) {
    %c0_i32 = arith.constant 0 : i32
    %c0_i32_0 = arith.constant 0 : i32
    %c0_i32_1 = arith.constant 0 : i32
    return %arg0, %c0_i32, %c0_i32_0 : i32, i32, i32
  }
}

module attributes {stable_mosaic.version = 11 : i64} {
  func.func @kernel(%arg0: i32, %arg1: memref<1x16x64xbf16, #tpu.memory_space<vmem>>, %arg2: memref<64x498xbf16, #tpu.memory_space<vmem>>, %arg3: memref<8x144xbf16, #tpu.memory_space<vmem>>, %arg4: memref<8x1xf32, #tpu.memory_space<vmem>>, %arg5: memref<8x72xbf16, #tpu.memory_space<vmem>>, %arg6: memref<8x1xf32, #tpu.memory_space<vmem>>, %arg7: memref<3x72xbf16, #tpu.memory_space<vmem>>, %arg8: memref<3x1xf32, #tpu.memory_space<vmem>>, %arg9: memref<1x460xf32, #tpu.memory_space<vmem>>, %arg10: memref<1x422xf32, #tpu.memory_space<vmem>>, %arg11: memref<1x3x384xf32, #tpu.memory_space<vmem>>, %arg12: memref<16x498xbf16, #tpu.memory_space<vmem>>, %arg13: memref<144x460xbf16, #tpu.memory_space<vmem>>, %arg14: memref<72x422xbf16, #tpu.memory_space<vmem>>, %arg15: memref<72x384xbf16, #tpu.memory_space<vmem>>, %arg16: memref<8x460xbf16, #tpu.memory_space<vmem>>, %arg17: memref<8x422xbf16, #tpu.memory_space<vmem>>) attributes {dimension_semantics = [#tpu.dimension_semantics<parallel>], iteration_bounds = array<i64: 2>, scalar_prefetch = 0 : i64, scratch_operands = 6 : i64, tpu.core_type = #tpu.core_type<tc>, window_params = [{transform_indices = @transform_0, window_bounds = array<i64: 1, 16, 64>}, {pipeline_mode = #tpu.pipeline_mode<synchronous>, transform_indices = @transform_1, window_bounds = array<i64: 64, 498>}, {pipeline_mode = #tpu.pipeline_mode<synchronous>, transform_indices = @transform_2, window_bounds = array<i64: 8, 144>}, {pipeline_mode = #tpu.pipeline_mode<synchronous>, transform_indices = @transform_3, window_bounds = array<i64: 8, 1>}, {pipeline_mode = #tpu.pipeline_mode<synchronous>, transform_indices = @transform_4, window_bounds = array<i64: 8, 72>}, {pipeline_mode = #tpu.pipeline_mode<synchronous>, transform_indices = @transform_5, window_bounds = array<i64: 8, 1>}, {pipeline_mode = #tpu.pipeline_mode<synchronous>, transform_indices = @transform_6, window_bounds = array<i64: 3, 72>}, {pipeline_mode = #tpu.pipeline_mode<synchronous>, transform_indices = @transform_7, window_bounds = array<i64: 3, 1>}, {pipeline_mode = #tpu.pipeline_mode<synchronous>, transform_indices = @transform_8, window_bounds = array<i64: 1, 460>}, {pipeline_mode = #tpu.pipeline_mode<synchronous>, transform_indices = @transform_9, window_bounds = array<i64: 1, 422>}, {transform_indices = @transform_10, window_bounds = array<i64: 1, 3, 384>}]} {
    %c0 = arith.constant 0 : index
    %c0_0 = arith.constant 0 : index
    %c0_1 = arith.constant 0 : index
    %0 = vector.load %arg1[%c0, %c0_0, %c0_1] : memref<1x16x64xbf16, #tpu.memory_space<vmem>>, vector<1x16x64xbf16>
    %1 = vector.shape_cast %0 : vector<1x16x64xbf16> to vector<16x64xbf16>
    %c0_2 = arith.constant 0 : index
    %c0_3 = arith.constant 0 : index
    %2 = vector.load %arg2[%c0_2, %c0_3] : memref<64x498xbf16, #tpu.memory_space<vmem>>, vector<64x498xbf16>
    %cst = arith.constant dense<0.000000e+00> : vector<16x498xf32>
    %3 = tpu.matmul %1, %2, %cst {dimension_numbers = #tpu.dot_dimension_numbers<[1], [0], [0], [1], [0, 0, 1, 1], [], []>} : vector<16x64xbf16>, vector<64x498xbf16>, vector<16x498xf32> -> vector<16x498xf32>
    %4 = arith.truncf %3 : vector<16x498xf32> to vector<16x498xbf16>
    %c0_4 = arith.constant 0 : index
    %c0_5 = arith.constant 0 : index
    %5 = vector.load %arg12[%c0_4, %c0_5] : memref<16x498xbf16, #tpu.memory_space<vmem>>, vector<16x498xbf16>
    tpu.vector_store %arg12[%c0_4, %c0_5], %4 {strides = array<i32>} : memref<16x498xbf16, #tpu.memory_space<vmem>>, vector<16x498xbf16>,
    %c0_6 = arith.constant 0 : index
    %c0_7 = arith.constant 0 : index
    %6 = vector.load %arg12[%c0_6, %c0_7] : memref<16x498xbf16, #tpu.memory_space<vmem>>, vector<16x460xbf16>
    %c0_8 = arith.constant 0 : index
    %c0_9 = arith.constant 0 : index
    %7 = vector.load %arg13[%c0_8, %c0_9] : memref<144x460xbf16, #tpu.memory_space<vmem>>, vector<16x460xbf16>
    tpu.vector_store %arg13[%c0_8, %c0_9], %6 {strides = array<i32>} : memref<144x460xbf16, #tpu.memory_space<vmem>>, vector<16x460xbf16>,
    %c0_10 = arith.constant 0 : index
    %c1 = arith.constant 1 : index
    %8 = vector.load %arg12[%c0_10, %c1] : memref<16x498xbf16, #tpu.memory_space<vmem>>, vector<16x460xbf16>
    %c16 = arith.constant 16 : index
    %c0_11 = arith.constant 0 : index
    %9 = vector.load %arg13[%c16, %c0_11] : memref<144x460xbf16, #tpu.memory_space<vmem>>, vector<16x460xbf16>
    tpu.vector_store %arg13[%c16, %c0_11], %8 {strides = array<i32>} : memref<144x460xbf16, #tpu.memory_space<vmem>>, vector<16x460xbf16>,
    %c0_12 = arith.constant 0 : index
    %c2 = arith.constant 2 : index
    %10 = vector.load %arg12[%c0_12, %c2] : memref<16x498xbf16, #tpu.memory_space<vmem>>, vector<16x460xbf16>
    %c32 = arith.constant 32 : index
    %c0_13 = arith.constant 0 : index
    %11 = vector.load %arg13[%c32, %c0_13] : memref<144x460xbf16, #tpu.memory_space<vmem>>, vector<16x460xbf16>
    tpu.vector_store %arg13[%c32, %c0_13], %10 {strides = array<i32>} : memref<144x460xbf16, #tpu.memory_space<vmem>>, vector<16x460xbf16>,
    %c0_14 = arith.constant 0 : index
    %c18 = arith.constant 18 : index
    %12 = vector.load %arg12[%c0_14, %c18] : memref<16x498xbf16, #tpu.memory_space<vmem>>, vector<16x460xbf16>
    %c48 = arith.constant 48 : index
    %c0_15 = arith.constant 0 : index
    %13 = vector.load %arg13[%c48, %c0_15] : memref<144x460xbf16, #tpu.memory_space<vmem>>, vector<16x460xbf16>
    tpu.vector_store %arg13[%c48, %c0_15], %12 {strides = array<i32>} : memref<144x460xbf16, #tpu.memory_space<vmem>>, vector<16x460xbf16>,
    %c0_16 = arith.constant 0 : index
    %c19 = arith.constant 19 : index
    %14 = vector.load %arg12[%c0_16, %c19] : memref<16x498xbf16, #tpu.memory_space<vmem>>, vector<16x460xbf16>
    %c64 = arith.constant 64 : index
    %c0_17 = arith.constant 0 : index
    %15 = vector.load %arg13[%c64, %c0_17] : memref<144x460xbf16, #tpu.memory_space<vmem>>, vector<16x460xbf16>
    tpu.vector_store %arg13[%c64, %c0_17], %14 {strides = array<i32>} : memref<144x460xbf16, #tpu.memory_space<vmem>>, vector<16x460xbf16>,
    %c0_18 = arith.constant 0 : index
    %c20 = arith.constant 20 : index
    %16 = vector.load %arg12[%c0_18, %c20] : memref<16x498xbf16, #tpu.memory_space<vmem>>, vector<16x460xbf16>
    %c80 = arith.constant 80 : index
    %c0_19 = arith.constant 0 : index
    %17 = vector.load %arg13[%c80, %c0_19] : memref<144x460xbf16, #tpu.memory_space<vmem>>, vector<16x460xbf16>
    tpu.vector_store %arg13[%c80, %c0_19], %16 {strides = array<i32>} : memref<144x460xbf16, #tpu.memory_space<vmem>>, vector<16x460xbf16>,
    %c0_20 = arith.constant 0 : index
    %c36 = arith.constant 36 : index
    %18 = vector.load %arg12[%c0_20, %c36] : memref<16x498xbf16, #tpu.memory_space<vmem>>, vector<16x460xbf16>
    %c96 = arith.constant 96 : index
    %c0_21 = arith.constant 0 : index
    %19 = vector.load %arg13[%c96, %c0_21] : memref<144x460xbf16, #tpu.memory_space<vmem>>, vector<16x460xbf16>
    tpu.vector_store %arg13[%c96, %c0_21], %18 {strides = array<i32>} : memref<144x460xbf16, #tpu.memory_space<vmem>>, vector<16x460xbf16>,
    %c0_22 = arith.constant 0 : index
    %c37 = arith.constant 37 : index
    %20 = vector.load %arg12[%c0_22, %c37] : memref<16x498xbf16, #tpu.memory_space<vmem>>, vector<16x460xbf16>
    %c112 = arith.constant 112 : index
    %c0_23 = arith.constant 0 : index
    %21 = vector.load %arg13[%c112, %c0_23] : memref<144x460xbf16, #tpu.memory_space<vmem>>, vector<16x460xbf16>
    tpu.vector_store %arg13[%c112, %c0_23], %20 {strides = array<i32>} : memref<144x460xbf16, #tpu.memory_space<vmem>>, vector<16x460xbf16>,
    %c0_24 = arith.constant 0 : index
    %c38 = arith.constant 38 : index
    %22 = vector.load %arg12[%c0_24, %c38] : memref<16x498xbf16, #tpu.memory_space<vmem>>, vector<16x460xbf16>
    %c128 = arith.constant 128 : index
    %c0_25 = arith.constant 0 : index
    %23 = vector.load %arg13[%c128, %c0_25] : memref<144x460xbf16, #tpu.memory_space<vmem>>, vector<16x460xbf16>
    tpu.vector_store %arg13[%c128, %c0_25], %22 {strides = array<i32>} : memref<144x460xbf16, #tpu.memory_space<vmem>>, vector<16x460xbf16>,
    %c0_26 = arith.constant 0 : index
    %c0_27 = arith.constant 0 : index
    %24 = vector.load %arg3[%c0_26, %c0_27] : memref<8x144xbf16, #tpu.memory_space<vmem>>, vector<8x144xbf16>
    %c0_28 = arith.constant 0 : index
    %c0_29 = arith.constant 0 : index
    %25 = vector.load %arg13[%c0_28, %c0_29] : memref<144x460xbf16, #tpu.memory_space<vmem>>, vector<144x460xbf16>
    %cst_30 = arith.constant dense<0.000000e+00> : vector<8x460xf32>
    %26 = tpu.matmul %24, %25, %cst_30 {dimension_numbers = #tpu.dot_dimension_numbers<[1], [0], [0], [1], [0, 0, 1, 1], [], []>} : vector<8x144xbf16>, vector<144x460xbf16>, vector<8x460xf32> -> vector<8x460xf32>
    %c0_31 = arith.constant 0 : index
    %c0_32 = arith.constant 0 : index
    %27 = vector.load %arg4[%c0_31, %c0_32] : memref<8x1xf32, #tpu.memory_space<vmem>>, vector<8x1xf32>
    %28 = vector.broadcast %27 : vector<8x1xf32> to vector<8x460xf32>
    %29 = arith.addf %26, %28 : vector<8x460xf32>
    %cst_33 = arith.constant 0.000000e+00 : f32
    %30 = vector.broadcast %cst_33 : f32 to vector<8x460xf32>
    %31 = arith.maximumf %29, %30 : vector<8x460xf32>
    %c0_34 = arith.constant 0 : index
    %c0_35 = arith.constant 0 : index
    %32 = vector.load %arg9[%c0_34, %c0_35] : memref<1x460xf32, #tpu.memory_space<vmem>>, vector<1x460xf32>
    %33 = vector.broadcast %32 : vector<1x460xf32> to vector<8x460xf32>
    %34 = arith.mulf %31, %33 : vector<8x460xf32>
    %35 = arith.truncf %34 : vector<8x460xf32> to vector<8x460xbf16>
    %c0_36 = arith.constant 0 : index
    %c0_37 = arith.constant 0 : index
    %36 = vector.load %arg16[%c0_36, %c0_37] : memref<8x460xbf16, #tpu.memory_space<vmem>>, vector<8x460xbf16>
    tpu.vector_store %arg16[%c0_36, %c0_37], %35 {strides = array<i32>} : memref<8x460xbf16, #tpu.memory_space<vmem>>, vector<8x460xbf16>,
    %c0_38 = arith.constant 0 : index
    %c0_39 = arith.constant 0 : index
    %37 = vector.load %arg16[%c0_38, %c0_39] : memref<8x460xbf16, #tpu.memory_space<vmem>>, vector<8x422xbf16>
    %c0_40 = arith.constant 0 : index
    %c0_41 = arith.constant 0 : index
    %38 = vector.load %arg14[%c0_40, %c0_41] : memref<72x422xbf16, #tpu.memory_space<vmem>>, vector<8x422xbf16>
    tpu.vector_store %arg14[%c0_40, %c0_41], %37 {strides = array<i32>} : memref<72x422xbf16, #tpu.memory_space<vmem>>, vector<8x422xbf16>,
    %c0_42 = arith.constant 0 : index
    %c1_43 = arith.constant 1 : index
    %39 = vector.load %arg16[%c0_42, %c1_43] : memref<8x460xbf16, #tpu.memory_space<vmem>>, vector<8x422xbf16>
    %c8 = arith.constant 8 : index
    %c0_44 = arith.constant 0 : index
    %40 = vector.load %arg14[%c8, %c0_44] : memref<72x422xbf16, #tpu.memory_space<vmem>>, vector<8x422xbf16>
    tpu.vector_store %arg14[%c8, %c0_44], %39 {strides = array<i32>} : memref<72x422xbf16, #tpu.memory_space<vmem>>, vector<8x422xbf16>,
    %c0_45 = arith.constant 0 : index
    %c2_46 = arith.constant 2 : index
    %41 = vector.load %arg16[%c0_45, %c2_46] : memref<8x460xbf16, #tpu.memory_space<vmem>>, vector<8x422xbf16>
    %c16_47 = arith.constant 16 : index
    %c0_48 = arith.constant 0 : index
    %42 = vector.load %arg14[%c16_47, %c0_48] : memref<72x422xbf16, #tpu.memory_space<vmem>>, vector<8x422xbf16>
    tpu.vector_store %arg14[%c16_47, %c0_48], %41 {strides = array<i32>} : memref<72x422xbf16, #tpu.memory_space<vmem>>, vector<8x422xbf16>,
    %c0_49 = arith.constant 0 : index
    %c18_50 = arith.constant 18 : index
    %43 = vector.load %arg16[%c0_49, %c18_50] : memref<8x460xbf16, #tpu.memory_space<vmem>>, vector<8x422xbf16>
    %c24 = arith.constant 24 : index
    %c0_51 = arith.constant 0 : index
    %44 = vector.load %arg14[%c24, %c0_51] : memref<72x422xbf16, #tpu.memory_space<vmem>>, vector<8x422xbf16>
    tpu.vector_store %arg14[%c24, %c0_51], %43 {strides = array<i32>} : memref<72x422xbf16, #tpu.memory_space<vmem>>, vector<8x422xbf16>,
    %c0_52 = arith.constant 0 : index
    %c19_53 = arith.constant 19 : index
    %45 = vector.load %arg16[%c0_52, %c19_53] : memref<8x460xbf16, #tpu.memory_space<vmem>>, vector<8x422xbf16>
    %c32_54 = arith.constant 32 : index
    %c0_55 = arith.constant 0 : index
    %46 = vector.load %arg14[%c32_54, %c0_55] : memref<72x422xbf16, #tpu.memory_space<vmem>>, vector<8x422xbf16>
    tpu.vector_store %arg14[%c32_54, %c0_55], %45 {strides = array<i32>} : memref<72x422xbf16, #tpu.memory_space<vmem>>, vector<8x422xbf16>,
    %c0_56 = arith.constant 0 : index
    %c20_57 = arith.constant 20 : index
    %47 = vector.load %arg16[%c0_56, %c20_57] : memref<8x460xbf16, #tpu.memory_space<vmem>>, vector<8x422xbf16>
    %c40 = arith.constant 40 : index
    %c0_58 = arith.constant 0 : index
    %48 = vector.load %arg14[%c40, %c0_58] : memref<72x422xbf16, #tpu.memory_space<vmem>>, vector<8x422xbf16>
    tpu.vector_store %arg14[%c40, %c0_58], %47 {strides = array<i32>} : memref<72x422xbf16, #tpu.memory_space<vmem>>, vector<8x422xbf16>,
    %c0_59 = arith.constant 0 : index
    %c36_60 = arith.constant 36 : index
    %49 = vector.load %arg16[%c0_59, %c36_60] : memref<8x460xbf16, #tpu.memory_space<vmem>>, vector<8x422xbf16>
    %c48_61 = arith.constant 48 : index
    %c0_62 = arith.constant 0 : index
    %50 = vector.load %arg14[%c48_61, %c0_62] : memref<72x422xbf16, #tpu.memory_space<vmem>>, vector<8x422xbf16>
    tpu.vector_store %arg14[%c48_61, %c0_62], %49 {strides = array<i32>} : memref<72x422xbf16, #tpu.memory_space<vmem>>, vector<8x422xbf16>,
    %c0_63 = arith.constant 0 : index
    %c37_64 = arith.constant 37 : index
    %51 = vector.load %arg16[%c0_63, %c37_64] : memref<8x460xbf16, #tpu.memory_space<vmem>>, vector<8x422xbf16>
    %c56 = arith.constant 56 : index
    %c0_65 = arith.constant 0 : index
    %52 = vector.load %arg14[%c56, %c0_65] : memref<72x422xbf16, #tpu.memory_space<vmem>>, vector<8x422xbf16>
    tpu.vector_store %arg14[%c56, %c0_65], %51 {strides = array<i32>} : memref<72x422xbf16, #tpu.memory_space<vmem>>, vector<8x422xbf16>,
    %c0_66 = arith.constant 0 : index
    %c38_67 = arith.constant 38 : index
    %53 = vector.load %arg16[%c0_66, %c38_67] : memref<8x460xbf16, #tpu.memory_space<vmem>>, vector<8x422xbf16>
    %c64_68 = arith.constant 64 : index
    %c0_69 = arith.constant 0 : index
    %54 = vector.load %arg14[%c64_68, %c0_69] : memref<72x422xbf16, #tpu.memory_space<vmem>>, vector<8x422xbf16>
    tpu.vector_store %arg14[%c64_68, %c0_69], %53 {strides = array<i32>} : memref<72x422xbf16, #tpu.memory_space<vmem>>, vector<8x422xbf16>,
    %c0_70 = arith.constant 0 : index
    %c0_71 = arith.constant 0 : index
    %55 = vector.load %arg5[%c0_70, %c0_71] : memref<8x72xbf16, #tpu.memory_space<vmem>>, vector<8x72xbf16>
    %c0_72 = arith.constant 0 : index
    %c0_73 = arith.constant 0 : index
    %56 = vector.load %arg14[%c0_72, %c0_73] : memref<72x422xbf16, #tpu.memory_space<vmem>>, vector<72x422xbf16>
    %cst_74 = arith.constant dense<0.000000e+00> : vector<8x422xf32>
    %57 = tpu.matmul %55, %56, %cst_74 {dimension_numbers = #tpu.dot_dimension_numbers<[1], [0], [0], [1], [0, 0, 1, 1], [], []>} : vector<8x72xbf16>, vector<72x422xbf16>, vector<8x422xf32> -> vector<8x422xf32>
    %c0_75 = arith.constant 0 : index
    %c0_76 = arith.constant 0 : index
    %58 = vector.load %arg6[%c0_75, %c0_76] : memref<8x1xf32, #tpu.memory_space<vmem>>, vector<8x1xf32>
    %59 = vector.broadcast %58 : vector<8x1xf32> to vector<8x422xf32>
    %60 = arith.addf %57, %59 : vector<8x422xf32>
    %cst_77 = arith.constant 0.000000e+00 : f32
    %61 = vector.broadcast %cst_77 : f32 to vector<8x422xf32>
    %62 = arith.maximumf %60, %61 : vector<8x422xf32>
    %c0_78 = arith.constant 0 : index
    %c0_79 = arith.constant 0 : index
    %63 = vector.load %arg10[%c0_78, %c0_79] : memref<1x422xf32, #tpu.memory_space<vmem>>, vector<1x422xf32>
    %64 = vector.broadcast %63 : vector<1x422xf32> to vector<8x422xf32>
    %65 = arith.mulf %62, %64 : vector<8x422xf32>
    %66 = arith.truncf %65 : vector<8x422xf32> to vector<8x422xbf16>
    %c0_80 = arith.constant 0 : index
    %c0_81 = arith.constant 0 : index
    %67 = vector.load %arg17[%c0_80, %c0_81] : memref<8x422xbf16, #tpu.memory_space<vmem>>, vector<8x422xbf16>
    tpu.vector_store %arg17[%c0_80, %c0_81], %66 {strides = array<i32>} : memref<8x422xbf16, #tpu.memory_space<vmem>>, vector<8x422xbf16>,
    %c0_82 = arith.constant 0 : index
    %c0_83 = arith.constant 0 : index
    %68 = vector.load %arg17[%c0_82, %c0_83] : memref<8x422xbf16, #tpu.memory_space<vmem>>, vector<8x384xbf16>
    %c0_84 = arith.constant 0 : index
    %c0_85 = arith.constant 0 : index
    %69 = vector.load %arg15[%c0_84, %c0_85] : memref<72x384xbf16, #tpu.memory_space<vmem>>, vector<8x384xbf16>
    tpu.vector_store %arg15[%c0_84, %c0_85], %68 {strides = array<i32>} : memref<72x384xbf16, #tpu.memory_space<vmem>>, vector<8x384xbf16>,
    %c0_86 = arith.constant 0 : index
    %c1_87 = arith.constant 1 : index
    %70 = vector.load %arg17[%c0_86, %c1_87] : memref<8x422xbf16, #tpu.memory_space<vmem>>, vector<8x384xbf16>
    %c8_88 = arith.constant 8 : index
    %c0_89 = arith.constant 0 : index
    %71 = vector.load %arg15[%c8_88, %c0_89] : memref<72x384xbf16, #tpu.memory_space<vmem>>, vector<8x384xbf16>
    tpu.vector_store %arg15[%c8_88, %c0_89], %70 {strides = array<i32>} : memref<72x384xbf16, #tpu.memory_space<vmem>>, vector<8x384xbf16>,
    %c0_90 = arith.constant 0 : index
    %c2_91 = arith.constant 2 : index
    %72 = vector.load %arg17[%c0_90, %c2_91] : memref<8x422xbf16, #tpu.memory_space<vmem>>, vector<8x384xbf16>
    %c16_92 = arith.constant 16 : index
    %c0_93 = arith.constant 0 : index
    %73 = vector.load %arg15[%c16_92, %c0_93] : memref<72x384xbf16, #tpu.memory_space<vmem>>, vector<8x384xbf16>
    tpu.vector_store %arg15[%c16_92, %c0_93], %72 {strides = array<i32>} : memref<72x384xbf16, #tpu.memory_space<vmem>>, vector<8x384xbf16>,
    %c0_94 = arith.constant 0 : index
    %c18_95 = arith.constant 18 : index
    %74 = vector.load %arg17[%c0_94, %c18_95] : memref<8x422xbf16, #tpu.memory_space<vmem>>, vector<8x384xbf16>
    %c24_96 = arith.constant 24 : index
    %c0_97 = arith.constant 0 : index
    %75 = vector.load %arg15[%c24_96, %c0_97] : memref<72x384xbf16, #tpu.memory_space<vmem>>, vector<8x384xbf16>
    tpu.vector_store %arg15[%c24_96, %c0_97], %74 {strides = array<i32>} : memref<72x384xbf16, #tpu.memory_space<vmem>>, vector<8x384xbf16>,
    %c0_98 = arith.constant 0 : index
    %c19_99 = arith.constant 19 : index
    %76 = vector.load %arg17[%c0_98, %c19_99] : memref<8x422xbf16, #tpu.memory_space<vmem>>, vector<8x384xbf16>
    %c32_100 = arith.constant 32 : index
    %c0_101 = arith.constant 0 : index
    %77 = vector.load %arg15[%c32_100, %c0_101] : memref<72x384xbf16, #tpu.memory_space<vmem>>, vector<8x384xbf16>
    tpu.vector_store %arg15[%c32_100, %c0_101], %76 {strides = array<i32>} : memref<72x384xbf16, #tpu.memory_space<vmem>>, vector<8x384xbf16>,
    %c0_102 = arith.constant 0 : index
    %c20_103 = arith.constant 20 : index
    %78 = vector.load %arg17[%c0_102, %c20_103] : memref<8x422xbf16, #tpu.memory_space<vmem>>, vector<8x384xbf16>
    %c40_104 = arith.constant 40 : index
    %c0_105 = arith.constant 0 : index
    %79 = vector.load %arg15[%c40_104, %c0_105] : memref<72x384xbf16, #tpu.memory_space<vmem>>, vector<8x384xbf16>
    tpu.vector_store %arg15[%c40_104, %c0_105], %78 {strides = array<i32>} : memref<72x384xbf16, #tpu.memory_space<vmem>>, vector<8x384xbf16>,
    %c0_106 = arith.constant 0 : index
    %c36_107 = arith.constant 36 : index
    %80 = vector.load %arg17[%c0_106, %c36_107] : memref<8x422xbf16, #tpu.memory_space<vmem>>, vector<8x384xbf16>
    %c48_108 = arith.constant 48 : index
    %c0_109 = arith.constant 0 : index
    %81 = vector.load %arg15[%c48_108, %c0_109] : memref<72x384xbf16, #tpu.memory_space<vmem>>, vector<8x384xbf16>
    tpu.vector_store %arg15[%c48_108, %c0_109], %80 {strides = array<i32>} : memref<72x384xbf16, #tpu.memory_space<vmem>>, vector<8x384xbf16>,
    %c0_110 = arith.constant 0 : index
    %c37_111 = arith.constant 37 : index
    %82 = vector.load %arg17[%c0_110, %c37_111] : memref<8x422xbf16, #tpu.memory_space<vmem>>, vector<8x384xbf16>
    %c56_112 = arith.constant 56 : index
    %c0_113 = arith.constant 0 : index
    %83 = vector.load %arg15[%c56_112, %c0_113] : memref<72x384xbf16, #tpu.memory_space<vmem>>, vector<8x384xbf16>
    tpu.vector_store %arg15[%c56_112, %c0_113], %82 {strides = array<i32>} : memref<72x384xbf16, #tpu.memory_space<vmem>>, vector<8x384xbf16>,
    %c0_114 = arith.constant 0 : index
    %c38_115 = arith.constant 38 : index
    %84 = vector.load %arg17[%c0_114, %c38_115] : memref<8x422xbf16, #tpu.memory_space<vmem>>, vector<8x384xbf16>
    %c64_116 = arith.constant 64 : index
    %c0_117 = arith.constant 0 : index
    %85 = vector.load %arg15[%c64_116, %c0_117] : memref<72x384xbf16, #tpu.memory_space<vmem>>, vector<8x384xbf16>
    tpu.vector_store %arg15[%c64_116, %c0_117], %84 {strides = array<i32>} : memref<72x384xbf16, #tpu.memory_space<vmem>>, vector<8x384xbf16>,
    %c0_118 = arith.constant 0 : index
    %c0_119 = arith.constant 0 : index
    %86 = vector.load %arg7[%c0_118, %c0_119] : memref<3x72xbf16, #tpu.memory_space<vmem>>, vector<3x72xbf16>
    %c0_120 = arith.constant 0 : index
    %c0_121 = arith.constant 0 : index
    %87 = vector.load %arg15[%c0_120, %c0_121] : memref<72x384xbf16, #tpu.memory_space<vmem>>, vector<72x384xbf16>
    %cst_122 = arith.constant dense<0.000000e+00> : vector<3x384xf32>
    %88 = tpu.matmul %86, %87, %cst_122 {dimension_numbers = #tpu.dot_dimension_numbers<[1], [0], [0], [1], [0, 0, 1, 1], [], []>} : vector<3x72xbf16>, vector<72x384xbf16>, vector<3x384xf32> -> vector<3x384xf32>
    %c0_123 = arith.constant 0 : index
    %c0_124 = arith.constant 0 : index
    %89 = vector.load %arg8[%c0_123, %c0_124] : memref<3x1xf32, #tpu.memory_space<vmem>>, vector<3x1xf32>
    %90 = vector.broadcast %89 : vector<3x1xf32> to vector<3x384xf32>
    %91 = arith.addf %88, %90 : vector<3x384xf32>
    %cst_125 = arith.constant 5.000000e-01 : f32
    %92 = vector.broadcast %cst_125 : f32 to vector<3x384xf32>
    %93 = arith.mulf %92, %91 : vector<3x384xf32>
    %94 = math.tanh %93 : vector<3x384xf32>
    %cst_126 = arith.constant 1.000000e+00 : f32
    %95 = vector.broadcast %cst_126 : f32 to vector<3x384xf32>
    %96 = arith.addf %94, %95 : vector<3x384xf32>
    %cst_127 = arith.constant 5.000000e-01 : f32
    %97 = vector.broadcast %cst_127 : f32 to vector<3x384xf32>
    %98 = arith.mulf %97, %96 : vector<3x384xf32>
    %c0_128 = arith.constant 0 : index
    %c0_129 = arith.constant 0 : index
    %c0_130 = arith.constant 0 : index
    %99 = vector.load %arg11[%c0_128, %c0_129, %c0_130] : memref<1x3x384xf32, #tpu.memory_space<vmem>>, vector<1x3x384xf32>
    %100 = vector.shape_cast %99 : vector<1x3x384xf32> to vector<3x384xf32>
    %101 = vector.shape_cast %98 : vector<3x384xf32> to vector<1x3x384xf32>
    tpu.vector_store %arg11[%c0_128, %c0_129, %c0_130], %101 {strides = array<i32>} : memref<1x3x384xf32, #tpu.memory_space<vmem>>, vector<1x3x384xf32>,
    return
  }
  func.func @transform_0(%arg0: i32) -> (i32, i32, i32) {
    %c0_i32 = arith.constant 0 : i32
    %c0_i32_0 = arith.constant 0 : i32
    %c0_i32_1 = arith.constant 0 : i32
    return %arg0, %c0_i32, %c0_i32_0 : i32, i32, i32
  }
  func.func @transform_1(%arg0: i32) -> (i32, i32) {
    %c0_i32 = arith.constant 0 : i32
    %c0_i32_0 = arith.constant 0 : i32
    %c0_i32_1 = arith.constant 0 : i32
    return %c0_i32, %c0_i32_0 : i32, i32
  }
  func.func @transform_2(%arg0: i32) -> (i32, i32) {
    %c0_i32 = arith.constant 0 : i32
    %c0_i32_0 = arith.constant 0 : i32
    %c0_i32_1 = arith.constant 0 : i32
    return %c0_i32, %c0_i32_0 : i32, i32
  }
  func.func @transform_3(%arg0: i32) -> (i32, i32) {
    %c0_i32 = arith.constant 0 : i32
    %c0_i32_0 = arith.constant 0 : i32
    %c0_i32_1 = arith.constant 0 : i32
    return %c0_i32, %c0_i32_0 : i32, i32
  }
  func.func @transform_4(%arg0: i32) -> (i32, i32) {
    %c0_i32 = arith.constant 0 : i32
    %c0_i32_0 = arith.constant 0 : i32
    %c0_i32_1 = arith.constant 0 : i32
    return %c0_i32, %c0_i32_0 : i32, i32
  }
  func.func @transform_5(%arg0: i32) -> (i32, i32) {
    %c0_i32 = arith.constant 0 : i32
    %c0_i32_0 = arith.constant 0 : i32
    %c0_i32_1 = arith.constant 0 : i32
    return %c0_i32, %c0_i32_0 : i32, i32
  }
  func.func @transform_6(%arg0: i32) -> (i32, i32) {
    %c0_i32 = arith.constant 0 : i32
    %c0_i32_0 = arith.constant 0 : i32
    %c0_i32_1 = arith.constant 0 : i32
    return %c0_i32, %c0_i32_0 : i32, i32
  }
  func.func @transform_7(%arg0: i32) -> (i32, i32) {
    %c0_i32 = arith.constant 0 : i32
    %c0_i32_0 = arith.constant 0 : i32
    %c0_i32_1 = arith.constant 0 : i32
    return %c0_i32, %c0_i32_0 : i32, i32
  }
  func.func @transform_8(%arg0: i32) -> (i32, i32) {
    %c0_i32 = arith.constant 0 : i32
    %c0_i32_0 = arith.constant 0 : i32
    %c0_i32_1 = arith.constant 0 : i32
    return %c0_i32, %c0_i32_0 : i32, i32
  }
  func.func @transform_9(%arg0: i32) -> (i32, i32) {
    %c0_i32 = arith.constant 0 : i32
    %c0_i32_0 = arith.constant 0 : i32
    %c0_i32_1 = arith.constant 0 : i32
    return %c0_i32, %c0_i32_0 : i32, i32
  }
  func.func @transform_10(%arg0: i32) -> (i32, i32, i32) {
    %c0_i32 = arith.constant 0 : i32
    %c0_i32_0 = arith.constant 0 : i32
    %c0_i32_1 = arith.constant 0 : i32
    return %arg0, %c0_i32, %c0_i32_0 : i32, i32, i32
  }
}

</mosaic_0001>

<llo_original>
// kernel: net_forward.5
$region0: #{net_forward.5}
  #allocation0 [shape = 'u32[]', space=smem, size = 0x4, offset = 0x4, fixed_abs, tag = 'smem constant byte address 0x4 - core index']
  #allocation1 [shape = 'u32[144,128]{1,0:T(1,128)}', space=vmem, size = 0x12000, scoped, tag = 'internal scratch']
  #allocation2 [shape = 'bf16[72,384]{1,0:T(8,128)(2,1)}', space=vmem, size = 0xd800, scoped, tag = 'scratch operand']
  %s0 = inlined_call_operand.vmem [shape: bf16[4,8,422], index: 0, kind: input, shape index: {}]
  %s1 = inlined_call_operand.vmem [shape: bf16[4,72], index: 1, kind: input, shape index: {}]
  %s2 = inlined_call_operand.vmem [shape: f32[4,1], index: 2, kind: input, shape index: {}]
  %s3 = inlined_call_operand.vmem [shape: bf16[4,4,384], index: 3, kind: output, shape index: {}]
  %s4 = sld [smem:[#allocation0]]
  $region45: #{net_forward.5} parent=0
    _
  %s6 = ssub.s32 1, %s4
  %s7 = scalar_select 0, %s6, %s4
  loop: start=0, step=1, limit=6
  $region2: #{net_forward.5} parent=0 // loop_pre_header
    _
  $region3: #{net_forward.5} parent=0 // loop_header
    %s9 = sphi 0, %s13
    %p10 = scmp.ge.s32.totalorder %s9, 6
    %s19 = sphi 0, %s21
    %s22 = sphi 0, %s19
    %s23 = sphi 0, %s22
    %s39 = sphi 0, %s23
    %s43 = sphi 0, %s43
    %s45 = sphi 0, %s43
    %s46 = sphi 0, %s45
    %s60 = sphi 0, %s46
    %s64 = sphi 0, %s64
    %s66 = sphi 0, %s64
    %s67 = sphi 0, %s66
    %s81 = sphi 0, %s67
    %s87 = sphi 0, %s89
    %s90 = sphi 0, %s87
    %s91 = sphi 0, %s90
    %s107 = sphi 0, %s91
  $region4: #{net_forward.5} parent=0 // loop_header_branch
    %12 = sbr.rel (%p10) target = $region8
  $region5: #{net_forward.5} parent=0 // loop_body
    %s14 = ssub.s32 %s9, 1
    %s15 = ssub.s32 %s9, 2
    %s16 = sadd.s32 %s9, 1
    %s17 = ssub.s32 %s9, %s16
    %p18 = scmp.eq.s32.totalorder %s17, 0
    %s20 = sadd.s32 %s19, 1
    %s21 = scalar_select %p18, %s19, %s20
    %p24 = pneg %p18
    %p25 = scmp.eq.s32.totalorder %s9, 3
    %p26 = por %p24, %p25
    %p27 = scmp.ne.s32.totalorder %s19, %s22
    %p28 = scmp.eq.s32.totalorder %s9, 0
    %p29 = por %p27, %p28
    %p30 = scmp.ne.s32.totalorder %s19, %s22
    %p31 = scmp.eq.s32.totalorder %s14, 3
    %p32 = por %p30, %p31
    %p33 = scmp.ne.s32.totalorder %s22, %s23
    %p34 = scmp.eq.s32.totalorder %s14, 0
    %p35 = por %p33, %p34
    %p36 = scmp.ne.s32.totalorder %s22, %s23
    %p37 = scmp.eq.s32.totalorder %s15, 3
    %p38 = por %p36, %p37
    %p40 = scmp.ne.s32.totalorder %s23, %s39
    %p41 = scmp.eq.s32.totalorder %s15, 0
    %p42 = por %p40, %p41
    %s44 = sadd.s32 %s43, 1
    %p47 = scmp.eq.s32.totalorder %s9, 3
    %p48 = scmp.ne.s32.totalorder %s43, %s45
    %p49 = scmp.eq.s32.totalorder %s9, 0
    %p50 = por %p48, %p49
    %p51 = scmp.ne.s32.totalorder %s43, %s45
    %p52 = scmp.eq.s32.totalorder %s14, 3
    %p53 = por %p51, %p52
    %p54 = scmp.ne.s32.totalorder %s45, %s46
    %p55 = scmp.eq.s32.totalorder %s14, 0
    %p56 = por %p54, %p55
    %p57 = scmp.ne.s32.totalorder %s45, %s46
    %p58 = scmp.eq.s32.totalorder %s15, 3
    %p59 = por %p57, %p58
    %p61 = scmp.ne.s32.totalorder %s46, %s60
    %p62 = scmp.eq.s32.totalorder %s15, 0
    %p63 = por %p61, %p62
    %s65 = sadd.s32 %s64, 1
    %p68 = scmp.eq.s32.totalorder %s9, 3
    %p69 = scmp.ne.s32.totalorder %s64, %s66
    %p70 = scmp.eq.s32.totalorder %s9, 0
    %p71 = por %p69, %p70
    %p72 = scmp.ne.s32.totalorder %s64, %s66
    %p73 = scmp.eq.s32.totalorder %s14, 3
    %p74 = por %p72, %p73
    %p75 = scmp.ne.s32.totalorder %s66, %s67
    %p76 = scmp.eq.s32.totalorder %s14, 0
    %p77 = por %p75, %p76
    %p78 = scmp.ne.s32.totalorder %s66, %s67
    %p79 = scmp.eq.s32.totalorder %s15, 3
    %p80 = por %p78, %p79
    %p82 = scmp.ne.s32.totalorder %s67, %s81
    %p83 = scmp.eq.s32.totalorder %s15, 0
    %p84 = por %p82, %p83
    %s85 = ssub.s32 %s9, %s16
    %p86 = scmp.eq.s32.totalorder %s85, 0
    %s88 = sadd.s32 %s87, 1
    %s89 = scalar_select %p86, %s87, %s88
    %p92 = pneg %p86
    %p93 = scmp.eq.s32.totalorder %s9, 3
    %p94 = por %p92, %p93
    %p95 = scmp.ne.s32.totalorder %s87, %s90
    %p96 = scmp.eq.s32.totalorder %s9, 0
    %p97 = por %p95, %p96
    %p98 = scmp.ne.s32.totalorder %s87, %s90
    %p99 = scmp.eq.s32.totalorder %s14, 3
    %p100 = por %p98, %p99
    %p101 = scmp.ne.s32.totalorder %s90, %s91
    %p102 = scmp.eq.s32.totalorder %s14, 0
    %p103 = por %p101, %p102
    %p104 = scmp.ne.s32.totalorder %s90, %s91
    %p105 = scmp.eq.s32.totalorder %s15, 3
    %p106 = por %p104, %p105
    %p108 = scmp.ne.s32.totalorder %s91, %s107
    %p109 = scmp.eq.s32.totalorder %s15, 0
    %p110 = por %p108, %p109
    %p111 = scmp.le.s32.totalorder 1, %s9
    %p112 = scmp.lt.s32.totalorder %s9, 5
    %p113 = pnand %p111, %p112
    %p114 = pneg %p113
    // Predicated region
    $region9: #{net_forward.5} parent=5 // pred_check
      _
    $region10: #{net_forward.5} parent=5 // pred_check_branch
      %116 = sbr.rel (%p113) target = $region12
    $region11: #{net_forward.5} parent=5 // pred_region
      %s117 = ssub.s32 %s9, 1
      // Predicated region
      $region13: #{net_forward.5} parent=11 // pred_check
        %p118 = pneg %p56
      $region14: #{net_forward.5} parent=11 // pred_check_branch
        %120 = sbr.rel (%p118) target = $region16
      $region15: #{net_forward.5} parent=11 // pred_region
        _
      $region16: #{net_forward.5} parent=11 // pred_fallthru
        _
      // Predicated region
      $region17: #{net_forward.5} parent=11 // pred_check
        %p121 = pneg %p77
      $region18: #{net_forward.5} parent=11 // pred_check_branch
        %123 = sbr.rel (%p121) target = $region20
      $region19: #{net_forward.5} parent=11 // pred_region
        _
      $region20: #{net_forward.5} parent=11 // pred_fallthru
        _
    $region12: #{net_forward.5} parent=5 // pred_fallthru
      _
    %p124 = scmp.lt.s32.totalorder %s9, 4
    // Predicated region
    $region21: #{net_forward.5} parent=5 // pred_check
      %p125 = pneg %p124
    $region22: #{net_forward.5} parent=5 // pred_check_branch
      %127 = sbr.rel (%p125) target = $region24
    $region23: #{net_forward.5} parent=5 // pred_region
      // Predicated region
      $region25: #{net_forward.5} parent=23 // pred_check
        %p128 = pneg %p29
      $region26: #{net_forward.5} parent=23 // pred_check_branch
        %130 = sbr.rel (%p128) target = $region28
      $region27: #{net_forward.5} parent=23 // pred_region
        %p131 = scmp.lt.s32.totalorder %s9, 3
        %s132 = scalar_select %p131, %s9, 3
        %s133 = smul.addr %s132, 4
        %s134 = smul.addr %s133, 4
        %s135 = scalar_lea.vmem %s0, %s134
      $region28: #{net_forward.5} parent=23 // pred_fallthru
        _
    $region24: #{net_forward.5} parent=5 // pred_fallthru
      _
    %p136 = scmp.le.s32.totalorder 1, %s9
    %p137 = scmp.lt.s32.totalorder %s9, 5
    %p138 = pnand %p136, %p137
    %p139 = pneg %p138
    // Predicated region
    $region29: #{net_forward.5} parent=5 // pred_check
      _
    $region30: #{net_forward.5} parent=5 // pred_check_branch
      %141 = sbr.rel (%p138) target = $region32
    $region31: #{net_forward.5} parent=5 // pred_region
      %s142 = ssub.s32 %s9, 1
      %p143 = scmp.lt.s32.totalorder %s14, 3
      %s144 = scalar_select %p143, %s14, 3
      %s145 = smul.addr %s144, 4
      %s146 = smul.addr %s145, 4
      %s147 = scalar_lea.vmem %s0, %s146
      %p148 = pneg %p35
      %p149 = pneg %p32
      %p150 = pneg %p56
      %p151 = pneg %p53
      %p152 = pneg %p77
      %p153 = pneg %p74
      %p154 = pneg %p103
      %p155 = pneg %p100
      %p156 = scmp.lt.s32.totalorder %s14, 3
      %s157 = scalar_select %p156, %s14, 3
      %s158 = smul.addr %s157, 3
      %s159 = smul.addr %s158, 2
      %s160 = scalar_lea.vmem %s3, %s159
      %p161 = scmp.lt.s32.totalorder %s14, 3
      %s162 = scalar_select %p161, %s14, 3
      %s163 = smul.addr %s162, 4
      %s164 = smul.addr %s163, 4
      %s165 = scalar_lea.vmem %s0, %s164
      %p166 = scmp.lt.s32.totalorder %s14, 3
      %s167 = scalar_select %p166, %s14, 3
      %s168 = smul.addr %s167, 3
      %s169 = smul.addr %s168, 2
      %s170 = scalar_lea.vmem %s3, %s169
      %v172 = vld [vmem:[%s165] sm:$0xff]
      %v173 = vld [vmem:[%s165 + $0x8] sm:$0xf]
      %174 = vst [vmem:[#allocation2] sm:$0xff] %v172
      %175 = vst [vmem:[#allocation2 + $0x8] sm:$0xf] %v173
      %v176 = vld [vmem:[%s165] sm:$0xff]
      %v177 = vld [vmem:[%s165 + $0x8] sm:$0xff]
      %180 = vrot.lane.b32.xlu0 %v176, 127
      %v181 = vpop.permute.xlu0 %180
      %182 = vrot.lane.b32.xlu0 %v177, 127
      %v183 = vpop.permute.xlu0 %182
      %v184 = vrot.slane %v181, 4
      %v185 = vrot.slane %v183, 4
      %vm186 = vcmask 1043456
      %v187 = vsel %vm186, %v184, %v185
      %vm188 = vcmask 1039360
      %v189 = vsel %vm188, %v181, %v187
      %v190 = vsel %vm188, %v183, %v185
      %193 = vst [vmem:[#allocation2 + $0xc] sm:$0xff] %v189
      %194 = vst [vmem:[#allocation2 + $0x14] sm:$0xf] %v190
      %v195 = vld [vmem:[%s165] sm:$0xff]
      %v196 = vld [vmem:[%s165 + $0x8] sm:$0xff]
      %199 = vrot.lane.b32.xlu0 %v195, 126
      %v200 = vpop.permute.xlu0 %199
      %201 = vrot.lane.b32.xlu0 %v196, 126
      %v202 = vpop.permute.xlu0 %201
      %v203 = vrot.slane %v200, 4
      %v204 = vrot.slane %v202, 4
      %v205 = vsel %vm186, %v203, %v204
      %vm206 = vcmask 1031168
      %v207 = vsel %vm206, %v200, %v205
      %v208 = vsel %vm206, %v202, %v204
      %211 = vst [vmem:[#allocation2 + $0x18] sm:$0xff] %v207
      %212 = vst [vmem:[#allocation2 + $0x20] sm:$0xf] %v208
      %v213 = vld [vmem:[%s165] sm:$0xff]
      %v214 = vld [vmem:[%s165 + $0x8] sm:$0xff]
      %217 = vrot.lane.b32.xlu0 %v213, 110
      %v218 = vpop.permute.xlu0 %217
      %219 = vrot.lane.b32.xlu0 %v214, 110
      %v220 = vpop.permute.xlu0 %219
      %v221 = vrot.slane %v218, 4
      %v222 = vrot.slane %v220, 4
      %v223 = vsel %vm186, %v221, %v222
      %vm224 = vcmask 900096
      %v225 = vsel %vm224, %v218, %v223
      %v226 = vsel %vm224, %v220, %v222
      %229 = vst [vmem:[#allocation2 + $0x24] sm:$0xff] %v225
      %230 = vst [vmem:[#allocation2 + $0x2c] sm:$0xf] %v226
      %v231 = vld [vmem:[%s165] sm:$0xff]
      %v232 = vld [vmem:[%s165 + $0x8] sm:$0xff]
      %235 = vrot.lane.b32.xlu0 %v231, 109
      %v236 = vpop.permute.xlu0 %235
      %237 = vrot.lane.b32.xlu0 %v232, 109
      %v238 = vpop.permute.xlu0 %237
      %v239 = vrot.slane %v236, 4
      %v240 = vrot.slane %v238, 4
      %v241 = vsel %vm186, %v239, %v240
      %vm242 = vcmask 891904
      %v243 = vsel %vm242, %v236, %v241
      %v244 = vsel %vm242, %v238, %v240
      %247 = vst [vmem:[#allocation2 + $0x30] sm:$0xff] %v243
      %248 = vst [vmem:[#allocation2 + $0x38] sm:$0xf] %v244
      %v249 = vld [vmem:[%s165] sm:$0xff]
      %v250 = vld [vmem:[%s165 + $0x8] sm:$0xff]
      %253 = vrot.lane.b32.xlu0 %v249, 108
      %v254 = vpop.permute.xlu0 %253
      %255 = vrot.lane.b32.xlu0 %v250, 108
      %v256 = vpop.permute.xlu0 %255
      %v257 = vrot.slane %v254, 4
      %v258 = vrot.slane %v256, 4
      %v259 = vsel %vm186, %v257, %v258
      %vm260 = vcmask 883712
      %v261 = vsel %vm260, %v254, %v259
      %v262 = vsel %vm260, %v256, %v258
      %265 = vst [vmem:[#allocation2 + $0x3c] sm:$0xff] %v261
      %266 = vst [vmem:[#allocation2 + $0x44] sm:$0xf] %v262
      %v267 = vld [vmem:[%s165] sm:$0xff]
      %v268 = vld [vmem:[%s165 + $0x8] sm:$0xff]
      %271 = vrot.lane.b32.xlu0 %v267, 92
      %v272 = vpop.permute.xlu0 %271
      %273 = vrot.lane.b32.xlu0 %v268, 92
      %v274 = vpop.permute.xlu0 %273
      %v275 = vrot.slane %v272, 4
      %v276 = vrot.slane %v274, 4
      %v277 = vsel %vm186, %v275, %v276
      %vm278 = vcmask 752640
      %v279 = vsel %vm278, %v272, %v277
      %v280 = vsel %vm278, %v274, %v276
      %283 = vst [vmem:[#allocation2 + $0x48] sm:$0xff] %v279
      %284 = vst [vmem:[#allocation2 + $0x50] sm:$0xf] %v280
      %v285 = vld [vmem:[%s165] sm:$0xff]
      %v286 = vld [vmem:[%s165 + $0x8] sm:$0xff]
      %289 = vrot.lane.b32.xlu0 %v285, 91
      %v290 = vpop.permute.xlu0 %289
      %291 = vrot.lane.b32.xlu0 %v286, 91
      %v292 = vpop.permute.xlu0 %291
      %v293 = vrot.slane %v290, 4
      %v294 = vrot.slane %v292, 4
      %v295 = vsel %vm186, %v293, %v294
      %vm296 = vcmask 744448
      %v297 = vsel %vm296, %v290, %v295
      %v298 = vsel %vm296, %v292, %v294
      %301 = vst [vmem:[#allocation2 + $0x54] sm:$0xff] %v297
      %302 = vst [vmem:[#allocation2 + $0x5c] sm:$0xf] %v298
      %v303 = vld [vmem:[%s165] sm:$0xff]
      %v304 = vld [vmem:[%s165 + $0x8] sm:$0xff]
      %307 = vrot.lane.b32.xlu0 %v303, 90
      %v308 = vpop.permute.xlu0 %307
      %309 = vrot.lane.b32.xlu0 %v304, 90
      %v310 = vpop.permute.xlu0 %309
      %v311 = vrot.slane %v308, 4
      %v312 = vrot.slane %v310, 4
      %v313 = vsel %vm186, %v311, %v312
      %vm314 = vcmask 736256
      %v315 = vsel %vm314, %v308, %v313
      %v316 = vsel %vm314, %v310, %v312
      %319 = vst [vmem:[#allocation2 + $0x60] sm:$0xff] %v315
      %320 = vst [vmem:[#allocation2 + $0x68] sm:$0xf] %v316
      %v321 = vld [vmem:[%s1] sm:$0x3]
      %v322 = vld [vmem:[#allocation2] sm:$0xff]
      %v323 = vld [vmem:[#allocation2 + $0x8] sm:$0xf]
      %v324 = vld [vmem:[#allocation2 + $0xc] sm:$0xff]
      %v325 = vld [vmem:[#allocation2 + $0x14] sm:$0xf]
      %v326 = vld [vmem:[#allocation2 + $0x18] sm:$0xff]
      %v327 = vld [vmem:[#allocation2 + $0x20] sm:$0xf]
      %v328 = vld [vmem:[#allocation2 + $0x24] sm:$0xff]
      %v329 = vld [vmem:[#allocation2 + $0x2c] sm:$0xf]
      %v330 = vld [vmem:[#allocation2 + $0x30] sm:$0xff]
      %v331 = vld [vmem:[#allocation2 + $0x38] sm:$0xf]
      %v332 = vld [vmem:[#allocation2 + $0x3c] sm:$0xff]
      %v333 = vld [vmem:[#allocation2 + $0x44] sm:$0xf]
      %v334 = vld [vmem:[#allocation2 + $0x48] sm:$0xff]
      %v335 = vld [vmem:[#allocation2 + $0x50] sm:$0xf]
      %v336 = vld [vmem:[#allocation2 + $0x54] sm:$0xff]
      %v337 = vld [vmem:[#allocation2 + $0x5c] sm:$0xf]
      %v338 = vld [vmem:[#allocation2 + $0x60] sm:$0xff]
      %v339 = vld [vmem:[#allocation2 + $0x68] sm:$0xf]
      %v340 = vld [vmem:[%s2] sm:$0xf]
      %342 = vset.pattern.permute.xlu0 0
      %343 = vperm.xlu0 %342, %v340
      %v344 = vpop.permute.xlu0 %343
      %v364 = vunpack.c.l.b16 %v322
      %v365 = vunpack.c.h.b16 %v322
      %v366 = vunpack.c.l.b16 %v323
      %v367 = vunpack.c.l.b16 %v324
      %v368 = vunpack.c.h.b16 %v324
      %v369 = vunpack.c.l.b16 %v325
      %v370 = vunpack.c.l.b16 %v326
      %v371 = vunpack.c.h.b16 %v326
      %v372 = vunpack.c.l.b16 %v327
      %v373 = vunpack.c.l.b16 %v328
      %v374 = vunpack.c.h.b16 %v328
      %v375 = vunpack.c.l.b16 %v329
      %v376 = vunpack.c.l.b16 %v330
      %v377 = vunpack.c.h.b16 %v330
      %v378 = vunpack.c.l.b16 %v331
      %v379 = vunpack.c.l.b16 %v332
      %v380 = vunpack.c.h.b16 %v332
      %v381 = vunpack.c.l.b16 %v333
      %v382 = vunpack.c.l.b16 %v334
      %v383 = vunpack.c.h.b16 %v334
      %v384 = vunpack.c.l.b16 %v335
      %v385 = vunpack.c.l.b16 %v336
      %v386 = vunpack.c.h.b16 %v336
      %v387 = vunpack.c.l.b16 %v337
      %v388 = vunpack.c.l.b16 %v338
      %v389 = vunpack.c.h.b16 %v338
      %v390 = vunpack.c.l.b16 %v339
      %v391 = vpack.c.b16 %v367, %v364
      %v392 = vpack.c.b16 %v368, %v365
      %v393 = vpack.c.b16 %v369, %v366
      %v394 = vpack.c.b16 %v373, %v370
      %v395 = vpack.c.b16 %v374, %v371
      %v396 = vpack.c.b16 %v375, %v372
      %v397 = vpack.c.b16 %v379, %v376
      %v398 = vpack.c.b16 %v380, %v377
      %v399 = vpack.c.b16 %v381, %v378
      %v400 = vpack.c.b16 %v385, %v382
      %v401 = vpack.c.b16 %v386, %v383
      %v402 = vpack.c.b16 %v387, %v384
      %v403 = vpack.c.b16 %v388, %v388
      %v404 = vpack.c.b16 %v389, %v389
      %v405 = vpack.c.b16 %v390, %v390
      %vm418 = vcmask 588800
      %v420 = vsel %vm418, %v321, 0
      %vm422 = vcmask 1043456
      %v424 = vsel %vm422, %v403, 0
      %v427 = vsel %vm422, %v404, 0
      %v430 = vsel %vm422, %v405, 0
      %432 = vmatprep.subr.bf16.mxu0 %v392
      %433 = vmatpush1.bf16.msra.mxu0 %v391
      %434 = vmatprep.subr.bf16.mxu0 %v395
      %435 = vmatpush1.bf16.msra.mxu0 %v394
      %436 = vmatprep.subr.bf16.mxu0 %v398
      %437 = vmatpush1.bf16.msra.mxu0 %v397
      %438 = vmatprep.subr.bf16.mxu0 %v401
      %439 = vmatpush1.bf16.msra.mxu0 %v400
      %440 = vmatprep.subr.bf16.mxu0 %v427
      %441 = vmatpush1.bf16.msra.mxu0 %v424
      %442 = vmatprep.subr.bf16.mxu0 0
      %443 = vmatpush1.bf16.msra.mxu0 0
      %444 = vmatprep.subr.bf16.mxu0 0
      %445 = vmatpush1.bf16.msra.mxu0 0
      %446 = vmatprep.subr.bf16.mxu0 0
      %447 = vmatpush1.bf16.msra.mxu0 0
      %448 = vmatprep.subr.bf16.mxu0 0
      %449 = vmatpush1.bf16.msra.mxu0 0
      %450 = vmatprep.subr.bf16.mxu0 0
      %451 = vmatpush1.bf16.msra.mxu0 0
      %452 = vmatprep.subr.bf16.mxu0 0
      %453 = vmatpush1.bf16.msra.mxu0 0
      %454 = vmatprep.subr.bf16.mxu0 0
      %455 = vmatpush1.bf16.msra.mxu0 0
      %456 = vmatprep.subr.bf16.mxu0 0
      %457 = vmatpush1.bf16.msra.mxu0 0
      %458 = vmatprep.subr.bf16.mxu0 0
      %459 = vmatpush1.bf16.msra.mxu0 0
      %460 = vmatprep.subr.bf16.mxu0 0
      %461 = vmatpush1.bf16.msra.mxu0 0
      %462 = vmatprep.subr.bf16.mxu0 0
      %463 = vmatpush1.bf16.msra.mxu0 0
      %464 = vmatprep.mubr.bf16.mxu0 0
      %465 = vmatmul.mubr.bf16.gmra.mrb[0].mxu0 %v420
      %v466 = vpop.f32.mrb[0].mxu0
      %v467 = vadd.f32 %v344, %v466
      %v468 = vpop.f32.mrb[0].mxu0
      %v469 = vadd.f32 %v344, %v468
      %v470 = vpop.f32.mrb[0].mxu0
      %v471 = vpop.f32.mrb[0].mxu0
      %472 = vdwg.mxu0
      %473 = vmatprep.subr.bf16.mxu0 0
      %474 = vmatpush1.bf16.msra.mxu0 %v393
      %475 = vmatprep.subr.bf16.mxu0 0
      %476 = vmatpush1.bf16.msra.mxu0 %v396
      %477 = vmatprep.subr.bf16.mxu0 0
      %478 = vmatpush1.bf16.msra.mxu0 %v399
      %479 = vmatprep.subr.bf16.mxu0 0
      %480 = vmatpush1.bf16.msra.mxu0 %v402
      %481 = vmatprep.subr.bf16.mxu0 0
      %482 = vmatpush1.bf16.msra.mxu0 %v430
      %483 = vmatprep.subr.bf16.mxu0 0
      %484 = vmatpush1.bf16.msra.mxu0 0
      %485 = vmatprep.subr.bf16.mxu0 0
      %486 = vmatpush1.bf16.msra.mxu0 0
      %487 = vmatprep.subr.bf16.mxu0 0
      %488 = vmatpush1.bf16.msra.mxu0 0
      %489 = vmatprep.subr.bf16.mxu0 0
      %490 = vmatpush1.bf16.msra.mxu0 0
      %491 = vmatprep.subr.bf16.mxu0 0
      %492 = vmatpush1.bf16.msra.mxu0 0
      %493 = vmatprep.subr.bf16.mxu0 0
      %494 = vmatpush1.bf16.msra.mxu0 0
      %495 = vmatprep.subr.bf16.mxu0 0
      %496 = vmatpush1.bf16.msra.mxu0 0
      %497 = vmatprep.subr.bf16.mxu0 0
      %498 = vmatpush1.bf16.msra.mxu0 0
      %499 = vmatprep.subr.bf16.mxu0 0
      %500 = vmatpush1.bf16.msra.mxu0 0
      %501 = vmatprep.subr.bf16.mxu0 0
      %502 = vmatpush1.bf16.msra.mxu0 0
      %503 = vmatprep.subr.bf16.mxu0 0
      %504 = vmatpush1.bf16.msra.mxu0 0
      %505 = vmatprep.mubr.bf16.mxu0 0
      %506 = vmatmul.mubr.bf16.gmra.mrb[0].mxu0 %v420
      %v507 = vpop.f32.mrb[0].mxu0
      %v508 = vadd.f32 %v344, %v507
      %v509 = vpop.f32.mrb[0].mxu0
      %v510 = vpop.f32.mrb[0].mxu0
      %v511 = vpop.f32.mrb[0].mxu0
      %512 = vdwg.mxu0
      %v513 = vmax.f32 %v467, 0.0
      %v514 = vmax.f32 %v469, 0.0
      %v515 = vmax.f32 %v508, 0.0
      %v516 = vpack.c.bf16 %v513, %v513
      %v517 = vpack.c.bf16 %v514, %v514
      %v518 = vpack.c.bf16 %v515, %v515
      %v522 = vcombine.low %v516, %v517
      %v524 = vunpack.c.l.s4 1983009808
      %v525 = vunpack.c.0.s8 %v524
      %v526 = vlaneseq
      %v527 = vshrl.u32 %v526, 7
      %v528 = vsub.s32 %v525, %v527
      %v529 = vrot.slane %v522, %v528
      %v531 = vunpack.c.l.s4 1983009808
      %v532 = vunpack.c.0.s8 %v531
      %v533 = vlaneseq
      %v534 = vshrl.u32 %v533, 7
      %v535 = vsub.s32 %v532, %v534
      %v536 = vrot.slane %v518, %v535
      %v537 = vcombine.low %v529, %v536
      %539 = vst [vmem:[%s170] sm:$0x3f] %v537
      %p540 = scmp.lt.s32.totalorder %s14, 3
      %s541 = scalar_select %p540, %s14, 3
      %s542 = smul.addr %s541, 3
      %s543 = smul.addr %s542, 2
      %s544 = scalar_lea.vmem %s3, %s543
      // Predicated region
      $region33: #{net_forward.5} parent=31 // pred_check
        %p545 = pneg %p100
      $region34: #{net_forward.5} parent=31 // pred_check_branch
        %547 = sbr.rel (%p545) target = $region36
      $region35: #{net_forward.5} parent=31 // pred_region
        _
      $region36: #{net_forward.5} parent=31 // pred_fallthru
        _
    $region32: #{net_forward.5} parent=5 // pred_fallthru
      _
    %p548 = scmp.le.s32.totalorder 2, %s9
    // Predicated region
    $region37: #{net_forward.5} parent=5 // pred_check
      %p549 = pneg %p548
    $region38: #{net_forward.5} parent=5 // pred_check_branch
      %551 = sbr.rel (%p549) target = $region40
    $region39: #{net_forward.5} parent=5 // pred_region
      %s552 = ssub.s32 %s9, 2
      // Predicated region
      $region41: #{net_forward.5} parent=39 // pred_check
        %p553 = pneg %p106
      $region42: #{net_forward.5} parent=39 // pred_check_branch
        %555 = sbr.rel (%p553) target = $region44
      $region43: #{net_forward.5} parent=39 // pred_region
        %p556 = scmp.lt.s32.totalorder %s15, 3
        %s557 = scalar_select %p556, %s15, 3
        %s558 = smul.addr %s557, 3
        %s559 = smul.addr %s558, 2
        %s560 = scalar_lea.vmem %s3, %s559
      $region44: #{net_forward.5} parent=39 // pred_fallthru
        _
    $region40: #{net_forward.5} parent=5 // pred_fallthru
      _
  $region6: #{net_forward.5} parent=0 // loop_footer
    %s13 = sadd.s32 1, %s9
  $region7: #{net_forward.5} parent=0 // loop_footer_branch
    %8 = sbr.rel target = $region3
  $region8: #{net_forward.5} parent=0 // loop_exit
    _

// kernel: net_forward.6
$region0: #{net_forward.6}
  #allocation0 [shape = 'u32[]', space=smem, size = 0x4, offset = 0x4, fixed_abs, tag = 'smem constant byte address 0x4 - core index']
  #allocation1 [shape = 'u32[144,128]{1,0:T(1,128)}', space=vmem, size = 0x12000, scoped, tag = 'internal scratch']
  #allocation2 [shape = 'bf16[72,150]{1,0:T(8,128)(2,1)}', space=vmem, size = 0x9000, scoped, tag = 'scratch operand']
  #allocation3 [shape = 'bf16[72,128]{1,0:T(8,128)(2,1)}', space=vmem, size = 0x4800, scoped, tag = 'scratch operand']
  #allocation4 [shape = 'bf16[8,150]{1,0:T(8,128)(2,1)}', space=vmem, size = 0x1000, scoped, tag = 'scratch operand']
  %s0 = inlined_call_operand.vmem [shape: bf16[4,4,8,162], index: 0, kind: input, shape index: {}]
  %s1 = inlined_call_operand.vmem [shape: bf16[8,72], index: 1, kind: input, shape index: {}]
  %s2 = inlined_call_operand.vmem [shape: f32[8,1], index: 2, kind: input, shape index: {}]
  %s3 = inlined_call_operand.vmem [shape: bf16[8,72], index: 3, kind: input, shape index: {}]
  %s4 = inlined_call_operand.vmem [shape: f32[8,1], index: 4, kind: input, shape index: {}]
  %s5 = inlined_call_operand.vmem [shape: f32[1,150], index: 5, kind: input, shape index: {}]
  %s6 = inlined_call_operand.vmem [shape: bf16[4,8,128], index: 6, kind: output, shape index: {}]
  %s7 = sld [smem:[#allocation0]]
  $region57: #{net_forward.6} parent=0
    _
  %s9 = ssub.s32 1, %s7
  %s10 = scalar_select 0, %s9, %s7
  loop: start=0, step=1, limit=6
  $region2: #{net_forward.6} parent=0 // loop_pre_header
    _
  $region3: #{net_forward.6} parent=0 // loop_header
    %s12 = sphi 0, %s16
    %p13 = scmp.ge.s32.totalorder %s12, 6
    %s22 = sphi 0, %s24
    %s25 = sphi 0, %s22
    %s26 = sphi 0, %s25
    %s42 = sphi 0, %s26
    %s46 = sphi 0, %s46
    %s48 = sphi 0, %s46
    %s49 = sphi 0, %s48
    %s63 = sphi 0, %s49
    %s67 = sphi 0, %s67
    %s69 = sphi 0, %s67
    %s70 = sphi 0, %s69
    %s84 = sphi 0, %s70
    %s88 = sphi 0, %s88
    %s90 = sphi 0, %s88
    %s91 = sphi 0, %s90
    %s105 = sphi 0, %s91
    %s109 = sphi 0, %s109
    %s111 = sphi 0, %s109
    %s112 = sphi 0, %s111
    %s126 = sphi 0, %s112
    %s130 = sphi 0, %s130
    %s132 = sphi 0, %s130
    %s133 = sphi 0, %s132
    %s147 = sphi 0, %s133
    %s153 = sphi 0, %s155
    %s156 = sphi 0, %s153
    %s157 = sphi 0, %s156
    %s173 = sphi 0, %s157
  $region4: #{net_forward.6} parent=0 // loop_header_branch
    %15 = sbr.rel (%p13) target = $region8
  $region5: #{net_forward.6} parent=0 // loop_body
    %s17 = ssub.s32 %s12, 1
    %s18 = ssub.s32 %s12, 2
    %s19 = sadd.s32 %s12, 1
    %s20 = ssub.s32 %s12, %s19
    %p21 = scmp.eq.s32.totalorder %s20, 0
    %s23 = sadd.s32 %s22, 1
    %s24 = scalar_select %p21, %s22, %s23
    %p27 = pneg %p21
    %p28 = scmp.eq.s32.totalorder %s12, 3
    %p29 = por %p27, %p28
    %p30 = scmp.ne.s32.totalorder %s22, %s25
    %p31 = scmp.eq.s32.totalorder %s12, 0
    %p32 = por %p30, %p31
    %p33 = scmp.ne.s32.totalorder %s22, %s25
    %p34 = scmp.eq.s32.totalorder %s17, 3
    %p35 = por %p33, %p34
    %p36 = scmp.ne.s32.totalorder %s25, %s26
    %p37 = scmp.eq.s32.totalorder %s17, 0
    %p38 = por %p36, %p37
    %p39 = scmp.ne.s32.totalorder %s25, %s26
    %p40 = scmp.eq.s32.totalorder %s18, 3
    %p41 = por %p39, %p40
    %p43 = scmp.ne.s32.totalorder %s26, %s42
    %p44 = scmp.eq.s32.totalorder %s18, 0
    %p45 = por %p43, %p44
    %s47 = sadd.s32 %s46, 1
    %p50 = scmp.eq.s32.totalorder %s12, 3
    %p51 = scmp.ne.s32.totalorder %s46, %s48
    %p52 = scmp.eq.s32.totalorder %s12, 0
    %p53 = por %p51, %p52
    %p54 = scmp.ne.s32.totalorder %s46, %s48
    %p55 = scmp.eq.s32.totalorder %s17, 3
    %p56 = por %p54, %p55
    %p57 = scmp.ne.s32.totalorder %s48, %s49
    %p58 = scmp.eq.s32.totalorder %s17, 0
    %p59 = por %p57, %p58
    %p60 = scmp.ne.s32.totalorder %s48, %s49
    %p61 = scmp.eq.s32.totalorder %s18, 3
    %p62 = por %p60, %p61
    %p64 = scmp.ne.s32.totalorder %s49, %s63
    %p65 = scmp.eq.s32.totalorder %s18, 0
    %p66 = por %p64, %p65
    %s68 = sadd.s32 %s67, 1
    %p71 = scmp.eq.s32.totalorder %s12, 3
    %p72 = scmp.ne.s32.totalorder %s67, %s69
    %p73 = scmp.eq.s32.totalorder %s12, 0
    %p74 = por %p72, %p73
    %p75 = scmp.ne.s32.totalorder %s67, %s69
    %p76 = scmp.eq.s32.totalorder %s17, 3
    %p77 = por %p75, %p76
    %p78 = scmp.ne.s32.totalorder %s69, %s70
    %p79 = scmp.eq.s32.totalorder %s17, 0
    %p80 = por %p78, %p79
    %p81 = scmp.ne.s32.totalorder %s69, %s70
    %p82 = scmp.eq.s32.totalorder %s18, 3
    %p83 = por %p81, %p82
    %p85 = scmp.ne.s32.totalorder %s70, %s84
    %p86 = scmp.eq.s32.totalorder %s18, 0
    %p87 = por %p85, %p86
    %s89 = sadd.s32 %s88, 1
    %p92 = scmp.eq.s32.totalorder %s12, 3
    %p93 = scmp.ne.s32.totalorder %s88, %s90
    %p94 = scmp.eq.s32.totalorder %s12, 0
    %p95 = por %p93, %p94
    %p96 = scmp.ne.s32.totalorder %s88, %s90
    %p97 = scmp.eq.s32.totalorder %s17, 3
    %p98 = por %p96, %p97
    %p99 = scmp.ne.s32.totalorder %s90, %s91
    %p100 = scmp.eq.s32.totalorder %s17, 0
    %p101 = por %p99, %p100
    %p102 = scmp.ne.s32.totalorder %s90, %s91
    %p103 = scmp.eq.s32.totalorder %s18, 3
    %p104 = por %p102, %p103
    %p106 = scmp.ne.s32.totalorder %s91, %s105
    %p107 = scmp.eq.s32.totalorder %s18, 0
    %p108 = por %p106, %p107
    %s110 = sadd.s32 %s109, 1
    %p113 = scmp.eq.s32.totalorder %s12, 3
    %p114 = scmp.ne.s32.totalorder %s109, %s111
    %p115 = scmp.eq.s32.totalorder %s12, 0
    %p116 = por %p114, %p115
    %p117 = scmp.ne.s32.totalorder %s109, %s111
    %p118 = scmp.eq.s32.totalorder %s17, 3
    %p119 = por %p117, %p118
    %p120 = scmp.ne.s32.totalorder %s111, %s112
    %p121 = scmp.eq.s32.totalorder %s17, 0
    %p122 = por %p120, %p121
    %p123 = scmp.ne.s32.totalorder %s111, %s112
    %p124 = scmp.eq.s32.totalorder %s18, 3
    %p125 = por %p123, %p124
    %p127 = scmp.ne.s32.totalorder %s112, %s126
    %p128 = scmp.eq.s32.totalorder %s18, 0
    %p129 = por %p127, %p128
    %s131 = sadd.s32 %s130, 1
    %p134 = scmp.eq.s32.totalorder %s12, 3
    %p135 = scmp.ne.s32.totalorder %s130, %s132
    %p136 = scmp.eq.s32.totalorder %s12, 0
    %p137 = por %p135, %p136
    %p138 = scmp.ne.s32.totalorder %s130, %s132
    %p139 = scmp.eq.s32.totalorder %s17, 3
    %p140 = por %p138, %p139
    %p141 = scmp.ne.s32.totalorder %s132, %s133
    %p142 = scmp.eq.s32.totalorder %s17, 0
    %p143 = por %p141, %p142
    %p144 = scmp.ne.s32.totalorder %s132, %s133
    %p145 = scmp.eq.s32.totalorder %s18, 3
    %p146 = por %p144, %p145
    %p148 = scmp.ne.s32.totalorder %s133, %s147
    %p149 = scmp.eq.s32.totalorder %s18, 0
    %p150 = por %p148, %p149
    %s151 = ssub.s32 %s12, %s19
    %p152 = scmp.eq.s32.totalorder %s151, 0
    %s154 = sadd.s32 %s153, 1
    %s155 = scalar_select %p152, %s153, %s154
    %p158 = pneg %p152
    %p159 = scmp.eq.s32.totalorder %s12, 3
    %p160 = por %p158, %p159
    %p161 = scmp.ne.s32.totalorder %s153, %s156
    %p162 = scmp.eq.s32.totalorder %s12, 0
    %p163 = por %p161, %p162
    %p164 = scmp.ne.s32.totalorder %s153, %s156
    %p165 = scmp.eq.s32.totalorder %s17, 3
    %p166 = por %p164, %p165
    %p167 = scmp.ne.s32.totalorder %s156, %s157
    %p168 = scmp.eq.s32.totalorder %s17, 0
    %p169 = por %p167, %p168
    %p170 = scmp.ne.s32.totalorder %s156, %s157
    %p171 = scmp.eq.s32.totalorder %s18, 3
    %p172 = por %p170, %p171
    %p174 = scmp.ne.s32.totalorder %s157, %s173
    %p175 = scmp.eq.s32.totalorder %s18, 0
    %p176 = por %p174, %p175
    %p177 = scmp.le.s32.totalorder 1, %s12
    %p178 = scmp.lt.s32.totalorder %s12, 5
    %p179 = pnand %p177, %p178
    %p180 = pneg %p179
    // Predicated region
    $region9: #{net_forward.6} parent=5 // pred_check
      _
    $region10: #{net_forward.6} parent=5 // pred_check_branch
      %182 = sbr.rel (%p179) target = $region12
    $region11: #{net_forward.6} parent=5 // pred_region
      %s183 = ssub.s32 %s12, 1
      // Predicated region
      $region13: #{net_forward.6} parent=11 // pred_check
        %p184 = pneg %p59
      $region14: #{net_forward.6} parent=11 // pred_check_branch
        %186 = sbr.rel (%p184) target = $region16
      $region15: #{net_forward.6} parent=11 // pred_region
        _
      $region16: #{net_forward.6} parent=11 // pred_fallthru
        _
      // Predicated region
      $region17: #{net_forward.6} parent=11 // pred_check
        %p187 = pneg %p80
      $region18: #{net_forward.6} parent=11 // pred_check_branch
        %189 = sbr.rel (%p187) target = $region20
      $region19: #{net_forward.6} parent=11 // pred_region
        _
      $region20: #{net_forward.6} parent=11 // pred_fallthru
        _
      // Predicated region
      $region21: #{net_forward.6} parent=11 // pred_check
        %p190 = pneg %p101
      $region22: #{net_forward.6} parent=11 // pred_check_branch
        %192 = sbr.rel (%p190) target = $region24
      $region23: #{net_forward.6} parent=11 // pred_region
        _
      $region24: #{net_forward.6} parent=11 // pred_fallthru
        _
      // Predicated region
      $region25: #{net_forward.6} parent=11 // pred_check
        %p193 = pneg %p122
      $region26: #{net_forward.6} parent=11 // pred_check_branch
        %195 = sbr.rel (%p193) target = $region28
      $region27: #{net_forward.6} parent=11 // pred_region
        _
      $region28: #{net_forward.6} parent=11 // pred_fallthru
        _
      // Predicated region
      $region29: #{net_forward.6} parent=11 // pred_check
        %p196 = pneg %p143
      $region30: #{net_forward.6} parent=11 // pred_check_branch
        %198 = sbr.rel (%p196) target = $region32
      $region31: #{net_forward.6} parent=11 // pred_region
        _
      $region32: #{net_forward.6} parent=11 // pred_fallthru
        _
    $region12: #{net_forward.6} parent=5 // pred_fallthru
      _
    %p199 = scmp.lt.s32.totalorder %s12, 4
    // Predicated region
    $region33: #{net_forward.6} parent=5 // pred_check
      %p200 = pneg %p199
    $region34: #{net_forward.6} parent=5 // pred_check_branch
      %202 = sbr.rel (%p200) target = $region36
    $region35: #{net_forward.6} parent=5 // pred_region
      // Predicated region
      $region37: #{net_forward.6} parent=35 // pred_check
        %p203 = pneg %p32
      $region38: #{net_forward.6} parent=35 // pred_check_branch
        %205 = sbr.rel (%p203) target = $region40
      $region39: #{net_forward.6} parent=35 // pred_region
        %p206 = scmp.lt.s32.totalorder %s12, 3
        %s207 = scalar_select %p206, %s12, 3
        %s208 = smul.addr %s207, 8
        %s209 = smul.addr %s208, 4
        %s210 = scalar_lea.vmem %s0, %s209
      $region40: #{net_forward.6} parent=35 // pred_fallthru
        _
    $region36: #{net_forward.6} parent=5 // pred_fallthru
      _
    %p211 = scmp.le.s32.totalorder 1, %s12
    %p212 = scmp.lt.s32.totalorder %s12, 5
    %p213 = pnand %p211, %p212
    %p214 = pneg %p213
    // Predicated region
    $region41: #{net_forward.6} parent=5 // pred_check
      _
    $region42: #{net_forward.6} parent=5 // pred_check_branch
      %216 = sbr.rel (%p213) target = $region44
    $region43: #{net_forward.6} parent=5 // pred_region
      %s217 = ssub.s32 %s12, 1
      %p218 = scmp.lt.s32.totalorder %s17, 3
      %s219 = scalar_select %p218, %s17, 3
      %s220 = smul.addr %s219, 8
      %s221 = smul.addr %s220, 4
      %s222 = scalar_lea.vmem %s0, %s221
      %p223 = pneg %p38
      %p224 = pneg %p35
      %p225 = pneg %p59
      %p226 = pneg %p56
      %p227 = pneg %p80
      %p228 = pneg %p77
      %p229 = pneg %p101
      %p230 = pneg %p98
      %p231 = pneg %p122
      %p232 = pneg %p119
      %p233 = pneg %p143
      %p234 = pneg %p140
      %p235 = pneg %p169
      %p236 = pneg %p166
      %p237 = scmp.lt.s32.totalorder %s17, 3
      %s238 = scalar_select %p237, %s17, 3
      %s239 = smul.addr %s238, 4
      %s240 = scalar_lea.vmem %s6, %s239
      %p241 = scmp.lt.s32.totalorder %s17, 3
      %s242 = scalar_select %p241, %s17, 3
      %s243 = smul.addr %s242, 8
      %s244 = smul.addr %s243, 4
      %s245 = scalar_lea.vmem %s0, %s244
      %p246 = scmp.lt.s32.totalorder %s17, 3
      %s247 = scalar_select %p246, %s17, 3
      %s248 = smul.addr %s247, 4
      %s249 = scalar_lea.vmem %s6, %s248
      %v251 = vld [vmem:[%s245] sm:$0xff]
      %vm252 = vcmask 1043456
      %vm253 = vcmask 179204
      %vm254 = vmor %vm253, %vm252
      %255 = vst.msk [vmem:[#allocation2] sm:$0xff] %vm254, %v251
      %s256 = scalar_lea.vmem %s245, 8
      %v257 = vld [vmem:[%s256] sm:$0xff]
      %258 = vst.msk [vmem:[#allocation2 + $0x8] sm:$0xff] %vm254, %v257
      %v259 = vld [vmem:[%s245] sm:$0xff]
      %261 = vrot.lane.b32.xlu0 %v259, 127
      %v262 = vpop.permute.xlu0 %261
      %v263 = vrot.slane %v262, 4
      %vm264 = vcmask 1039360
      %v265 = vsel %vm264, %v262, %v263
      %267 = vst.msk [vmem:[#allocation2 + $0x10] sm:$0xff] %vm254, %v265
      %s268 = scalar_lea.vmem %s245, 16
      %v269 = vld [vmem:[%s268] sm:$0xff]
      %270 = vst.msk [vmem:[#allocation2 + $0x18] sm:$0xff] %vm254, %v269
      %s271 = scalar_lea.vmem %s245, 24
      %v272 = vld [vmem:[%s271] sm:$0xff]
      %273 = vst.msk [vmem:[#allocation2 + $0x20] sm:$0xff] %vm254, %v272
      %v274 = vld [vmem:[%s268] sm:$0xff]
      %276 = vrot.lane.b32.xlu0 %v274, 127
      %v277 = vpop.permute.xlu0 %276
      %v278 = vrot.slane %v277, 4
      %v279 = vsel %vm264, %v277, %v278
      %281 = vst.msk [vmem:[#allocation2 + $0x28] sm:$0xff] %vm254, %v279
      %v282 = vld [vmem:[%s245] sm:$0xff]
      %284 = vrot.lane.b32.xlu0 %v282, 118
      %v285 = vpop.permute.xlu0 %284
      %v286 = vrot.slane %v285, 4
      %vm287 = vcmask 965632
      %v288 = vsel %vm287, %v285, %v286
      %290 = vst.msk [vmem:[#allocation2 + $0x30] sm:$0xff] %vm254, %v288
      %v291 = vld [vmem:[%s256] sm:$0xff]
      %293 = vrot.lane.b32.xlu0 %v291, 118
      %v294 = vpop.permute.xlu0 %293
      %v295 = vrot.slane %v294, 4
      %v296 = vsel %vm287, %v294, %v295
      %298 = vst.msk [vmem:[#allocation2 + $0x38] sm:$0xff] %vm254, %v296
      %v299 = vld [vmem:[%s245] sm:$0xff]
      %301 = vrot.lane.b32.xlu0 %v299, 117
      %v302 = vpop.permute.xlu0 %301
      %v303 = vrot.slane %v302, 4
      %vm304 = vcmask 957440
      %v305 = vsel %vm304, %v302, %v303
      %307 = vst.msk [vmem:[#allocation2 + $0x40] sm:$0xff] %vm254, %v305
      %v308 = vld [vmem:[%s1] sm:$0xf]
      %v309 = vld [vmem:[#allocation2] sm:$0xff]
      %v310 = vld [vmem:[#allocation2 + $0x8] sm:$0xff]
      %v311 = vld [vmem:[#allocation2 + $0x10] sm:$0xff]
      %v312 = vld [vmem:[#allocation2 + $0x18] sm:$0xff]
      %v313 = vld [vmem:[#allocation2 + $0x20] sm:$0xff]
      %v314 = vld [vmem:[#allocation2 + $0x28] sm:$0xff]
      %v315 = vld [vmem:[#allocation2 + $0x30] sm:$0xff]
      %v316 = vld [vmem:[#allocation2 + $0x38] sm:$0xff]
      %v317 = vld [vmem:[#allocation2 + $0x40] sm:$0xff]
      %v318 = vld [vmem:[%s2] sm:$0xff]
      %320 = vset.pattern.permute.xlu0 0
      %321 = vperm.xlu0 %320, %v318
      %v322 = vpop.permute.xlu0 %321
      %v333 = vunpack.c.l.b16 %v309
      %v334 = vunpack.c.h.b16 %v309
      %v335 = vunpack.c.l.b16 %v310
      %v336 = vunpack.c.h.b16 %v310
      %v337 = vunpack.c.l.b16 %v311
      %v338 = vunpack.c.h.b16 %v311
      %v339 = vunpack.c.l.b16 %v312
      %v340 = vunpack.c.h.b16 %v312
      %v341 = vunpack.c.l.b16 %v313
      %v342 = vunpack.c.h.b16 %v313
      %v343 = vunpack.c.l.b16 %v314
      %v344 = vunpack.c.h.b16 %v314
      %v345 = vunpack.c.l.b16 %v315
      %v346 = vunpack.c.h.b16 %v315
      %v347 = vunpack.c.l.b16 %v316
      %v348 = vunpack.c.h.b16 %v316
      %v349 = vunpack.c.l.b16 %v317
      %v350 = vunpack.c.h.b16 %v317
      %v351 = vpack.c.b16 %v335, %v333
      %v352 = vpack.c.b16 %v336, %v334
      %v353 = vpack.c.b16 %v339, %v337
      %v354 = vpack.c.b16 %v340, %v338
      %v355 = vpack.c.b16 %v343, %v341
      %v356 = vpack.c.b16 %v344, %v342
      %v357 = vpack.c.b16 %v347, %v345
      %v358 = vpack.c.b16 %v348, %v346
      %v359 = vpack.c.b16 %v349, %v349
      %v360 = vpack.c.b16 %v350, %v350
      %vm369 = vcmask 588800
      %v371 = vsel %vm369, %v308, 0
      %v374 = vsel %vm252, %v359, 0
      %v377 = vsel %vm252, %v360, 0
      %379 = vmatprep.subr.bf16.mxu0 %v352
      %380 = vmatpush1.bf16.msra.mxu0 %v351
      %381 = vmatprep.subr.bf16.mxu0 %v354
      %382 = vmatpush1.bf16.msra.mxu0 %v353
      %383 = vmatprep.subr.bf16.mxu0 %v356
      %384 = vmatpush1.bf16.msra.mxu0 %v355
      %385 = vmatprep.subr.bf16.mxu0 %v358
      %386 = vmatpush1.bf16.msra.mxu0 %v357
      %387 = vmatprep.subr.bf16.mxu0 %v377
      %388 = vmatpush1.bf16.msra.mxu0 %v374
      %389 = vmatprep.subr.bf16.mxu0 0
      %390 = vmatpush1.bf16.msra.mxu0 0
      %391 = vmatprep.subr.bf16.mxu0 0
      %392 = vmatpush1.bf16.msra.mxu0 0
      %393 = vmatprep.subr.bf16.mxu0 0
      %394 = vmatpush1.bf16.msra.mxu0 0
      %395 = vmatprep.subr.bf16.mxu0 0
      %396 = vmatpush1.bf16.msra.mxu0 0
      %397 = vmatprep.subr.bf16.mxu0 0
      %398 = vmatpush1.bf16.msra.mxu0 0
      %399 = vmatprep.subr.bf16.mxu0 0
      %400 = vmatpush1.bf16.msra.mxu0 0
      %401 = vmatprep.subr.bf16.mxu0 0
      %402 = vmatpush1.bf16.msra.mxu0 0
      %403 = vmatprep.subr.bf16.mxu0 0
      %404 = vmatpush1.bf16.msra.mxu0 0
      %405 = vmatprep.subr.bf16.mxu0 0
      %406 = vmatpush1.bf16.msra.mxu0 0
      %407 = vmatprep.subr.bf16.mxu0 0
      %408 = vmatpush1.bf16.msra.mxu0 0
      %409 = vmatprep.subr.bf16.mxu0 0
      %410 = vmatpush1.bf16.msra.mxu0 0
      %411 = vmatprep.mubr.bf16.mxu0 0
      %412 = vmatmul.mubr.bf16.gmra.mrb[0].mxu0 %v371
      %v413 = vpop.f32.mrb[0].mxu0
      %v414 = vadd.f32 %v322, %v413
      %v415 = vpop.f32.mrb[0].mxu0
      %v416 = vadd.f32 %v322, %v415
      %v417 = vpop.f32.mrb[0].mxu0
      %v418 = vpop.f32.mrb[0].mxu0
      %419 = vdwg.mxu0
      %v420 = vmax.f32 %v414, 0.0
      %v421 = vmax.f32 %v416, 0.0
      %v422 = vld [vmem:[%s5] sm:$0x3]
      %v424 = vlaneseq
      %v425 = vshrl.u32 %v424, 7
      %v426 = vsub.s32 0, %v425
      %v427 = vrot.slane %v422, %v426
      %v428 = vlaneseq
      %v429 = vshrl.u32 %v428, 7
      %v430 = vsub.s32 1, %v429
      %v431 = vrot.slane %v422, %v430
      %v434 = vmul.f32 %v420, %v427
      %v435 = vmul.f32 %v421, %v431
      %v436 = vpack.c.bf16 %v434, %v434
      %v437 = vpack.c.bf16 %v435, %v435
      %v440 = vunpack.c.l.b16 %v436
      %v441 = vunpack.c.l.b16 %v437
      %v442 = vpack.c.b16 %v441, %v440
      %444 = vst.msk [vmem:[#allocation4] sm:$0xff] %vm254, %v442
      %v445 = vld [vmem:[#allocation4] sm:$0xf]
      %446 = vst [vmem:[#allocation3] sm:$0xf] %v445
      %v447 = vld [vmem:[#allocation4] sm:$0xff]
      %449 = vrot.lane.b32.xlu0 %v447, 127
      %v450 = vpop.permute.xlu0 %449
      %v451 = vrot.slane %v450, 4
      %v452 = vsel %vm264, %v450, %v451
      %454 = vst [vmem:[#allocation3 + $0x4] sm:$0xf] %v452
      %v455 = vld [vmem:[#allocation4] sm:$0xff]
      %457 = vrot.lane.b32.xlu0 %v455, 126
      %v458 = vpop.permute.xlu0 %457
      %v459 = vrot.slane %v458, 4
      %vm460 = vcmask 1031168
      %v461 = vsel %vm460, %v458, %v459
      %463 = vst [vmem:[#allocation3 + $0x8] sm:$0xf] %v461
      %v464 = vld [vmem:[#allocation4] sm:$0xff]
      %466 = vrot.lane.b32.xlu0 %v464, 118
      %v467 = vpop.permute.xlu0 %466
      %v468 = vrot.slane %v467, 4
      %v469 = vsel %vm287, %v467, %v468
      %471 = vst [vmem:[#allocation3 + $0xc] sm:$0xf] %v469
      %v472 = vld [vmem:[#allocation4] sm:$0xff]
      %474 = vrot.lane.b32.xlu0 %v472, 117
      %v475 = vpop.permute.xlu0 %474
      %v476 = vrot.slane %v475, 4
      %v477 = vsel %vm304, %v475, %v476
      %479 = vst [vmem:[#allocation3 + $0x10] sm:$0xf] %v477
      %v480 = vld [vmem:[#allocation4] sm:$0xff]
      %482 = vrot.lane.b32.xlu0 %v480, 116
      %v483 = vpop.permute.xlu0 %482
      %v484 = vrot.slane %v483, 4
      %vm485 = vcmask 949248
      %v486 = vsel %vm485, %v483, %v484
      %488 = vst [vmem:[#allocation3 + $0x14] sm:$0xf] %v486
      %v489 = vld [vmem:[#allocation4] sm:$0xff]
      %491 = vrot.lane.b32.xlu0 %v489, 108
      %v492 = vpop.permute.xlu0 %491
      %v493 = vrot.slane %v492, 4
      %vm494 = vcmask 883712
      %v495 = vsel %vm494, %v492, %v493
      %497 = vst [vmem:[#allocation3 + $0x18] sm:$0xf] %v495
      %v498 = vld [vmem:[#allocation4] sm:$0xff]
      %500 = vrot.lane.b32.xlu0 %v498, 107
      %v501 = vpop.permute.xlu0 %500
      %v502 = vrot.slane %v501, 4
      %vm503 = vcmask 875520
      %v504 = vsel %vm503, %v501, %v502
      %506 = vst [vmem:[#allocation3 + $0x1c] sm:$0xf] %v504
      %v507 = vld [vmem:[#allocation4] sm:$0xff]
      %509 = vrot.lane.b32.xlu0 %v507, 106
      %v510 = vpop.permute.xlu0 %509
      %v511 = vrot.slane %v510, 4
      %vm512 = vcmask 867328
      %v513 = vsel %vm512, %v510, %v511
      %515 = vst [vmem:[#allocation3 + $0x20] sm:$0xf] %v513
      %v516 = vld [vmem:[%s3] sm:$0xf]
      %v517 = vld [vmem:[#allocation3] sm:$0xf]
      %v518 = vld [vmem:[#allocation3 + $0x4] sm:$0xf]
      %v519 = vld [vmem:[#allocation3 + $0x8] sm:$0xf]
      %v520 = vld [vmem:[#allocation3 + $0xc] sm:$0xf]
      %v521 = vld [vmem:[#allocation3 + $0x10] sm:$0xf]
      %v522 = vld [vmem:[#allocation3 + $0x14] sm:$0xf]
      %v523 = vld [vmem:[#allocation3 + $0x18] sm:$0xf]
      %v524 = vld [vmem:[#allocation3 + $0x1c] sm:$0xf]
      %v525 = vld [vmem:[#allocation3 + $0x20] sm:$0xf]
      %v526 = vld [vmem:[%s4] sm:$0xff]
      %528 = vset.pattern.permute.xlu0 0
      %529 = vperm.xlu0 %528, %v526
      %v530 = vpop.permute.xlu0 %529
      %v541 = vunpack.c.l.b16 %v517
      %v542 = vunpack.c.l.b16 %v518
      %v543 = vunpack.c.l.b16 %v519
      %v544 = vunpack.c.l.b16 %v520
      %v545 = vunpack.c.l.b16 %v521
      %v546 = vunpack.c.l.b16 %v522
      %v547 = vunpack.c.l.b16 %v523
      %v548 = vunpack.c.l.b16 %v524
      %v549 = vunpack.c.l.b16 %v525
      %v550 = vpack.c.b16 %v542, %v541
      %v551 = vpack.c.b16 %v544, %v543
      %v552 = vpack.c.b16 %v546, %v545
      %v553 = vpack.c.b16 %v548, %v547
      %v554 = vpack.c.b16 %v549, %v549
      %v560 = vsel %vm369, %v516, 0
      %v563 = vsel %vm252, %v554, 0
      %565 = vmatprep.subr.bf16.mxu0 0
      %566 = vmatpush1.bf16.msra.mxu0 %v550
      %567 = vmatprep.subr.bf16.mxu0 0
      %568 = vmatpush1.bf16.msra.mxu0 %v551
      %569 = vmatprep.subr.bf16.mxu0 0
      %570 = vmatpush1.bf16.msra.mxu0 %v552
      %571 = vmatprep.subr.bf16.mxu0 0
      %572 = vmatpush1.bf16.msra.mxu0 %v553
      %573 = vmatprep.subr.bf16.mxu0 0
      %574 = vmatpush1.bf16.msra.mxu0 %v563
      %575 = vmatprep.subr.bf16.mxu0 0
      %576 = vmatpush1.bf16.msra.mxu0 0
      %577 = vmatprep.subr.bf16.mxu0 0
      %578 = vmatpush1.bf16.msra.mxu0 0
      %579 = vmatprep.subr.bf16.mxu0 0
      %580 = vmatpush1.bf16.msra.mxu0 0
      %581 = vmatprep.subr.bf16.mxu0 0
      %582 = vmatpush1.bf16.msra.mxu0 0
      %583 = vmatprep.subr.bf16.mxu0 0
      %584 = vmatpush1.bf16.msra.mxu0 0
      %585 = vmatprep.subr.bf16.mxu0 0
      %586 = vmatpush1.bf16.msra.mxu0 0
      %587 = vmatprep.subr.bf16.mxu0 0
      %588 = vmatpush1.bf16.msra.mxu0 0
      %589 = vmatprep.subr.bf16.mxu0 0
      %590 = vmatpush1.bf16.msra.mxu0 0
      %591 = vmatprep.subr.bf16.mxu0 0
      %592 = vmatpush1.bf16.msra.mxu0 0
      %593 = vmatprep.subr.bf16.mxu0 0
      %594 = vmatpush1.bf16.msra.mxu0 0
      %595 = vmatprep.subr.bf16.mxu0 0
      %596 = vmatpush1.bf16.msra.mxu0 0
      %597 = vmatprep.mubr.bf16.mxu0 0
      %598 = vmatmul.mubr.bf16.gmra.mrb[0].mxu0 %v560
      %v599 = vpop.f32.mrb[0].mxu0
      %v600 = vadd.f32 %v530, %v599
      %v601 = vpop.f32.mrb[0].mxu0
      %v602 = vpop.f32.mrb[0].mxu0
      %v603 = vpop.f32.mrb[0].mxu0
      %604 = vdwg.mxu0
      %v605 = vmax.f32 %v600, 0.0
      %v606 = vpack.c.bf16 %v605, %v605
      %607 = vst [vmem:[%s249] sm:$0xf] %v606
      %p608 = scmp.lt.s32.totalorder %s17, 3
      %s609 = scalar_select %p608, %s17, 3
      %s610 = smul.addr %s609, 4
      %s611 = scalar_lea.vmem %s6, %s610
      // Predicated region
      $region45: #{net_forward.6} parent=43 // pred_check
        %p612 = pneg %p166
      $region46: #{net_forward.6} parent=43 // pred_check_branch
        %614 = sbr.rel (%p612) target = $region48
      $region47: #{net_forward.6} parent=43 // pred_region
        _
      $region48: #{net_forward.6} parent=43 // pred_fallthru
        _
    $region44: #{net_forward.6} parent=5 // pred_fallthru
      _
    %p615 = scmp.le.s32.totalorder 2, %s12
    // Predicated region
    $region49: #{net_forward.6} parent=5 // pred_check
      %p616 = pneg %p615
    $region50: #{net_forward.6} parent=5 // pred_check_branch
      %618 = sbr.rel (%p616) target = $region52
    $region51: #{net_forward.6} parent=5 // pred_region
      %s619 = ssub.s32 %s12, 2
      // Predicated region
      $region53: #{net_forward.6} parent=51 // pred_check
        %p620 = pneg %p172
      $region54: #{net_forward.6} parent=51 // pred_check_branch
        %622 = sbr.rel (%p620) target = $region56
      $region55: #{net_forward.6} parent=51 // pred_region
        %p623 = scmp.lt.s32.totalorder %s18, 3
        %s624 = scalar_select %p623, %s18, 3
        %s625 = smul.addr %s624, 4
        %s626 = scalar_lea.vmem %s6, %s625
      $region56: #{net_forward.6} parent=51 // pred_fallthru
        _
    $region52: #{net_forward.6} parent=5 // pred_fallthru
      _
  $region6: #{net_forward.6} parent=0 // loop_footer
    %s16 = sadd.s32 1, %s12
  $region7: #{net_forward.6} parent=0 // loop_footer_branch
    %11 = sbr.rel target = $region3
  $region8: #{net_forward.6} parent=0 // loop_exit
    _

// kernel: net_forward.7
$region0: #{net_forward.7}
  #allocation0 [shape = 'u32[]', space=smem, size = 0x4, offset = 0x4, fixed_abs, tag = 'smem constant byte address 0x4 - core index']
  #allocation1 [shape = 'u32[144,128]{1,0:T(1,128)}', space=vmem, size = 0x12000, scoped, tag = 'internal scratch']
  #allocation2 [shape = 'bf16[72,142]{1,0:T(8,128)(2,1)}', space=vmem, size = 0x9000, scoped, tag = 'scratch operand']
  #allocation3 [shape = 'bf16[144,128]{1,0:T(16,128)(2,1)}', space=vmem, size = 0x9000, scoped, tag = 'scratch operand']
  #allocation4 [shape = 'bf16[16,142]{1,0:T(16,128)(2,1)}', space=vmem, size = 0x2000, scoped, tag = 'scratch operand']
  %s0 = inlined_call_operand.vmem [shape: bf16[4,4,8,150], index: 0, kind: input, shape index: {}]
  %s1 = inlined_call_operand.vmem [shape: bf16[16,72], index: 1, kind: input, shape index: {}]
  %s2 = inlined_call_operand.vmem [shape: f32[16,1], index: 2, kind: input, shape index: {}]
  %s3 = inlined_call_operand.vmem [shape: bf16[16,144], index: 3, kind: input, shape index: {}]
  %s4 = inlined_call_operand.vmem [shape: f32[16,1], index: 4, kind: input, shape index: {}]
  %s5 = inlined_call_operand.vmem [shape: f32[1,142], index: 5, kind: input, shape index: {}]
  %s6 = inlined_call_operand.vmem [shape: bf16[4,16,128], index: 6, kind: output, shape index: {}]
  %s7 = sld [smem:[#allocation0]]
  $region57: #{net_forward.7} parent=0
    _
  %s9 = ssub.s32 1, %s7
  %s10 = scalar_select 0, %s9, %s7
  loop: start=0, step=1, limit=6
  $region2: #{net_forward.7} parent=0 // loop_pre_header
    _
  $region3: #{net_forward.7} parent=0 // loop_header
    %s12 = sphi 0, %s16
    %p13 = scmp.ge.s32.totalorder %s12, 6
    %s22 = sphi 0, %s24
    %s25 = sphi 0, %s22
    %s26 = sphi 0, %s25
    %s42 = sphi 0, %s26
    %s46 = sphi 0, %s46
    %s48 = sphi 0, %s46
    %s49 = sphi 0, %s48
    %s63 = sphi 0, %s49
    %s67 = sphi 0, %s67
    %s69 = sphi 0, %s67
    %s70 = sphi 0, %s69
    %s84 = sphi 0, %s70
    %s88 = sphi 0, %s88
    %s90 = sphi 0, %s88
    %s91 = sphi 0, %s90
    %s105 = sphi 0, %s91
    %s109 = sphi 0, %s109
    %s111 = sphi 0, %s109
    %s112 = sphi 0, %s111
    %s126 = sphi 0, %s112
    %s130 = sphi 0, %s130
    %s132 = sphi 0, %s130
    %s133 = sphi 0, %s132
    %s147 = sphi 0, %s133
    %s153 = sphi 0, %s155
    %s156 = sphi 0, %s153
    %s157 = sphi 0, %s156
    %s173 = sphi 0, %s157
  $region4: #{net_forward.7} parent=0 // loop_header_branch
    %15 = sbr.rel (%p13) target = $region8
  $region5: #{net_forward.7} parent=0 // loop_body
    %s17 = ssub.s32 %s12, 1
    %s18 = ssub.s32 %s12, 2
    %s19 = sadd.s32 %s12, 1
    %s20 = ssub.s32 %s12, %s19
    %p21 = scmp.eq.s32.totalorder %s20, 0
    %s23 = sadd.s32 %s22, 1
    %s24 = scalar_select %p21, %s22, %s23
    %p27 = pneg %p21
    %p28 = scmp.eq.s32.totalorder %s12, 3
    %p29 = por %p27, %p28
    %p30 = scmp.ne.s32.totalorder %s22, %s25
    %p31 = scmp.eq.s32.totalorder %s12, 0
    %p32 = por %p30, %p31
    %p33 = scmp.ne.s32.totalorder %s22, %s25
    %p34 = scmp.eq.s32.totalorder %s17, 3
    %p35 = por %p33, %p34
    %p36 = scmp.ne.s32.totalorder %s25, %s26
    %p37 = scmp.eq.s32.totalorder %s17, 0
    %p38 = por %p36, %p37
    %p39 = scmp.ne.s32.totalorder %s25, %s26
    %p40 = scmp.eq.s32.totalorder %s18, 3
    %p41 = por %p39, %p40
    %p43 = scmp.ne.s32.totalorder %s26, %s42
    %p44 = scmp.eq.s32.totalorder %s18, 0
    %p45 = por %p43, %p44
    %s47 = sadd.s32 %s46, 1
    %p50 = scmp.eq.s32.totalorder %s12, 3
    %p51 = scmp.ne.s32.totalorder %s46, %s48
    %p52 = scmp.eq.s32.totalorder %s12, 0
    %p53 = por %p51, %p52
    %p54 = scmp.ne.s32.totalorder %s46, %s48
    %p55 = scmp.eq.s32.totalorder %s17, 3
    %p56 = por %p54, %p55
    %p57 = scmp.ne.s32.totalorder %s48, %s49
    %p58 = scmp.eq.s32.totalorder %s17, 0
    %p59 = por %p57, %p58
    %p60 = scmp.ne.s32.totalorder %s48, %s49
    %p61 = scmp.eq.s32.totalorder %s18, 3
    %p62 = por %p60, %p61
    %p64 = scmp.ne.s32.totalorder %s49, %s63
    %p65 = scmp.eq.s32.totalorder %s18, 0
    %p66 = por %p64, %p65
    %s68 = sadd.s32 %s67, 1
    %p71 = scmp.eq.s32.totalorder %s12, 3
    %p72 = scmp.ne.s32.totalorder %s67, %s69
    %p73 = scmp.eq.s32.totalorder %s12, 0
    %p74 = por %p72, %p73
    %p75 = scmp.ne.s32.totalorder %s67, %s69
    %p76 = scmp.eq.s32.totalorder %s17, 3
    %p77 = por %p75, %p76
    %p78 = scmp.ne.s32.totalorder %s69, %s70
    %p79 = scmp.eq.s32.totalorder %s17, 0
    %p80 = por %p78, %p79
    %p81 = scmp.ne.s32.totalorder %s69, %s70
    %p82 = scmp.eq.s32.totalorder %s18, 3
    %p83 = por %p81, %p82
    %p85 = scmp.ne.s32.totalorder %s70, %s84
    %p86 = scmp.eq.s32.totalorder %s18, 0
    %p87 = por %p85, %p86
    %s89 = sadd.s32 %s88, 1
    %p92 = scmp.eq.s32.totalorder %s12, 3
    %p93 = scmp.ne.s32.totalorder %s88, %s90
    %p94 = scmp.eq.s32.totalorder %s12, 0
    %p95 = por %p93, %p94
    %p96 = scmp.ne.s32.totalorder %s88, %s90
    %p97 = scmp.eq.s32.totalorder %s17, 3
    %p98 = por %p96, %p97
    %p99 = scmp.ne.s32.totalorder %s90, %s91
    %p100 = scmp.eq.s32.totalorder %s17, 0
    %p101 = por %p99, %p100
    %p102 = scmp.ne.s32.totalorder %s90, %s91
    %p103 = scmp.eq.s32.totalorder %s18, 3
    %p104 = por %p102, %p103
    %p106 = scmp.ne.s32.totalorder %s91, %s105
    %p107 = scmp.eq.s32.totalorder %s18, 0
    %p108 = por %p106, %p107
    %s110 = sadd.s32 %s109, 1
    %p113 = scmp.eq.s32.totalorder %s12, 3
    %p114 = scmp.ne.s32.totalorder %s109, %s111
    %p115 = scmp.eq.s32.totalorder %s12, 0
    %p116 = por %p114, %p115
    %p117 = scmp.ne.s32.totalorder %s109, %s111
    %p118 = scmp.eq.s32.totalorder %s17, 3
    %p119 = por %p117, %p118
    %p120 = scmp.ne.s32.totalorder %s111, %s112
    %p121 = scmp.eq.s32.totalorder %s17, 0
    %p122 = por %p120, %p121
    %p123 = scmp.ne.s32.totalorder %s111, %s112
    %p124 = scmp.eq.s32.totalorder %s18, 3
    %p125 = por %p123, %p124
    %p127 = scmp.ne.s32.totalorder %s112, %s126
    %p128 = scmp.eq.s32.totalorder %s18, 0
    %p129 = por %p127, %p128
    %s131 = sadd.s32 %s130, 1
    %p134 = scmp.eq.s32.totalorder %s12, 3
    %p135 = scmp.ne.s32.totalorder %s130, %s132
    %p136 = scmp.eq.s32.totalorder %s12, 0
    %p137 = por %p135, %p136
    %p138 = scmp.ne.s32.totalorder %s130, %s132
    %p139 = scmp.eq.s32.totalorder %s17, 3
    %p140 = por %p138, %p139
    %p141 = scmp.ne.s32.totalorder %s132, %s133
    %p142 = scmp.eq.s32.totalorder %s17, 0
    %p143 = por %p141, %p142
    %p144 = scmp.ne.s32.totalorder %s132, %s133
    %p145 = scmp.eq.s32.totalorder %s18, 3
    %p146 = por %p144, %p145
    %p148 = scmp.ne.s32.totalorder %s133, %s147
    %p149 = scmp.eq.s32.totalorder %s18, 0
    %p150 = por %p148, %p149
    %s151 = ssub.s32 %s12, %s19
    %p152 = scmp.eq.s32.totalorder %s151, 0
    %s154 = sadd.s32 %s153, 1
    %s155 = scalar_select %p152, %s153, %s154
    %p158 = pneg %p152
    %p159 = scmp.eq.s32.totalorder %s12, 3
    %p160 = por %p158, %p159
    %p161 = scmp.ne.s32.totalorder %s153, %s156
    %p162 = scmp.eq.s32.totalorder %s12, 0
    %p163 = por %p161, %p162
    %p164 = scmp.ne.s32.totalorder %s153, %s156
    %p165 = scmp.eq.s32.totalorder %s17, 3
    %p166 = por %p164, %p165
    %p167 = scmp.ne.s32.totalorder %s156, %s157
    %p168 = scmp.eq.s32.totalorder %s17, 0
    %p169 = por %p167, %p168
    %p170 = scmp.ne.s32.totalorder %s156, %s157
    %p171 = scmp.eq.s32.totalorder %s18, 3
    %p172 = por %p170, %p171
    %p174 = scmp.ne.s32.totalorder %s157, %s173
    %p175 = scmp.eq.s32.totalorder %s18, 0
    %p176 = por %p174, %p175
    %p177 = scmp.le.s32.totalorder 1, %s12
    %p178 = scmp.lt.s32.totalorder %s12, 5
    %p179 = pnand %p177, %p178
    %p180 = pneg %p179
    // Predicated region
    $region9: #{net_forward.7} parent=5 // pred_check
      _
    $region10: #{net_forward.7} parent=5 // pred_check_branch
      %182 = sbr.rel (%p179) target = $region12
    $region11: #{net_forward.7} parent=5 // pred_region
      %s183 = ssub.s32 %s12, 1
      // Predicated region
      $region13: #{net_forward.7} parent=11 // pred_check
        %p184 = pneg %p59
      $region14: #{net_forward.7} parent=11 // pred_check_branch
        %186 = sbr.rel (%p184) target = $region16
      $region15: #{net_forward.7} parent=11 // pred_region
        _
      $region16: #{net_forward.7} parent=11 // pred_fallthru
        _
      // Predicated region
      $region17: #{net_forward.7} parent=11 // pred_check
        %p187 = pneg %p80
      $region18: #{net_forward.7} parent=11 // pred_check_branch
        %189 = sbr.rel (%p187) target = $region20
      $region19: #{net_forward.7} parent=11 // pred_region
        _
      $region20: #{net_forward.7} parent=11 // pred_fallthru
        _
      // Predicated region
      $region21: #{net_forward.7} parent=11 // pred_check
        %p190 = pneg %p101
      $region22: #{net_forward.7} parent=11 // pred_check_branch
        %192 = sbr.rel (%p190) target = $region24
      $region23: #{net_forward.7} parent=11 // pred_region
        _
      $region24: #{net_forward.7} parent=11 // pred_fallthru
        _
      // Predicated region
      $region25: #{net_forward.7} parent=11 // pred_check
        %p193 = pneg %p122
      $region26: #{net_forward.7} parent=11 // pred_check_branch
        %195 = sbr.rel (%p193) target = $region28
      $region27: #{net_forward.7} parent=11 // pred_region
        _
      $region28: #{net_forward.7} parent=11 // pred_fallthru
        _
      // Predicated region
      $region29: #{net_forward.7} parent=11 // pred_check
        %p196 = pneg %p143
      $region30: #{net_forward.7} parent=11 // pred_check_branch
        %198 = sbr.rel (%p196) target = $region32
      $region31: #{net_forward.7} parent=11 // pred_region
        _
      $region32: #{net_forward.7} parent=11 // pred_fallthru
        _
    $region12: #{net_forward.7} parent=5 // pred_fallthru
      _
    %p199 = scmp.lt.s32.totalorder %s12, 4
    // Predicated region
    $region33: #{net_forward.7} parent=5 // pred_check
      %p200 = pneg %p199
    $region34: #{net_forward.7} parent=5 // pred_check_branch
      %202 = sbr.rel (%p200) target = $region36
    $region35: #{net_forward.7} parent=5 // pred_region
      // Predicated region
      $region37: #{net_forward.7} parent=35 // pred_check
        %p203 = pneg %p32
      $region38: #{net_forward.7} parent=35 // pred_check_branch
        %205 = sbr.rel (%p203) target = $region40
      $region39: #{net_forward.7} parent=35 // pred_region
        %p206 = scmp.lt.s32.totalorder %s12, 3
        %s207 = scalar_select %p206, %s12, 3
        %s208 = smul.addr %s207, 8
        %s209 = smul.addr %s208, 4
        %s210 = scalar_lea.vmem %s0, %s209
      $region40: #{net_forward.7} parent=35 // pred_fallthru
        _
    $region36: #{net_forward.7} parent=5 // pred_fallthru
      _
    %p211 = scmp.le.s32.totalorder 1, %s12
    %p212 = scmp.lt.s32.totalorder %s12, 5
    %p213 = pnand %p211, %p212
    %p214 = pneg %p213
    // Predicated region
    $region41: #{net_forward.7} parent=5 // pred_check
      _
    $region42: #{net_forward.7} parent=5 // pred_check_branch
      %216 = sbr.rel (%p213) target = $region44
    $region43: #{net_forward.7} parent=5 // pred_region
      %s217 = ssub.s32 %s12, 1
      %p218 = scmp.lt.s32.totalorder %s17, 3
      %s219 = scalar_select %p218, %s17, 3
      %s220 = smul.addr %s219, 8
      %s221 = smul.addr %s220, 4
      %s222 = scalar_lea.vmem %s0, %s221
      %p223 = pneg %p38
      %p224 = pneg %p35
      %p225 = pneg %p59
      %p226 = pneg %p56
      %p227 = pneg %p80
      %p228 = pneg %p77
      %p229 = pneg %p101
      %p230 = pneg %p98
      %p231 = pneg %p122
      %p232 = pneg %p119
      %p233 = pneg %p143
      %p234 = pneg %p140
      %p235 = pneg %p169
      %p236 = pneg %p166
      %p237 = scmp.lt.s32.totalorder %s17, 3
      %s238 = scalar_select %p237, %s17, 3
      %s239 = smul.addr %s238, 2
      %s240 = smul.addr %s239, 4
      %s241 = scalar_lea.vmem %s6, %s240
      %p242 = scmp.lt.s32.totalorder %s17, 3
      %s243 = scalar_select %p242, %s17, 3
      %s244 = smul.addr %s243, 8
      %s245 = smul.addr %s244, 4
      %s246 = scalar_lea.vmem %s0, %s245
      %p247 = scmp.lt.s32.totalorder %s17, 3
      %s248 = scalar_select %p247, %s17, 3
      %s249 = smul.addr %s248, 2
      %s250 = smul.addr %s249, 4
      %s251 = scalar_lea.vmem %s6, %s250
      %v253 = vld [vmem:[%s246] sm:$0xff]
      %vm254 = vcmask 1043456
      %vm255 = vcmask 113668
      %vm256 = vmor %vm255, %vm254
      %257 = vst.msk [vmem:[#allocation2] sm:$0xff] %vm256, %v253
      %s258 = scalar_lea.vmem %s246, 8
      %v259 = vld [vmem:[%s258] sm:$0xff]
      %260 = vst.msk [vmem:[#allocation2 + $0x8] sm:$0xff] %vm256, %v259
      %v261 = vld [vmem:[%s246] sm:$0xff]
      %263 = vrot.lane.b32.xlu0 %v261, 127
      %v264 = vpop.permute.xlu0 %263
      %v265 = vrot.slane %v264, 4
      %vm266 = vcmask 1039360
      %v267 = vsel %vm266, %v264, %v265
      %269 = vst.msk [vmem:[#allocation2 + $0x10] sm:$0xff] %vm256, %v267
      %s270 = scalar_lea.vmem %s246, 16
      %v271 = vld [vmem:[%s270] sm:$0xff]
      %272 = vst.msk [vmem:[#allocation2 + $0x18] sm:$0xff] %vm256, %v271
      %s273 = scalar_lea.vmem %s246, 24
      %v274 = vld [vmem:[%s273] sm:$0xff]
      %275 = vst.msk [vmem:[#allocation2 + $0x20] sm:$0xff] %vm256, %v274
      %v276 = vld [vmem:[%s270] sm:$0xff]
      %278 = vrot.lane.b32.xlu0 %v276, 127
      %v279 = vpop.permute.xlu0 %278
      %v280 = vrot.slane %v279, 4
      %v281 = vsel %vm266, %v279, %v280
      %283 = vst.msk [vmem:[#allocation2 + $0x28] sm:$0xff] %vm256, %v281
      %v284 = vld [vmem:[%s246] sm:$0xff]
      %286 = vrot.lane.b32.xlu0 %v284, 122
      %v287 = vpop.permute.xlu0 %286
      %v288 = vrot.slane %v287, 4
      %vm289 = vcmask 998400
      %v290 = vsel %vm289, %v287, %v288
      %292 = vst.msk [vmem:[#allocation2 + $0x30] sm:$0xff] %vm256, %v290
      %v293 = vld [vmem:[%s258] sm:$0xff]
      %295 = vrot.lane.b32.xlu0 %v293, 122
      %v296 = vpop.permute.xlu0 %295
      %v297 = vrot.slane %v296, 4
      %v298 = vsel %vm289, %v296, %v297
      %300 = vst.msk [vmem:[#allocation2 + $0x38] sm:$0xff] %vm256, %v298
      %v301 = vld [vmem:[%s246] sm:$0xff]
      %303 = vrot.lane.b32.xlu0 %v301, 121
      %v304 = vpop.permute.xlu0 %303
      %v305 = vrot.slane %v304, 4
      %vm306 = vcmask 990208
      %v307 = vsel %vm306, %v304, %v305
      %309 = vst.msk [vmem:[#allocation2 + $0x40] sm:$0xff] %vm256, %v307
      %v310 = vld [vmem:[%s1] sm:$0xf]
      %v311 = vld [vmem:[%s1 + $0x4] sm:$0xf]
      %v312 = vld [vmem:[#allocation2] sm:$0xff]
      %v313 = vld [vmem:[#allocation2 + $0x8] sm:$0xff]
      %v314 = vld [vmem:[#allocation2 + $0x10] sm:$0xff]
      %v315 = vld [vmem:[#allocation2 + $0x18] sm:$0xff]
      %v316 = vld [vmem:[#allocation2 + $0x20] sm:$0xff]
      %v317 = vld [vmem:[#allocation2 + $0x28] sm:$0xff]
      %v318 = vld [vmem:[#allocation2 + $0x30] sm:$0xff]
      %v319 = vld [vmem:[#allocation2 + $0x38] sm:$0xff]
      %v320 = vld [vmem:[#allocation2 + $0x40] sm:$0xff]
      %v321 = vld [vmem:[%s2] sm:$0xff]
      %v322 = vld [vmem:[%s2 + $0x8] sm:$0xff]
      %324 = vset.pattern.permute.xlu0 0
      %325 = vperm.xlu0 %324, %v321
      %v326 = vpop.permute.xlu0 %325
      %329 = vset.pattern.permute.xlu0 0
      %330 = vperm.xlu0 %329, %v322
      %v331 = vpop.permute.xlu0 %330
      %v335 = vunpack.c.l.b16 %v310
      %v336 = vunpack.c.l.b16 %v311
      %v337 = vpack.c.b16 %v336, %v335
      %v347 = vunpack.c.l.b16 %v312
      %v348 = vunpack.c.h.b16 %v312
      %v349 = vunpack.c.l.b16 %v313
      %v350 = vunpack.c.h.b16 %v313
      %v351 = vunpack.c.l.b16 %v314
      %v352 = vunpack.c.h.b16 %v314
      %v353 = vunpack.c.l.b16 %v315
      %v354 = vunpack.c.h.b16 %v315
      %v355 = vunpack.c.l.b16 %v316
      %v356 = vunpack.c.h.b16 %v316
      %v357 = vunpack.c.l.b16 %v317
      %v358 = vunpack.c.h.b16 %v317
      %v359 = vunpack.c.l.b16 %v318
      %v360 = vunpack.c.h.b16 %v318
      %v361 = vunpack.c.l.b16 %v319
      %v362 = vunpack.c.h.b16 %v319
      %v363 = vunpack.c.l.b16 %v320
      %v364 = vunpack.c.h.b16 %v320
      %v365 = vpack.c.b16 %v349, %v347
      %v366 = vpack.c.b16 %v350, %v348
      %v367 = vpack.c.b16 %v353, %v351
      %v368 = vpack.c.b16 %v354, %v352
      %v369 = vpack.c.b16 %v357, %v355
      %v370 = vpack.c.b16 %v358, %v356
      %v371 = vpack.c.b16 %v361, %v359
      %v372 = vpack.c.b16 %v362, %v360
      %v373 = vpack.c.b16 %v363, %v363
      %v374 = vpack.c.b16 %v364, %v364
      %vm383 = vcmask 588800
      %v385 = vsel %vm383, %v337, 0
      %v388 = vsel %vm254, %v373, 0
      %v391 = vsel %vm254, %v374, 0
      %393 = vmatprep.subr.bf16.mxu0 %v366
      %394 = vmatpush1.bf16.msra.mxu0 %v365
      %395 = vmatprep.subr.bf16.mxu0 %v368
      %396 = vmatpush1.bf16.msra.mxu0 %v367
      %397 = vmatprep.subr.bf16.mxu0 %v370
      %398 = vmatpush1.bf16.msra.mxu0 %v369
      %399 = vmatprep.subr.bf16.mxu0 %v372
      %400 = vmatpush1.bf16.msra.mxu0 %v371
      %401 = vmatprep.subr.bf16.mxu0 %v391
      %402 = vmatpush1.bf16.msra.mxu0 %v388
      %403 = vmatprep.subr.bf16.mxu0 0
      %404 = vmatpush1.bf16.msra.mxu0 0
      %405 = vmatprep.subr.bf16.mxu0 0
      %406 = vmatpush1.bf16.msra.mxu0 0
      %407 = vmatprep.subr.bf16.mxu0 0
      %408 = vmatpush1.bf16.msra.mxu0 0
      %409 = vmatprep.subr.bf16.mxu0 0
      %410 = vmatpush1.bf16.msra.mxu0 0
      %411 = vmatprep.subr.bf16.mxu0 0
      %412 = vmatpush1.bf16.msra.mxu0 0
      %413 = vmatprep.subr.bf16.mxu0 0
      %414 = vmatpush1.bf16.msra.mxu0 0
      %415 = vmatprep.subr.bf16.mxu0 0
      %416 = vmatpush1.bf16.msra.mxu0 0
      %417 = vmatprep.subr.bf16.mxu0 0
      %418 = vmatpush1.bf16.msra.mxu0 0
      %419 = vmatprep.subr.bf16.mxu0 0
      %420 = vmatpush1.bf16.msra.mxu0 0
      %421 = vmatprep.subr.bf16.mxu0 0
      %422 = vmatpush1.bf16.msra.mxu0 0
      %423 = vmatprep.subr.bf16.mxu0 0
      %424 = vmatpush1.bf16.msra.mxu0 0
      %425 = vmatprep.mubr.bf16.mxu0 0
      %426 = vmatmul.mubr.bf16.gmra.mrb[0].mxu0 %v385
      %v427 = vpop.f32.mrb[0].mxu0
      %v428 = vadd.f32 %v326, %v427
      %v429 = vpop.f32.mrb[0].mxu0
      %v430 = vadd.f32 %v326, %v429
      %v431 = vpop.f32.mrb[0].mxu0
      %v432 = vadd.f32 %v331, %v431
      %v433 = vpop.f32.mrb[0].mxu0
      %v434 = vadd.f32 %v331, %v433
      %435 = vdwg.mxu0
      %v436 = vmax.f32 %v428, 0.0
      %v437 = vmax.f32 %v430, 0.0
      %v438 = vmax.f32 %v432, 0.0
      %v439 = vmax.f32 %v434, 0.0
      %v440 = vld [vmem:[%s5] sm:$0x3]
      %v442 = vlaneseq
      %v443 = vshrl.u32 %v442, 7
      %v444 = vsub.s32 0, %v443
      %v445 = vrot.slane %v440, %v444
      %v446 = vlaneseq
      %v447 = vshrl.u32 %v446, 7
      %v448 = vsub.s32 1, %v447
      %v449 = vrot.slane %v440, %v448
      %v452 = vmul.f32 %v436, %v445
      %v453 = vmul.f32 %v437, %v449
      %v454 = vmul.f32 %v438, %v445
      %v455 = vmul.f32 %v439, %v449
      %v456 = vpack.c.bf16 %v454, %v452
      %v457 = vpack.c.bf16 %v455, %v453
      %458 = vst [vmem:[#allocation4] sm:$0xff] %v456
      %vm459 = vcmask 113664
      %460 = vst.msk [vmem:[#allocation4 + $0x8] sm:$0xff] %vm459, %v457
      %v461 = vld [vmem:[#allocation4] sm:$0xff]
      %462 = vst [vmem:[#allocation3] sm:$0xff] %v461
      %v463 = vld [vmem:[#allocation4] sm:$0xff]
      %v464 = vld [vmem:[#allocation4 + $0x8] sm:$0xff]
      %467 = vrot.lane.b32.xlu0 %v463, 127
      %v468 = vpop.permute.xlu0 %467
      %469 = vrot.lane.b32.xlu0 %v464, 127
      %v470 = vpop.permute.xlu0 %469
      %v471 = vsel %vm266, %v468, %v470
      %473 = vst [vmem:[#allocation3 + $0x8] sm:$0xff] %v471
      %v474 = vld [vmem:[#allocation4] sm:$0xff]
      %v475 = vld [vmem:[#allocation4 + $0x8] sm:$0xff]
      %478 = vrot.lane.b32.xlu0 %v474, 126
      %v479 = vpop.permute.xlu0 %478
      %480 = vrot.lane.b32.xlu0 %v475, 126
      %v481 = vpop.permute.xlu0 %480
      %vm482 = vcmask 1031168
      %v483 = vsel %vm482, %v479, %v481
      %485 = vst [vmem:[#allocation3 + $0x10] sm:$0xff] %v483
      %v486 = vld [vmem:[#allocation4] sm:$0xff]
      %v487 = vld [vmem:[#allocation4 + $0x8] sm:$0xff]
      %490 = vrot.lane.b32.xlu0 %v486, 122
      %v491 = vpop.permute.xlu0 %490
      %492 = vrot.lane.b32.xlu0 %v487, 122
      %v493 = vpop.permute.xlu0 %492
      %v494 = vsel %vm289, %v491, %v493
      %496 = vst [vmem:[#allocation3 + $0x18] sm:$0xff] %v494
      %v497 = vld [vmem:[#allocation4] sm:$0xff]
      %v498 = vld [vmem:[#allocation4 + $0x8] sm:$0xff]
      %501 = vrot.lane.b32.xlu0 %v497, 121
      %v502 = vpop.permute.xlu0 %501
      %503 = vrot.lane.b32.xlu0 %v498, 121
      %v504 = vpop.permute.xlu0 %503
      %v505 = vsel %vm306, %v502, %v504
      %507 = vst [vmem:[#allocation3 + $0x20] sm:$0xff] %v505
      %v508 = vld [vmem:[#allocation4] sm:$0xff]
      %v509 = vld [vmem:[#allocation4 + $0x8] sm:$0xff]
      %512 = vrot.lane.b32.xlu0 %v508, 120
      %v513 = vpop.permute.xlu0 %512
      %514 = vrot.lane.b32.xlu0 %v509, 120
      %v515 = vpop.permute.xlu0 %514
      %vm516 = vcmask 982016
      %v517 = vsel %vm516, %v513, %v515
      %519 = vst [vmem:[#allocation3 + $0x28] sm:$0xff] %v517
      %v520 = vld [vmem:[#allocation4] sm:$0xff]
      %v521 = vld [vmem:[#allocation4 + $0x8] sm:$0xff]
      %524 = vrot.lane.b32.xlu0 %v520, 116
      %v525 = vpop.permute.xlu0 %524
      %526 = vrot.lane.b32.xlu0 %v521, 116
      %v527 = vpop.permute.xlu0 %526
      %vm528 = vcmask 949248
      %v529 = vsel %vm528, %v525, %v527
      %531 = vst [vmem:[#allocation3 + $0x30] sm:$0xff] %v529
      %v532 = vld [vmem:[#allocation4] sm:$0xff]
      %v533 = vld [vmem:[#allocation4 + $0x8] sm:$0xff]
      %536 = vrot.lane.b32.xlu0 %v532, 115
      %v537 = vpop.permute.xlu0 %536
      %538 = vrot.lane.b32.xlu0 %v533, 115
      %v539 = vpop.permute.xlu0 %538
      %vm540 = vcmask 941056
      %v541 = vsel %vm540, %v537, %v539
      %543 = vst [vmem:[#allocation3 + $0x38] sm:$0xff] %v541
      %v544 = vld [vmem:[#allocation4] sm:$0xff]
      %v545 = vld [vmem:[#allocation4 + $0x8] sm:$0xff]
      %548 = vrot.lane.b32.xlu0 %v544, 114
      %v549 = vpop.permute.xlu0 %548
      %550 = vrot.lane.b32.xlu0 %v545, 114
      %v551 = vpop.permute.xlu0 %550
      %vm552 = vcmask 932864
      %v553 = vsel %vm552, %v549, %v551
      %555 = vst [vmem:[#allocation3 + $0x40] sm:$0xff] %v553
      %v556 = vld [vmem:[%s3] sm:$0xff]
      %v557 = vld [vmem:[%s3 + $0x8] sm:$0xff]
      %v558 = vld [vmem:[#allocation3] sm:$0xff]
      %v559 = vld [vmem:[#allocation3 + $0x8] sm:$0xff]
      %v560 = vld [vmem:[#allocation3 + $0x10] sm:$0xff]
      %v561 = vld [vmem:[#allocation3 + $0x18] sm:$0xff]
      %v562 = vld [vmem:[#allocation3 + $0x20] sm:$0xff]
      %v563 = vld [vmem:[#allocation3 + $0x28] sm:$0xff]
      %v564 = vld [vmem:[#allocation3 + $0x30] sm:$0xff]
      %v565 = vld [vmem:[#allocation3 + $0x38] sm:$0xff]
      %v566 = vld [vmem:[#allocation3 + $0x40] sm:$0xff]
      %v567 = vld [vmem:[%s4] sm:$0xff]
      %v568 = vld [vmem:[%s4 + $0x8] sm:$0xff]
      %570 = vset.pattern.permute.xlu0 0
      %571 = vperm.xlu0 %570, %v567
      %v572 = vpop.permute.xlu0 %571
      %575 = vset.pattern.permute.xlu0 0
      %576 = vperm.xlu0 %575, %v568
      %v577 = vpop.permute.xlu0 %576
      %v581 = vunpack.c.l.b16 %v556
      %v582 = vunpack.c.h.b16 %v556
      %v583 = vunpack.c.l.b16 %v557
      %v584 = vunpack.c.h.b16 %v557
      %v585 = vpack.c.b16 %v583, %v581
      %v586 = vpack.c.b16 %v584, %v582
      %vm588 = vcmask 130048
      %v590 = vsel %vm588, %v586, 0
      %592 = vmatprep.subr.bf16.mxu0 0
      %593 = vmatpush1.bf16.msra.mxu0 %v558
      %594 = vmatprep.subr.bf16.mxu0 0
      %595 = vmatpush1.bf16.msra.mxu0 %v559
      %596 = vmatprep.subr.bf16.mxu0 0
      %597 = vmatpush1.bf16.msra.mxu0 %v560
      %598 = vmatprep.subr.bf16.mxu0 0
      %599 = vmatpush1.bf16.msra.mxu0 %v561
      %600 = vmatprep.subr.bf16.mxu0 0
      %601 = vmatpush1.bf16.msra.mxu0 %v562
      %602 = vmatprep.subr.bf16.mxu0 0
      %603 = vmatpush1.bf16.msra.mxu0 %v563
      %604 = vmatprep.subr.bf16.mxu0 0
      %605 = vmatpush1.bf16.msra.mxu0 %v564
      %606 = vmatprep.subr.bf16.mxu0 0
      %607 = vmatpush1.bf16.msra.mxu0 %v565
      %608 = vmatprep.subr.bf16.mxu0 0
      %609 = vmatpush1.bf16.msra.mxu0 %v566
      %610 = vmatprep.subr.bf16.mxu0 0
      %611 = vmatpush1.bf16.msra.mxu0 0
      %612 = vmatprep.subr.bf16.mxu0 0
      %613 = vmatpush1.bf16.msra.mxu0 0
      %614 = vmatprep.subr.bf16.mxu0 0
      %615 = vmatpush1.bf16.msra.mxu0 0
      %616 = vmatprep.subr.bf16.mxu0 0
      %617 = vmatpush1.bf16.msra.mxu0 0
      %618 = vmatprep.subr.bf16.mxu0 0
      %619 = vmatpush1.bf16.msra.mxu0 0
      %620 = vmatprep.subr.bf16.mxu0 0
      %621 = vmatpush1.bf16.msra.mxu0 0
      %622 = vmatprep.subr.bf16.mxu0 0
      %623 = vmatpush1.bf16.msra.mxu0 0
      %624 = vmatprep.mubr.bf16.mxu0 %v590
      %625 = vmatmul.mubr.bf16.gmra.mrb[0].mxu0 %v585
      %v626 = vpop.f32.mrb[0].mxu0
      %v627 = vadd.f32 %v572, %v626
      %v628 = vpop.f32.mrb[0].mxu0
      %v629 = vpop.f32.mrb[0].mxu0
      %v630 = vadd.f32 %v577, %v629
      %v631 = vpop.f32.mrb[0].mxu0
      %632 = vdwg.mxu0
      %v633 = vmax.f32 %v627, 0.0
      %v634 = vmax.f32 %v630, 0.0
      %v635 = vpack.c.bf16 %v634, %v633
      %v637 = vunpack.c.l.b16 %v635
      %v638 = vunpack.c.h.b16 %v635
      %v639 = vpack.c.b16 %v637, %v637
      %v640 = vpack.c.b16 %v638, %v638
      %643 = vst [vmem:[%s251] sm:$0xf] %v639
      %644 = vst [vmem:[%s251 + $0x4] sm:$0xf] %v640
      %p645 = scmp.lt.s32.totalorder %s17, 3
      %s646 = scalar_select %p645, %s17, 3
      %s647 = smul.addr %s646, 2
      %s648 = smul.addr %s647, 4
      %s649 = scalar_lea.vmem %s6, %s648
      // Predicated region
      $region45: #{net_forward.7} parent=43 // pred_check
        %p650 = pneg %p166
      $region46: #{net_forward.7} parent=43 // pred_check_branch
        %652 = sbr.rel (%p650) target = $region48
      $region47: #{net_forward.7} parent=43 // pred_region
        _
      $region48: #{net_forward.7} parent=43 // pred_fallthru
        _
    $region44: #{net_forward.7} parent=5 // pred_fallthru
      _
    %p653 = scmp.le.s32.totalorder 2, %s12
    // Predicated region
    $region49: #{net_forward.7} parent=5 // pred_check
      %p654 = pneg %p653
    $region50: #{net_forward.7} parent=5 // pred_check_branch
      %656 = sbr.rel (%p654) target = $region52
    $region51: #{net_forward.7} parent=5 // pred_region
      %s657 = ssub.s32 %s12, 2
      // Predicated region
      $region53: #{net_forward.7} parent=51 // pred_check
        %p658 = pneg %p172
      $region54: #{net_forward.7} parent=51 // pred_check_branch
        %660 = sbr.rel (%p658) target = $region56
      $region55: #{net_forward.7} parent=51 // pred_region
        %p661 = scmp.lt.s32.totalorder %s18, 3
        %s662 = scalar_select %p661, %s18, 3
        %s663 = smul.addr %s662, 2
        %s664 = smul.addr %s663, 4
        %s665 = scalar_lea.vmem %s6, %s664
      $region56: #{net_forward.7} parent=51 // pred_fallthru
        _
    $region52: #{net_forward.7} parent=5 // pred_fallthru
      _
  $region6: #{net_forward.7} parent=0 // loop_footer
    %s16 = sadd.s32 1, %s12
  $region7: #{net_forward.7} parent=0 // loop_footer_branch
    %11 = sbr.rel target = $region3
  $region8: #{net_forward.7} parent=0 // loop_exit
    _

// kernel: net_forward.8
$region0: #{net_forward.8}
  #allocation0 [shape = 'u32[]', space=smem, size = 0x4, offset = 0x4, fixed_abs, tag = 'smem constant byte address 0x4 - core index']
  #allocation1 [shape = 'u32[144,128]{1,0:T(1,128)}', space=vmem, size = 0x12000, scoped, tag = 'internal scratch']
  #allocation2 [shape = 'bf16[32,172]{1,0:T(16,128)(2,1)}', space=vmem, size = 0x4000, scoped, tag = 'scratch operand']
  #allocation3 [shape = 'bf16[288,150]{1,0:T(16,128)(2,1)}', space=vmem, size = 0x24000, scoped, tag = 'scratch operand']
  #allocation4 [shape = 'bf16[144,128]{1,0:T(16,128)(2,1)}', space=vmem, size = 0x9000, scoped, tag = 'scratch operand']
  #allocation5 [shape = 'bf16[16,150]{1,0:T(16,128)(2,1)}', space=vmem, size = 0x2000, scoped, tag = 'scratch operand']
  %s0 = inlined_call_operand.vmem [shape: bf16[2,32,16], index: 0, kind: input, shape index: {}]
  %s1 = inlined_call_operand.vmem [shape: bf16[16,172], index: 1, kind: input, shape index: {}]
  %s2 = inlined_call_operand.vmem [shape: bf16[16,288], index: 2, kind: input, shape index: {}]
  %s3 = inlined_call_operand.vmem [shape: f32[16,1], index: 3, kind: input, shape index: {}]
  %s4 = inlined_call_operand.vmem [shape: bf16[16,144], index: 4, kind: input, shape index: {}]
  %s5 = inlined_call_operand.vmem [shape: f32[16,1], index: 5, kind: input, shape index: {}]
  %s6 = inlined_call_operand.vmem [shape: f32[1,150], index: 6, kind: input, shape index: {}]
  %s7 = inlined_call_operand.vmem [shape: bf16[2,16,128], index: 7, kind: output, shape index: {}]
  %s8 = sld [smem:[#allocation0]]
  $region61: #{net_forward.8} parent=0
    _
  %s10 = ssub.s32 1, %s8
  %s11 = scalar_select 0, %s10, %s8
  loop: start=0, step=1, limit=4
  $region2: #{net_forward.8} parent=0 // loop_pre_header
    _
  $region3: #{net_forward.8} parent=0 // loop_header
    %s13 = sphi 0, %s17
    %p14 = scmp.ge.s32.totalorder %s13, 4
    %s23 = sphi 0, %s25
    %s26 = sphi 0, %s23
    %s27 = sphi 0, %s26
    %s43 = sphi 0, %s27
    %s47 = sphi 0, %s47
    %s49 = sphi 0, %s47
    %s50 = sphi 0, %s49
    %s64 = sphi 0, %s50
    %s68 = sphi 0, %s68
    %s70 = sphi 0, %s68
    %s71 = sphi 0, %s70
    %s85 = sphi 0, %s71
    %s89 = sphi 0, %s89
    %s91 = sphi 0, %s89
    %s92 = sphi 0, %s91
    %s106 = sphi 0, %s92
    %s110 = sphi 0, %s110
    %s112 = sphi 0, %s110
    %s113 = sphi 0, %s112
    %s127 = sphi 0, %s113
    %s131 = sphi 0, %s131
    %s133 = sphi 0, %s131
    %s134 = sphi 0, %s133
    %s148 = sphi 0, %s134
    %s152 = sphi 0, %s152
    %s154 = sphi 0, %s152
    %s155 = sphi 0, %s154
    %s169 = sphi 0, %s155
    %s175 = sphi 0, %s177
    %s178 = sphi 0, %s175
    %s179 = sphi 0, %s178
    %s195 = sphi 0, %s179
  $region4: #{net_forward.8} parent=0 // loop_header_branch
    %16 = sbr.rel (%p14) target = $region8
  $region5: #{net_forward.8} parent=0 // loop_body
    %s18 = ssub.s32 %s13, 1
    %s19 = ssub.s32 %s13, 2
    %s20 = sadd.s32 %s13, 1
    %s21 = ssub.s32 %s13, %s20
    %p22 = scmp.eq.s32.totalorder %s21, 0
    %s24 = sadd.s32 %s23, 1
    %s25 = scalar_select %p22, %s23, %s24
    %p28 = pneg %p22
    %p29 = scmp.eq.s32.totalorder %s13, 1
    %p30 = por %p28, %p29
    %p31 = scmp.ne.s32.totalorder %s23, %s26
    %p32 = scmp.eq.s32.totalorder %s13, 0
    %p33 = por %p31, %p32
    %p34 = scmp.ne.s32.totalorder %s23, %s26
    %p35 = scmp.eq.s32.totalorder %s18, 1
    %p36 = por %p34, %p35
    %p37 = scmp.ne.s32.totalorder %s26, %s27
    %p38 = scmp.eq.s32.totalorder %s18, 0
    %p39 = por %p37, %p38
    %p40 = scmp.ne.s32.totalorder %s26, %s27
    %p41 = scmp.eq.s32.totalorder %s19, 1
    %p42 = por %p40, %p41
    %p44 = scmp.ne.s32.totalorder %s27, %s43
    %p45 = scmp.eq.s32.totalorder %s19, 0
    %p46 = por %p44, %p45
    %s48 = sadd.s32 %s47, 1
    %p51 = scmp.eq.s32.totalorder %s13, 1
    %p52 = scmp.ne.s32.totalorder %s47, %s49
    %p53 = scmp.eq.s32.totalorder %s13, 0
    %p54 = por %p52, %p53
    %p55 = scmp.ne.s32.totalorder %s47, %s49
    %p56 = scmp.eq.s32.totalorder %s18, 1
    %p57 = por %p55, %p56
    %p58 = scmp.ne.s32.totalorder %s49, %s50
    %p59 = scmp.eq.s32.totalorder %s18, 0
    %p60 = por %p58, %p59
    %p61 = scmp.ne.s32.totalorder %s49, %s50
    %p62 = scmp.eq.s32.totalorder %s19, 1
    %p63 = por %p61, %p62
    %p65 = scmp.ne.s32.totalorder %s50, %s64
    %p66 = scmp.eq.s32.totalorder %s19, 0
    %p67 = por %p65, %p66
    %s69 = sadd.s32 %s68, 1
    %p72 = scmp.eq.s32.totalorder %s13, 1
    %p73 = scmp.ne.s32.totalorder %s68, %s70
    %p74 = scmp.eq.s32.totalorder %s13, 0
    %p75 = por %p73, %p74
    %p76 = scmp.ne.s32.totalorder %s68, %s70
    %p77 = scmp.eq.s32.totalorder %s18, 1
    %p78 = por %p76, %p77
    %p79 = scmp.ne.s32.totalorder %s70, %s71
    %p80 = scmp.eq.s32.totalorder %s18, 0
    %p81 = por %p79, %p80
    %p82 = scmp.ne.s32.totalorder %s70, %s71
    %p83 = scmp.eq.s32.totalorder %s19, 1
    %p84 = por %p82, %p83
    %p86 = scmp.ne.s32.totalorder %s71, %s85
    %p87 = scmp.eq.s32.totalorder %s19, 0
    %p88 = por %p86, %p87
    %s90 = sadd.s32 %s89, 1
    %p93 = scmp.eq.s32.totalorder %s13, 1
    %p94 = scmp.ne.s32.totalorder %s89, %s91
    %p95 = scmp.eq.s32.totalorder %s13, 0
    %p96 = por %p94, %p95
    %p97 = scmp.ne.s32.totalorder %s89, %s91
    %p98 = scmp.eq.s32.totalorder %s18, 1
    %p99 = por %p97, %p98
    %p100 = scmp.ne.s32.totalorder %s91, %s92
    %p101 = scmp.eq.s32.totalorder %s18, 0
    %p102 = por %p100, %p101
    %p103 = scmp.ne.s32.totalorder %s91, %s92
    %p104 = scmp.eq.s32.totalorder %s19, 1
    %p105 = por %p103, %p104
    %p107 = scmp.ne.s32.totalorder %s92, %s106
    %p108 = scmp.eq.s32.totalorder %s19, 0
    %p109 = por %p107, %p108
    %s111 = sadd.s32 %s110, 1
    %p114 = scmp.eq.s32.totalorder %s13, 1
    %p115 = scmp.ne.s32.totalorder %s110, %s112
    %p116 = scmp.eq.s32.totalorder %s13, 0
    %p117 = por %p115, %p116
    %p118 = scmp.ne.s32.totalorder %s110, %s112
    %p119 = scmp.eq.s32.totalorder %s18, 1
    %p120 = por %p118, %p119
    %p121 = scmp.ne.s32.totalorder %s112, %s113
    %p122 = scmp.eq.s32.totalorder %s18, 0
    %p123 = por %p121, %p122
    %p124 = scmp.ne.s32.totalorder %s112, %s113
    %p125 = scmp.eq.s32.totalorder %s19, 1
    %p126 = por %p124, %p125
    %p128 = scmp.ne.s32.totalorder %s113, %s127
    %p129 = scmp.eq.s32.totalorder %s19, 0
    %p130 = por %p128, %p129
    %s132 = sadd.s32 %s131, 1
    %p135 = scmp.eq.s32.totalorder %s13, 1
    %p136 = scmp.ne.s32.totalorder %s131, %s133
    %p137 = scmp.eq.s32.totalorder %s13, 0
    %p138 = por %p136, %p137
    %p139 = scmp.ne.s32.totalorder %s131, %s133
    %p140 = scmp.eq.s32.totalorder %s18, 1
    %p141 = por %p139, %p140
    %p142 = scmp.ne.s32.totalorder %s133, %s134
    %p143 = scmp.eq.s32.totalorder %s18, 0
    %p144 = por %p142, %p143
    %p145 = scmp.ne.s32.totalorder %s133, %s134
    %p146 = scmp.eq.s32.totalorder %s19, 1
    %p147 = por %p145, %p146
    %p149 = scmp.ne.s32.totalorder %s134, %s148
    %p150 = scmp.eq.s32.totalorder %s19, 0
    %p151 = por %p149, %p150
    %s153 = sadd.s32 %s152, 1
    %p156 = scmp.eq.s32.totalorder %s13, 1
    %p157 = scmp.ne.s32.totalorder %s152, %s154
    %p158 = scmp.eq.s32.totalorder %s13, 0
    %p159 = por %p157, %p158
    %p160 = scmp.ne.s32.totalorder %s152, %s154
    %p161 = scmp.eq.s32.totalorder %s18, 1
    %p162 = por %p160, %p161
    %p163 = scmp.ne.s32.totalorder %s154, %s155
    %p164 = scmp.eq.s32.totalorder %s18, 0
    %p165 = por %p163, %p164
    %p166 = scmp.ne.s32.totalorder %s154, %s155
    %p167 = scmp.eq.s32.totalorder %s19, 1
    %p168 = por %p166, %p167
    %p170 = scmp.ne.s32.totalorder %s155, %s169
    %p171 = scmp.eq.s32.totalorder %s19, 0
    %p172 = por %p170, %p171
    %s173 = ssub.s32 %s13, %s20
    %p174 = scmp.eq.s32.totalorder %s173, 0
    %s176 = sadd.s32 %s175, 1
    %s177 = scalar_select %p174, %s175, %s176
    %p180 = pneg %p174
    %p181 = scmp.eq.s32.totalorder %s13, 1
    %p182 = por %p180, %p181
    %p183 = scmp.ne.s32.totalorder %s175, %s178
    %p184 = scmp.eq.s32.totalorder %s13, 0
    %p185 = por %p183, %p184
    %p186 = scmp.ne.s32.totalorder %s175, %s178
    %p187 = scmp.eq.s32.totalorder %s18, 1
    %p188 = por %p186, %p187
    %p189 = scmp.ne.s32.totalorder %s178, %s179
    %p190 = scmp.eq.s32.totalorder %s18, 0
    %p191 = por %p189, %p190
    %p192 = scmp.ne.s32.totalorder %s178, %s179
    %p193 = scmp.eq.s32.totalorder %s19, 1
    %p194 = por %p192, %p193
    %p196 = scmp.ne.s32.totalorder %s179, %s195
    %p197 = scmp.eq.s32.totalorder %s19, 0
    %p198 = por %p196, %p197
    %p199 = scmp.le.s32.totalorder 1, %s13
    %p200 = scmp.lt.s32.totalorder %s13, 3
    %p201 = pnand %p199, %p200
    %p202 = pneg %p201
    // Predicated region
    $region9: #{net_forward.8} parent=5 // pred_check
      _
    $region10: #{net_forward.8} parent=5 // pred_check_branch
      %204 = sbr.rel (%p201) target = $region12
    $region11: #{net_forward.8} parent=5 // pred_region
      %s205 = ssub.s32 %s13, 1
      // Predicated region
      $region13: #{net_forward.8} parent=11 // pred_check
        %p206 = pneg %p60
      $region14: #{net_forward.8} parent=11 // pred_check_branch
        %208 = sbr.rel (%p206) target = $region16
      $region15: #{net_forward.8} parent=11 // pred_region
        _
      $region16: #{net_forward.8} parent=11 // pred_fallthru
        _
      // Predicated region
      $region17: #{net_forward.8} parent=11 // pred_check
        %p209 = pneg %p81
      $region18: #{net_forward.8} parent=11 // pred_check_branch
        %211 = sbr.rel (%p209) target = $region20
      $region19: #{net_forward.8} parent=11 // pred_region
        _
      $region20: #{net_forward.8} parent=11 // pred_fallthru
        _
      // Predicated region
      $region21: #{net_forward.8} parent=11 // pred_check
        %p212 = pneg %p102
      $region22: #{net_forward.8} parent=11 // pred_check_branch
        %214 = sbr.rel (%p212) target = $region24
      $region23: #{net_forward.8} parent=11 // pred_region
        _
      $region24: #{net_forward.8} parent=11 // pred_fallthru
        _
      // Predicated region
      $region25: #{net_forward.8} parent=11 // pred_check
        %p215 = pneg %p123
      $region26: #{net_forward.8} parent=11 // pred_check_branch
        %217 = sbr.rel (%p215) target = $region28
      $region27: #{net_forward.8} parent=11 // pred_region
        _
      $region28: #{net_forward.8} parent=11 // pred_fallthru
        _
      // Predicated region
      $region29: #{net_forward.8} parent=11 // pred_check
        %p218 = pneg %p144
      $region30: #{net_forward.8} parent=11 // pred_check_branch
        %220 = sbr.rel (%p218) target = $region32
      $region31: #{net_forward.8} parent=11 // pred_region
        _
      $region32: #{net_forward.8} parent=11 // pred_fallthru
        _
      // Predicated region
      $region33: #{net_forward.8} parent=11 // pred_check
        %p221 = pneg %p165
      $region34: #{net_forward.8} parent=11 // pred_check_branch
        %223 = sbr.rel (%p221) target = $region36
      $region35: #{net_forward.8} parent=11 // pred_region
        _
      $region36: #{net_forward.8} parent=11 // pred_fallthru
        _
    $region12: #{net_forward.8} parent=5 // pred_fallthru
      _
    %p224 = scmp.lt.s32.totalorder %s13, 2
    // Predicated region
    $region37: #{net_forward.8} parent=5 // pred_check
      %p225 = pneg %p224
    $region38: #{net_forward.8} parent=5 // pred_check_branch
      %227 = sbr.rel (%p225) target = $region40
    $region39: #{net_forward.8} parent=5 // pred_region
      // Predicated region
      $region41: #{net_forward.8} parent=39 // pred_check
        %p228 = pneg %p33
      $region42: #{net_forward.8} parent=39 // pred_check_branch
        %230 = sbr.rel (%p228) target = $region44
      $region43: #{net_forward.8} parent=39 // pred_region
        %p231 = scmp.lt.s32.totalorder %s13, 1
        %s232 = scalar_select %p231, %s13, 1
        %s233 = smul.addr %s232, 4
        %s234 = smul.addr %s233, 4
        %s235 = scalar_lea.vmem %s0, %s234
      $region44: #{net_forward.8} parent=39 // pred_fallthru
        _
    $region40: #{net_forward.8} parent=5 // pred_fallthru
      _
    %p236 = scmp.le.s32.totalorder 1, %s13
    %p237 = scmp.lt.s32.totalorder %s13, 3
    %p238 = pnand %p236, %p237
    %p239 = pneg %p238
    // Predicated region
    $region45: #{net_forward.8} parent=5 // pred_check
      _
    $region46: #{net_forward.8} parent=5 // pred_check_branch
      %241 = sbr.rel (%p238) target = $region48
    $region47: #{net_forward.8} parent=5 // pred_region
      %s242 = ssub.s32 %s13, 1
      %p243 = scmp.lt.s32.totalorder %s18, 1
      %s244 = scalar_select %p243, %s18, 1
      %s245 = smul.addr %s244, 4
      %s246 = smul.addr %s245, 4
      %s247 = scalar_lea.vmem %s0, %s246
      %p248 = pneg %p39
      %p249 = pneg %p36
      %p250 = pneg %p60
      %p251 = pneg %p57
      %p252 = pneg %p81
      %p253 = pneg %p78
      %p254 = pneg %p102
      %p255 = pneg %p99
      %p256 = pneg %p123
      %p257 = pneg %p120
      %p258 = pneg %p144
      %p259 = pneg %p141
      %p260 = pneg %p165
      %p261 = pneg %p162
      %p262 = pneg %p191
      %p263 = pneg %p188
      %p264 = scmp.lt.s32.totalorder %s18, 1
      %s265 = scalar_select %p264, %s18, 1
      %s266 = smul.addr %s265, 2
      %s267 = smul.addr %s266, 4
      %s268 = scalar_lea.vmem %s7, %s267
      %p269 = scmp.lt.s32.totalorder %s18, 1
      %s270 = scalar_select %p269, %s18, 1
      %s271 = smul.addr %s270, 4
      %s272 = smul.addr %s271, 4
      %s273 = scalar_lea.vmem %s0, %s272
      %p274 = scmp.lt.s32.totalorder %s18, 1
      %s275 = scalar_select %p274, %s18, 1
      %s276 = smul.addr %s275, 2
      %s277 = smul.addr %s276, 4
      %s278 = scalar_lea.vmem %s7, %s277
      %v280 = vld [vmem:[%s273] sm:$0xf]
      %v281 = vld [vmem:[%s273 + $0x4] sm:$0xf]
      %v282 = vld [vmem:[%s273 + $0x8] sm:$0xf]
      %v283 = vld [vmem:[%s273 + $0xc] sm:$0xf]
      %v284 = vld [vmem:[%s1] sm:$0xff]
      %v285 = vld [vmem:[%s1 + $0x8] sm:$0xff]
      %v290 = vunpack.c.l.b16 %v280
      %v291 = vunpack.c.l.b16 %v281
      %v292 = vunpack.c.l.b16 %v282
      %v293 = vunpack.c.l.b16 %v283
      %v294 = vpack.c.b16 %v291, %v290
      %v295 = vpack.c.b16 %v293, %v292
      %v298 = vunpack.c.l.b16 %v284
      %v299 = vunpack.c.h.b16 %v284
      %v300 = vunpack.c.l.b16 %v285
      %v301 = vunpack.c.h.b16 %v285
      %v302 = vpack.c.b16 %v300, %v298
      %v303 = vpack.c.b16 %v301, %v299
      %vm306 = vcmask 130048
      %v308 = vsel %vm306, %v294, 0
      %v311 = vsel %vm306, %v295, 0
      %313 = vmatprep.subr.bf16.mxu0 %v303
      %314 = vmatpush1.bf16.msra.mxu0 %v302
      %315 = vmatprep.subr.bf16.mxu0 0
      %316 = vmatpush1.bf16.msra.mxu0 0
      %317 = vmatprep.subr.bf16.mxu0 0
      %318 = vmatpush1.bf16.msra.mxu0 0
      %319 = vmatprep.subr.bf16.mxu0 0
      %320 = vmatpush1.bf16.msra.mxu0 0
      %321 = vmatprep.subr.bf16.mxu0 0
      %322 = vmatpush1.bf16.msra.mxu0 0
      %323 = vmatprep.subr.bf16.mxu0 0
      %324 = vmatpush1.bf16.msra.mxu0 0
      %325 = vmatprep.subr.bf16.mxu0 0
      %326 = vmatpush1.bf16.msra.mxu0 0
      %327 = vmatprep.subr.bf16.mxu0 0
      %328 = vmatpush1.bf16.msra.mxu0 0
      %329 = vmatprep.subr.bf16.mxu0 0
      %330 = vmatpush1.bf16.msra.mxu0 0
      %331 = vmatprep.subr.bf16.mxu0 0
      %332 = vmatpush1.bf16.msra.mxu0 0
      %333 = vmatprep.subr.bf16.mxu0 0
      %334 = vmatpush1.bf16.msra.mxu0 0
      %335 = vmatprep.subr.bf16.mxu0 0
      %336 = vmatpush1.bf16.msra.mxu0 0
      %337 = vmatprep.subr.bf16.mxu0 0
      %338 = vmatpush1.bf16.msra.mxu0 0
      %339 = vmatprep.subr.bf16.mxu0 0
      %340 = vmatpush1.bf16.msra.mxu0 0
      %341 = vmatprep.subr.bf16.mxu0 0
      %342 = vmatpush1.bf16.msra.mxu0 0
      %343 = vmatprep.subr.bf16.mxu0 0
      %344 = vmatpush1.bf16.msra.mxu0 0
      %345 = vmatprep.mubr.bf16.mxu0 0
      %346 = vmatmul.mubr.bf16.gmra.mrb[0].mxu0 %v308
      %v347 = vpop.f32.mrb[0].mxu0
      %v348 = vadd.f32 0.0, %v347
      %v349 = vpop.f32.mrb[0].mxu0
      %v350 = vadd.f32 0.0, %v349
      %v351 = vpop.f32.mrb[0].mxu0
      %v352 = vadd.f32 0.0, %v351
      %v353 = vpop.f32.mrb[0].mxu0
      %v354 = vadd.f32 0.0, %v353
      %355 = vmatprep.mubr.bf16.mxu0 0
      %356 = vmatmul.mubr.bf16.gmra.mrb[0].mxu0 %v311
      %v357 = vpop.f32.mrb[0].mxu0
      %v358 = vadd.f32 0.0, %v357
      %v359 = vpop.f32.mrb[0].mxu0
      %v360 = vadd.f32 0.0, %v359
      %v361 = vpop.f32.mrb[0].mxu0
      %v362 = vadd.f32 0.0, %v361
      %v363 = vpop.f32.mrb[0].mxu0
      %v364 = vadd.f32 0.0, %v363
      %365 = vdwg.mxu0
      %v366 = vpack.c.bf16 %v352, %v348
      %v367 = vpack.c.bf16 %v354, %v350
      %v368 = vpack.c.bf16 %v362, %v358
      %v369 = vpack.c.bf16 %v364, %v360
      %370 = vst [vmem:[#allocation2] sm:$0xff] %v366
      %vm371 = vcmask 359424
      %372 = vst.msk [vmem:[#allocation2 + $0x8] sm:$0xff] %vm371, %v367
      %373 = vst [vmem:[#allocation2 + $0x10] sm:$0xff] %v368
      %374 = vst.msk [vmem:[#allocation2 + $0x18] sm:$0xff] %vm371, %v369
      %v375 = vld [vmem:[#allocation2] sm:$0xff]
      %v376 = vld [vmem:[#allocation2 + $0x8] sm:$0xff]
      %v377 = vld [vmem:[#allocation2 + $0x10] sm:$0xff]
      %v378 = vld [vmem:[#allocation2 + $0x18] sm:$0xff]
      %379 = vst [vmem:[#allocation3] sm:$0xff] %v375
      %vm380 = vcmask 179200
      %381 = vst.msk [vmem:[#allocation3 + $0x8] sm:$0xff] %vm380, %v376
      %382 = vst [vmem:[#allocation3 + $0x10] sm:$0xff] %v377
      %383 = vst.msk [vmem:[#allocation3 + $0x18] sm:$0xff] %vm380, %v378
      %v384 = vld [vmem:[#allocation2] sm:$0xff]
      %v385 = vld [vmem:[#allocation2 + $0x8] sm:$0xff]
      %v386 = vld [vmem:[#allocation2 + $0x10] sm:$0xff]
      %v387 = vld [vmem:[#allocation2 + $0x18] sm:$0xff]
      %392 = vrot.lane.b32.xlu0 %v384, 127
      %v393 = vpop.permute.xlu0 %392
      %394 = vrot.lane.b32.xlu0 %v385, 127
      %v395 = vpop.permute.xlu0 %394
      %396 = vrot.lane.b32.xlu0 %v386, 127
      %v397 = vpop.permute.xlu0 %396
      %398 = vrot.lane.b32.xlu0 %v387, 127
      %v399 = vpop.permute.xlu0 %398
      %vm400 = vcmask 1039360
      %v401 = vsel %vm400, %v393, %v395
      %v402 = vsel %vm400, %v397, %v399
      %407 = vst [vmem:[#allocation3 + $0x20] sm:$0xff] %v401
      %408 = vst.msk [vmem:[#allocation3 + $0x28] sm:$0xff] %vm380, %v395
      %409 = vst [vmem:[#allocation3 + $0x30] sm:$0xff] %v402
      %410 = vst.msk [vmem:[#allocation3 + $0x38] sm:$0xff] %vm380, %v399
      %v411 = vld [vmem:[#allocation2] sm:$0xff]
      %v412 = vld [vmem:[#allocation2 + $0x8] sm:$0xff]
      %v413 = vld [vmem:[#allocation2 + $0x10] sm:$0xff]
      %v414 = vld [vmem:[#allocation2 + $0x18] sm:$0xff]
      %419 = vrot.lane.b32.xlu0 %v411, 126
      %v420 = vpop.permute.xlu0 %419
      %421 = vrot.lane.b32.xlu0 %v412, 126
      %v422 = vpop.permute.xlu0 %421
      %423 = vrot.lane.b32.xlu0 %v413, 126
      %v424 = vpop.permute.xlu0 %423
      %425 = vrot.lane.b32.xlu0 %v414, 126
      %v426 = vpop.permute.xlu0 %425
      %vm427 = vcmask 1031168
      %v428 = vsel %vm427, %v420, %v422
      %v429 = vsel %vm427, %v424, %v426
      %434 = vst [vmem:[#allocation3 + $0x40] sm:$0xff] %v428
      %435 = vst.msk [vmem:[#allocation3 + $0x48] sm:$0xff] %vm380, %v422
      %436 = vst [vmem:[#allocation3 + $0x50] sm:$0xff] %v429
      %437 = vst.msk [vmem:[#allocation3 + $0x58] sm:$0xff] %vm380, %v426
      %v438 = vld [vmem:[#allocation2] sm:$0xff]
      %v439 = vld [vmem:[#allocation2 + $0x8] sm:$0xff]
      %v440 = vld [vmem:[#allocation2 + $0x10] sm:$0xff]
      %v441 = vld [vmem:[#allocation2 + $0x18] sm:$0xff]
      %446 = vrot.lane.b32.xlu0 %v438, 118
      %v447 = vpop.permute.xlu0 %446
      %448 = vrot.lane.b32.xlu0 %v439, 118
      %v449 = vpop.permute.xlu0 %448
      %450 = vrot.lane.b32.xlu0 %v440, 118
      %v451 = vpop.permute.xlu0 %450
      %452 = vrot.lane.b32.xlu0 %v441, 118
      %v453 = vpop.permute.xlu0 %452
      %vm454 = vcmask 965632
      %v455 = vsel %vm454, %v447, %v449
      %v456 = vsel %vm454, %v451, %v453
      %461 = vst [vmem:[#allocation3 + $0x60] sm:$0xff] %v455
      %462 = vst.msk [vmem:[#allocation3 + $0x68] sm:$0xff] %vm380, %v449
      %463 = vst [vmem:[#allocation3 + $0x70] sm:$0xff] %v456
      %464 = vst.msk [vmem:[#allocation3 + $0x78] sm:$0xff] %vm380, %v453
      %v465 = vld [vmem:[#allocation2] sm:$0xff]
      %v466 = vld [vmem:[#allocation2 + $0x8] sm:$0xff]
      %v467 = vld [vmem:[#allocation2 + $0x10] sm:$0xff]
      %v468 = vld [vmem:[#allocation2 + $0x18] sm:$0xff]
      %473 = vrot.lane.b32.xlu0 %v465, 117
      %v474 = vpop.permute.xlu0 %473
      %475 = vrot.lane.b32.xlu0 %v466, 117
      %v476 = vpop.permute.xlu0 %475
      %477 = vrot.lane.b32.xlu0 %v467, 117
      %v478 = vpop.permute.xlu0 %477
      %479 = vrot.lane.b32.xlu0 %v468, 117
      %v480 = vpop.permute.xlu0 %479
      %vm481 = vcmask 957440
      %v482 = vsel %vm481, %v474, %v476
      %v483 = vsel %vm481, %v478, %v480
      %488 = vst [vmem:[#allocation3 + $0x80] sm:$0xff] %v482
      %489 = vst.msk [vmem:[#allocation3 + $0x88] sm:$0xff] %vm380, %v476
      %490 = vst [vmem:[#allocation3 + $0x90] sm:$0xff] %v483
      %491 = vst.msk [vmem:[#allocation3 + $0x98] sm:$0xff] %vm380, %v480
      %v492 = vld [vmem:[#allocation2] sm:$0xff]
      %v493 = vld [vmem:[#allocation2 + $0x8] sm:$0xff]
      %v494 = vld [vmem:[#allocation2 + $0x10] sm:$0xff]
      %v495 = vld [vmem:[#allocation2 + $0x18] sm:$0xff]
      %500 = vrot.lane.b32.xlu0 %v492, 116
      %v501 = vpop.permute.xlu0 %500
      %502 = vrot.lane.b32.xlu0 %v493, 116
      %v503 = vpop.permute.xlu0 %502
      %504 = vrot.lane.b32.xlu0 %v494, 116
      %v505 = vpop.permute.xlu0 %504
      %506 = vrot.lane.b32.xlu0 %v495, 116
      %v507 = vpop.permute.xlu0 %506
      %vm508 = vcmask 949248
      %v509 = vsel %vm508, %v501, %v503
      %v510 = vsel %vm508, %v505, %v507
      %515 = vst [vmem:[#allocation3 + $0xa0] sm:$0xff] %v509
      %516 = vst.msk [vmem:[#allocation3 + $0xa8] sm:$0xff] %vm380, %v503
      %517 = vst [vmem:[#allocation3 + $0xb0] sm:$0xff] %v510
      %518 = vst.msk [vmem:[#allocation3 + $0xb8] sm:$0xff] %vm380, %v507
      %v519 = vld [vmem:[#allocation2] sm:$0xff]
      %v520 = vld [vmem:[#allocation2 + $0x8] sm:$0xff]
      %v521 = vld [vmem:[#allocation2 + $0x10] sm:$0xff]
      %v522 = vld [vmem:[#allocation2 + $0x18] sm:$0xff]
      %527 = vrot.lane.b32.xlu0 %v519, 108
      %v528 = vpop.permute.xlu0 %527
      %529 = vrot.lane.b32.xlu0 %v520, 108
      %v530 = vpop.permute.xlu0 %529
      %531 = vrot.lane.b32.xlu0 %v521, 108
      %v532 = vpop.permute.xlu0 %531
      %533 = vrot.lane.b32.xlu0 %v522, 108
      %v534 = vpop.permute.xlu0 %533
      %vm535 = vcmask 883712
      %v536 = vsel %vm535, %v528, %v530
      %v537 = vsel %vm535, %v532, %v534
      %542 = vst [vmem:[#allocation3 + $0xc0] sm:$0xff] %v536
      %543 = vst.msk [vmem:[#allocation3 + $0xc8] sm:$0xff] %vm380, %v530
      %544 = vst [vmem:[#allocation3 + $0xd0] sm:$0xff] %v537
      %545 = vst.msk [vmem:[#allocation3 + $0xd8] sm:$0xff] %vm380, %v534
      %v546 = vld [vmem:[#allocation2] sm:$0xff]
      %v547 = vld [vmem:[#allocation2 + $0x8] sm:$0xff]
      %v548 = vld [vmem:[#allocation2 + $0x10] sm:$0xff]
      %v549 = vld [vmem:[#allocation2 + $0x18] sm:$0xff]
      %554 = vrot.lane.b32.xlu0 %v546, 107
      %v555 = vpop.permute.xlu0 %554
      %556 = vrot.lane.b32.xlu0 %v547, 107
      %v557 = vpop.permute.xlu0 %556
      %558 = vrot.lane.b32.xlu0 %v548, 107
      %v559 = vpop.permute.xlu0 %558
      %560 = vrot.lane.b32.xlu0 %v549, 107
      %v561 = vpop.permute.xlu0 %560
      %vm562 = vcmask 875520
      %v563 = vsel %vm562, %v555, %v557
      %v564 = vsel %vm562, %v559, %v561
      %569 = vst [vmem:[#allocation3 + $0xe0] sm:$0xff] %v563
      %570 = vst.msk [vmem:[#allocation3 + $0xe8] sm:$0xff] %vm380, %v557
      %571 = vst [vmem:[#allocation3 + $0xf0] sm:$0xff] %v564
      %572 = vst.msk [vmem:[#allocation3 + $0xf8] sm:$0xff] %vm380, %v561
      %v573 = vld [vmem:[#allocation2] sm:$0xff]
      %v574 = vld [vmem:[#allocation2 + $0x8] sm:$0xff]
      %v575 = vld [vmem:[#allocation2 + $0x10] sm:$0xff]
      %v576 = vld [vmem:[#allocation2 + $0x18] sm:$0xff]
      %581 = vrot.lane.b32.xlu0 %v573, 106
      %v582 = vpop.permute.xlu0 %581
      %583 = vrot.lane.b32.xlu0 %v574, 106
      %v584 = vpop.permute.xlu0 %583
      %585 = vrot.lane.b32.xlu0 %v575, 106
      %v586 = vpop.permute.xlu0 %585
      %587 = vrot.lane.b32.xlu0 %v576, 106
      %v588 = vpop.permute.xlu0 %587
      %vm589 = vcmask 867328
      %v590 = vsel %vm589, %v582, %v584
      %v591 = vsel %vm589, %v586, %v588
      %596 = vst [vmem:[#allocation3 + $0x100] sm:$0xff] %v590
      %597 = vst.msk [vmem:[#allocation3 + $0x108] sm:$0xff] %vm380, %v584
      %598 = vst [vmem:[#allocation3 + $0x110] sm:$0xff] %v591
      %599 = vst.msk [vmem:[#allocation3 + $0x118] sm:$0xff] %vm380, %v588
      %v600 = vld [vmem:[%s2] sm:$0xff]
      %v601 = vld [vmem:[%s2 + $0x8] sm:$0xf]
      %v602 = vld [vmem:[%s2 + $0xc] sm:$0xff]
      %v603 = vld [vmem:[%s2 + $0x14] sm:$0xf]
      %v604 = vld [vmem:[#allocation3] sm:$0xff]
      %v605 = vld [vmem:[#allocation3 + $0x8] sm:$0xff]
      %v606 = vld [vmem:[#allocation3 + $0x10] sm:$0xff]
      %v607 = vld [vmem:[#allocation3 + $0x18] sm:$0xff]
      %v608 = vld [vmem:[#allocation3 + $0x20] sm:$0xff]
      %v609 = vld [vmem:[#allocation3 + $0x28] sm:$0xff]
      %v610 = vld [vmem:[#allocation3 + $0x30] sm:$0xff]
      %v611 = vld [vmem:[#allocation3 + $0x38] sm:$0xff]
      %v612 = vld [vmem:[#allocation3 + $0x40] sm:$0xff]
      %v613 = vld [vmem:[#allocation3 + $0x48] sm:$0xff]
      %v614 = vld [vmem:[#allocation3 + $0x50] sm:$0xff]
      %v615 = vld [vmem:[#allocation3 + $0x58] sm:$0xff]
      %v616 = vld [vmem:[#allocation3 + $0x60] sm:$0xff]
      %v617 = vld [vmem:[#allocation3 + $0x68] sm:$0xff]
      %v618 = vld [vmem:[#allocation3 + $0x70] sm:$0xff]
      %v619 = vld [vmem:[#allocation3 + $0x78] sm:$0xff]
      %v620 = vld [vmem:[#allocation3 + $0x80] sm:$0xff]
      %v621 = vld [vmem:[#allocation3 + $0x88] sm:$0xff]
      %v622 = vld [vmem:[#allocation3 + $0x90] sm:$0xff]
      %v623 = vld [vmem:[#allocation3 + $0x98] sm:$0xff]
      %v624 = vld [vmem:[#allocation3 + $0xa0] sm:$0xff]
      %v625 = vld [vmem:[#allocation3 + $0xa8] sm:$0xff]
      %v626 = vld [vmem:[#allocation3 + $0xb0] sm:$0xff]
      %v627 = vld [vmem:[#allocation3 + $0xb8] sm:$0xff]
      %v628 = vld [vmem:[#allocation3 + $0xc0] sm:$0xff]
      %v629 = vld [vmem:[#allocation3 + $0xc8] sm:$0xff]
      %v630 = vld [vmem:[#allocation3 + $0xd0] sm:$0xff]
      %v631 = vld [vmem:[#allocation3 + $0xd8] sm:$0xff]
      %v632 = vld [vmem:[#allocation3 + $0xe0] sm:$0xff]
      %v633 = vld [vmem:[#allocation3 + $0xe8] sm:$0xff]
      %v634 = vld [vmem:[#allocation3 + $0xf0] sm:$0xff]
      %v635 = vld [vmem:[#allocation3 + $0xf8] sm:$0xff]
      %v636 = vld [vmem:[#allocation3 + $0x100] sm:$0xff]
      %v637 = vld [vmem:[#allocation3 + $0x108] sm:$0xff]
      %v638 = vld [vmem:[#allocation3 + $0x110] sm:$0xff]
      %v639 = vld [vmem:[#allocation3 + $0x118] sm:$0xff]
      %v640 = vld [vmem:[%s3] sm:$0xff]
      %v641 = vld [vmem:[%s3 + $0x8] sm:$0xff]
      %643 = vset.pattern.permute.xlu0 0
      %644 = vperm.xlu0 %643, %v640
      %v645 = vpop.permute.xlu0 %644
      %648 = vset.pattern.permute.xlu0 0
      %649 = vperm.xlu0 %648, %v641
      %v650 = vpop.permute.xlu0 %649
      %v656 = vunpack.c.l.b16 %v600
      %v657 = vunpack.c.h.b16 %v600
      %v658 = vunpack.c.l.b16 %v601
      %v659 = vunpack.c.l.b16 %v602
      %v660 = vunpack.c.h.b16 %v602
      %v661 = vunpack.c.l.b16 %v603
      %v662 = vpack.c.b16 %v659, %v656
      %v663 = vpack.c.b16 %v660, %v657
      %v664 = vpack.c.b16 %v661, %v658
      %vm667 = vcmask 261120
      %v669 = vsel %vm667, %v664, 0
      %671 = vmatprep.subr.bf16.mxu0 %v605
      %672 = vmatpush1.bf16.msra.mxu0 %v604
      %673 = vmatprep.subr.bf16.mxu0 %v607
      %674 = vmatpush1.bf16.msra.mxu0 %v606
      %675 = vmatprep.subr.bf16.mxu0 %v609
      %676 = vmatpush1.bf16.msra.mxu0 %v608
      %677 = vmatprep.subr.bf16.mxu0 %v611
      %678 = vmatpush1.bf16.msra.mxu0 %v610
      %679 = vmatprep.subr.bf16.mxu0 %v613
      %680 = vmatpush1.bf16.msra.mxu0 %v612
      %681 = vmatprep.subr.bf16.mxu0 %v615
      %682 = vmatpush1.bf16.msra.mxu0 %v614
      %683 = vmatprep.subr.bf16.mxu0 %v617
      %684 = vmatpush1.bf16.msra.mxu0 %v616
      %685 = vmatprep.subr.bf16.mxu0 %v619
      %686 = vmatpush1.bf16.msra.mxu0 %v618
      %687 = vmatprep.subr.bf16.mxu0 %v621
      %688 = vmatpush1.bf16.msra.mxu0 %v620
      %689 = vmatprep.subr.bf16.mxu0 %v623
      %690 = vmatpush1.bf16.msra.mxu0 %v622
      %691 = vmatprep.subr.bf16.mxu0 %v625
      %692 = vmatpush1.bf16.msra.mxu0 %v624
      %693 = vmatprep.subr.bf16.mxu0 %v627
      %694 = vmatpush1.bf16.msra.mxu0 %v626
      %695 = vmatprep.subr.bf16.mxu0 %v629
      %696 = vmatpush1.bf16.msra.mxu0 %v628
      %697 = vmatprep.subr.bf16.mxu0 %v631
      %698 = vmatpush1.bf16.msra.mxu0 %v630
      %699 = vmatprep.subr.bf16.mxu0 %v633
      %700 = vmatpush1.bf16.msra.mxu0 %v632
      %701 = vmatprep.subr.bf16.mxu0 %v635
      %702 = vmatpush1.bf16.msra.mxu0 %v634
      %703 = vmatprep.mubr.bf16.mxu0 %v663
      %704 = vmatmul.mubr.bf16.gmra.mrb[0].mxu0 %v662
      %v705 = vpop.f32.mrb[0].mxu0
      %v706 = vadd.f32 %v645, %v705
      %v707 = vpop.f32.mrb[0].mxu0
      %v708 = vadd.f32 %v645, %v707
      %v709 = vpop.f32.mrb[0].mxu0
      %v710 = vadd.f32 %v650, %v709
      %v711 = vpop.f32.mrb[0].mxu0
      %v712 = vadd.f32 %v650, %v711
      %713 = vdwg.mxu0
      %714 = vmatprep.subr.bf16.mxu0 %v637
      %715 = vmatpush1.bf16.msra.mxu0 %v636
      %716 = vmatprep.subr.bf16.mxu0 %v639
      %717 = vmatpush1.bf16.msra.mxu0 %v638
      %718 = vmatprep.subr.bf16.mxu0 0
      %719 = vmatpush1.bf16.msra.mxu0 0
      %720 = vmatprep.subr.bf16.mxu0 0
      %721 = vmatpush1.bf16.msra.mxu0 0
      %722 = vmatprep.subr.bf16.mxu0 0
      %723 = vmatpush1.bf16.msra.mxu0 0
      %724 = vmatprep.subr.bf16.mxu0 0
      %725 = vmatpush1.bf16.msra.mxu0 0
      %726 = vmatprep.subr.bf16.mxu0 0
      %727 = vmatpush1.bf16.msra.mxu0 0
      %728 = vmatprep.subr.bf16.mxu0 0
      %729 = vmatpush1.bf16.msra.mxu0 0
      %730 = vmatprep.subr.bf16.mxu0 0
      %731 = vmatpush1.bf16.msra.mxu0 0
      %732 = vmatprep.subr.bf16.mxu0 0
      %733 = vmatpush1.bf16.msra.mxu0 0
      %734 = vmatprep.subr.bf16.mxu0 0
      %735 = vmatpush1.bf16.msra.mxu0 0
      %736 = vmatprep.subr.bf16.mxu0 0
      %737 = vmatpush1.bf16.msra.mxu0 0
      %738 = vmatprep.subr.bf16.mxu0 0
      %739 = vmatpush1.bf16.msra.mxu0 0
      %740 = vmatprep.subr.bf16.mxu0 0
      %741 = vmatpush1.bf16.msra.mxu0 0
      %742 = vmatprep.subr.bf16.mxu0 0
      %743 = vmatpush1.bf16.msra.mxu0 0
      %744 = vmatprep.subr.bf16.mxu0 0
      %745 = vmatpush1.bf16.msra.mxu0 0
      %746 = vmatprep.mubr.bf16.mxu0 0
      %747 = vmatmul.mubr.bf16.gmra.mrb[0].mxu0 %v669
      %v748 = vpop.f32.mrb[0].mxu0
      %v749 = vadd.f32 %v706, %v748
      %v750 = vpop.f32.mrb[0].mxu0
      %v751 = vadd.f32 %v708, %v750
      %v752 = vpop.f32.mrb[0].mxu0
      %v753 = vadd.f32 %v710, %v752
      %v754 = vpop.f32.mrb[0].mxu0
      %v755 = vadd.f32 %v712, %v754
      %756 = vdwg.mxu0
      %v757 = vmax.f32 %v749, 0.0
      %v758 = vmax.f32 %v751, 0.0
      %v759 = vmax.f32 %v753, 0.0
      %v760 = vmax.f32 %v755, 0.0
      %v761 = vld [vmem:[%s6] sm:$0x3]
      %v763 = vlaneseq
      %v764 = vshrl.u32 %v763, 7
      %v765 = vsub.s32 0, %v764
      %v766 = vrot.slane %v761, %v765
      %v767 = vlaneseq
      %v768 = vshrl.u32 %v767, 7
      %v769 = vsub.s32 1, %v768
      %v770 = vrot.slane %v761, %v769
      %v773 = vmul.f32 %v757, %v766
      %v774 = vmul.f32 %v758, %v770
      %v775 = vmul.f32 %v759, %v766
      %v776 = vmul.f32 %v760, %v770
      %v777 = vpack.c.bf16 %v775, %v773
      %v778 = vpack.c.bf16 %v776, %v774
      %779 = vst [vmem:[#allocation5] sm:$0xff] %v777
      %780 = vst.msk [vmem:[#allocation5 + $0x8] sm:$0xff] %vm380, %v778
      %v781 = vld [vmem:[#allocation5] sm:$0xff]
      %782 = vst [vmem:[#allocation4] sm:$0xff] %v781
      %v783 = vld [vmem:[#allocation5] sm:$0xff]
      %v784 = vld [vmem:[#allocation5 + $0x8] sm:$0xff]
      %787 = vrot.lane.b32.xlu0 %v783, 127
      %v788 = vpop.permute.xlu0 %787
      %789 = vrot.lane.b32.xlu0 %v784, 127
      %v790 = vpop.permute.xlu0 %789
      %v791 = vsel %vm400, %v788, %v790
      %793 = vst [vmem:[#allocation4 + $0x8] sm:$0xff] %v791
      %v794 = vld [vmem:[#allocation5] sm:$0xff]
      %v795 = vld [vmem:[#allocation5 + $0x8] sm:$0xff]
      %798 = vrot.lane.b32.xlu0 %v794, 126
      %v799 = vpop.permute.xlu0 %798
      %800 = vrot.lane.b32.xlu0 %v795, 126
      %v801 = vpop.permute.xlu0 %800
      %v802 = vsel %vm427, %v799, %v801
      %804 = vst [vmem:[#allocation4 + $0x10] sm:$0xff] %v802
      %v805 = vld [vmem:[#allocation5] sm:$0xff]
      %v806 = vld [vmem:[#allocation5 + $0x8] sm:$0xff]
      %809 = vrot.lane.b32.xlu0 %v805, 118
      %v810 = vpop.permute.xlu0 %809
      %811 = vrot.lane.b32.xlu0 %v806, 118
      %v812 = vpop.permute.xlu0 %811
      %v813 = vsel %vm454, %v810, %v812
      %815 = vst [vmem:[#allocation4 + $0x18] sm:$0xff] %v813
      %v816 = vld [vmem:[#allocation5] sm:$0xff]
      %v817 = vld [vmem:[#allocation5 + $0x8] sm:$0xff]
      %820 = vrot.lane.b32.xlu0 %v816, 117
      %v821 = vpop.permute.xlu0 %820
      %822 = vrot.lane.b32.xlu0 %v817, 117
      %v823 = vpop.permute.xlu0 %822
      %v824 = vsel %vm481, %v821, %v823
      %826 = vst [vmem:[#allocation4 + $0x20] sm:$0xff] %v824
      %v827 = vld [vmem:[#allocation5] sm:$0xff]
      %v828 = vld [vmem:[#allocation5 + $0x8] sm:$0xff]
      %831 = vrot.lane.b32.xlu0 %v827, 116
      %v832 = vpop.permute.xlu0 %831
      %833 = vrot.lane.b32.xlu0 %v828, 116
      %v834 = vpop.permute.xlu0 %833
      %v835 = vsel %vm508, %v832, %v834
      %837 = vst [vmem:[#allocation4 + $0x28] sm:$0xff] %v835
      %v838 = vld [vmem:[#allocation5] sm:$0xff]
      %v839 = vld [vmem:[#allocation5 + $0x8] sm:$0xff]
      %842 = vrot.lane.b32.xlu0 %v838, 108
      %v843 = vpop.permute.xlu0 %842
      %844 = vrot.lane.b32.xlu0 %v839, 108
      %v845 = vpop.permute.xlu0 %844
      %v846 = vsel %vm535, %v843, %v845
      %848 = vst [vmem:[#allocation4 + $0x30] sm:$0xff] %v846
      %v849 = vld [vmem:[#allocation5] sm:$0xff]
      %v850 = vld [vmem:[#allocation5 + $0x8] sm:$0xff]
      %853 = vrot.lane.b32.xlu0 %v849, 107
      %v854 = vpop.permute.xlu0 %853
      %855 = vrot.lane.b32.xlu0 %v850, 107
      %v856 = vpop.permute.xlu0 %855
      %v857 = vsel %vm562, %v854, %v856
      %859 = vst [vmem:[#allocation4 + $0x38] sm:$0xff] %v857
      %v860 = vld [vmem:[#allocation5] sm:$0xff]
      %v861 = vld [vmem:[#allocation5 + $0x8] sm:$0xff]
      %864 = vrot.lane.b32.xlu0 %v860, 106
      %v865 = vpop.permute.xlu0 %864
      %866 = vrot.lane.b32.xlu0 %v861, 106
      %v867 = vpop.permute.xlu0 %866
      %v868 = vsel %vm589, %v865, %v867
      %870 = vst [vmem:[#allocation4 + $0x40] sm:$0xff] %v868
      %v871 = vld [vmem:[%s4] sm:$0xff]
      %v872 = vld [vmem:[%s4 + $0x8] sm:$0xff]
      %v873 = vld [vmem:[#allocation4] sm:$0xff]
      %v874 = vld [vmem:[#allocation4 + $0x8] sm:$0xff]
      %v875 = vld [vmem:[#allocation4 + $0x10] sm:$0xff]
      %v876 = vld [vmem:[#allocation4 + $0x18] sm:$0xff]
      %v877 = vld [vmem:[#allocation4 + $0x20] sm:$0xff]
      %v878 = vld [vmem:[#allocation4 + $0x28] sm:$0xff]
      %v879 = vld [vmem:[#allocation4 + $0x30] sm:$0xff]
      %v880 = vld [vmem:[#allocation4 + $0x38] sm:$0xff]
      %v881 = vld [vmem:[#allocation4 + $0x40] sm:$0xff]
      %v882 = vld [vmem:[%s5] sm:$0xff]
      %v883 = vld [vmem:[%s5 + $0x8] sm:$0xff]
      %885 = vset.pattern.permute.xlu0 0
      %886 = vperm.xlu0 %885, %v882
      %v887 = vpop.permute.xlu0 %886
      %890 = vset.pattern.permute.xlu0 0
      %891 = vperm.xlu0 %890, %v883
      %v892 = vpop.permute.xlu0 %891
      %v896 = vunpack.c.l.b16 %v871
      %v897 = vunpack.c.h.b16 %v871
      %v898 = vunpack.c.l.b16 %v872
      %v899 = vunpack.c.h.b16 %v872
      %v900 = vpack.c.b16 %v898, %v896
      %v901 = vpack.c.b16 %v899, %v897
      %v904 = vsel %vm306, %v901, 0
      %906 = vmatprep.subr.bf16.mxu0 0
      %907 = vmatpush1.bf16.msra.mxu0 %v873
      %908 = vmatprep.subr.bf16.mxu0 0
      %909 = vmatpush1.bf16.msra.mxu0 %v874
      %910 = vmatprep.subr.bf16.mxu0 0
      %911 = vmatpush1.bf16.msra.mxu0 %v875
      %912 = vmatprep.subr.bf16.mxu0 0
      %913 = vmatpush1.bf16.msra.mxu0 %v876
      %914 = vmatprep.subr.bf16.mxu0 0
      %915 = vmatpush1.bf16.msra.mxu0 %v877
      %916 = vmatprep.subr.bf16.mxu0 0
      %917 = vmatpush1.bf16.msra.mxu0 %v878
      %918 = vmatprep.subr.bf16.mxu0 0
      %919 = vmatpush1.bf16.msra.mxu0 %v879
      %920 = vmatprep.subr.bf16.mxu0 0
      %921 = vmatpush1.bf16.msra.mxu0 %v880
      %922 = vmatprep.subr.bf16.mxu0 0
      %923 = vmatpush1.bf16.msra.mxu0 %v881
      %924 = vmatprep.subr.bf16.mxu0 0
      %925 = vmatpush1.bf16.msra.mxu0 0
      %926 = vmatprep.subr.bf16.mxu0 0
      %927 = vmatpush1.bf16.msra.mxu0 0
      %928 = vmatprep.subr.bf16.mxu0 0
      %929 = vmatpush1.bf16.msra.mxu0 0
      %930 = vmatprep.subr.bf16.mxu0 0
      %931 = vmatpush1.bf16.msra.mxu0 0
      %932 = vmatprep.subr.bf16.mxu0 0
      %933 = vmatpush1.bf16.msra.mxu0 0
      %934 = vmatprep.subr.bf16.mxu0 0
      %935 = vmatpush1.bf16.msra.mxu0 0
      %936 = vmatprep.subr.bf16.mxu0 0
      %937 = vmatpush1.bf16.msra.mxu0 0
      %938 = vmatprep.mubr.bf16.mxu0 %v904
      %939 = vmatmul.mubr.bf16.gmra.mrb[0].mxu0 %v900
      %v940 = vpop.f32.mrb[0].mxu0
      %v941 = vadd.f32 %v887, %v940
      %v942 = vpop.f32.mrb[0].mxu0
      %v943 = vpop.f32.mrb[0].mxu0
      %v944 = vadd.f32 %v892, %v943
      %v945 = vpop.f32.mrb[0].mxu0
      %946 = vdwg.mxu0
      %v947 = vmax.f32 %v941, 0.0
      %v948 = vmax.f32 %v944, 0.0
      %v949 = vpack.c.bf16 %v948, %v947
      %v951 = vunpack.c.l.b16 %v949
      %v952 = vunpack.c.h.b16 %v949
      %v953 = vpack.c.b16 %v951, %v951
      %v954 = vpack.c.b16 %v952, %v952
      %957 = vst [vmem:[%s278] sm:$0xf] %v953
      %958 = vst [vmem:[%s278 + $0x4] sm:$0xf] %v954
      %p959 = scmp.lt.s32.totalorder %s18, 1
      %s960 = scalar_select %p959, %s18, 1
      %s961 = smul.addr %s960, 2
      %s962 = smul.addr %s961, 4
      %s963 = scalar_lea.vmem %s7, %s962
      // Predicated region
      $region49: #{net_forward.8} parent=47 // pred_check
        %p964 = pneg %p188
      $region50: #{net_forward.8} parent=47 // pred_check_branch
        %966 = sbr.rel (%p964) target = $region52
      $region51: #{net_forward.8} parent=47 // pred_region
        _
      $region52: #{net_forward.8} parent=47 // pred_fallthru
        _
    $region48: #{net_forward.8} parent=5 // pred_fallthru
      _
    %p967 = scmp.le.s32.totalorder 2, %s13
    // Predicated region
    $region53: #{net_forward.8} parent=5 // pred_check
      %p968 = pneg %p967
    $region54: #{net_forward.8} parent=5 // pred_check_branch
      %970 = sbr.rel (%p968) target = $region56
    $region55: #{net_forward.8} parent=5 // pred_region
      %s971 = ssub.s32 %s13, 2
      // Predicated region
      $region57: #{net_forward.8} parent=55 // pred_check
        %p972 = pneg %p194
      $region58: #{net_forward.8} parent=55 // pred_check_branch
        %974 = sbr.rel (%p972) target = $region60
      $region59: #{net_forward.8} parent=55 // pred_region
        %p975 = scmp.lt.s32.totalorder %s19, 1
        %s976 = scalar_select %p975, %s19, 1
        %s977 = smul.addr %s976, 2
        %s978 = smul.addr %s977, 4
        %s979 = scalar_lea.vmem %s7, %s978
      $region60: #{net_forward.8} parent=55 // pred_fallthru
        _
    $region56: #{net_forward.8} parent=5 // pred_fallthru
      _
  $region6: #{net_forward.8} parent=0 // loop_footer
    %s17 = sadd.s32 1, %s13
  $region7: #{net_forward.8} parent=0 // loop_footer_branch
    %12 = sbr.rel target = $region3
  $region8: #{net_forward.8} parent=0 // loop_exit
    _

// kernel: net_forward.9
$region0: #{net_forward.9}
  #allocation0 [shape = 'u32[]', space=smem, size = 0x4, offset = 0x4, fixed_abs, tag = 'smem constant byte address 0x4 - core index']
  #allocation1 [shape = 'u32[144,128]{1,0:T(1,128)}', space=vmem, size = 0x12000, scoped, tag = 'internal scratch']
  #allocation2 [shape = 'bf16[16,498]{1,0:T(16,128)(2,1)}', space=vmem, size = 0x4000, scoped, tag = 'scratch operand']
  #allocation3 [shape = 'bf16[144,460]{1,0:T(16,128)(2,1)}', space=vmem, size = 0x24000, scoped, tag = 'scratch operand']
  #allocation4 [shape = 'bf16[72,422]{1,0:T(8,128)(2,1)}', space=vmem, size = 0x12000, scoped, tag = 'scratch operand']
  #allocation5 [shape = 'bf16[72,384]{1,0:T(8,128)(2,1)}', space=vmem, size = 0xd800, scoped, tag = 'scratch operand']
  #allocation6 [shape = 'bf16[8,460]{1,0:T(8,128)(2,1)}', space=vmem, size = 0x2000, scoped, tag = 'scratch operand']
  #allocation7 [shape = 'bf16[8,422]{1,0:T(8,128)(2,1)}', space=vmem, size = 0x2000, scoped, tag = 'scratch operand']
  %s0 = inlined_call_operand.vmem [shape: bf16[2,16,64], index: 0, kind: input, shape index: {}]
  %s1 = inlined_call_operand.vmem [shape: bf16[64,498], index: 1, kind: input, shape index: {}]
  %s2 = inlined_call_operand.vmem [shape: bf16[8,144], index: 2, kind: input, shape index: {}]
  %s3 = inlined_call_operand.vmem [shape: f32[8,1], index: 3, kind: input, shape index: {}]
  %s4 = inlined_call_operand.vmem [shape: bf16[8,72], index: 4, kind: input, shape index: {}]
  %s5 = inlined_call_operand.vmem [shape: f32[8,1], index: 5, kind: input, shape index: {}]
  %s6 = inlined_call_operand.vmem [shape: bf16[3,72], index: 6, kind: input, shape index: {}]
  %s7 = inlined_call_operand.vmem [shape: f32[3,1], index: 7, kind: input, shape index: {}]
  %s8 = inlined_call_operand.vmem [shape: f32[1,460], index: 8, kind: input, shape index: {}]
  %s9 = inlined_call_operand.vmem [shape: f32[1,422], index: 9, kind: input, shape index: {}]
  %s10 = inlined_call_operand.vmem [shape: f32[2,3,384], index: 10, kind: output, shape index: {}]
  %s11 = sld [smem:[#allocation0]]
  $region73: #{net_forward.9} parent=0
    _
  %s13 = ssub.s32 1, %s11
  %s14 = scalar_select 0, %s13, %s11
  loop: start=0, step=1, limit=4
  $region2: #{net_forward.9} parent=0 // loop_pre_header
    _
  $region3: #{net_forward.9} parent=0 // loop_header
    %s16 = sphi 0, %s20
    %p17 = scmp.ge.s32.totalorder %s16, 4
    %s26 = sphi 0, %s28
    %s29 = sphi 0, %s26
    %s30 = sphi 0, %s29
    %s46 = sphi 0, %s30
    %s50 = sphi 0, %s50
    %s52 = sphi 0, %s50
    %s53 = sphi 0, %s52
    %s67 = sphi 0, %s53
    %s71 = sphi 0, %s71
    %s73 = sphi 0, %s71
    %s74 = sphi 0, %s73
    %s88 = sphi 0, %s74
    %s92 = sphi 0, %s92
    %s94 = sphi 0, %s92
    %s95 = sphi 0, %s94
    %s109 = sphi 0, %s95
    %s113 = sphi 0, %s113
    %s115 = sphi 0, %s113
    %s116 = sphi 0, %s115
    %s130 = sphi 0, %s116
    %s134 = sphi 0, %s134
    %s136 = sphi 0, %s134
    %s137 = sphi 0, %s136
    %s151 = sphi 0, %s137
    %s155 = sphi 0, %s155
    %s157 = sphi 0, %s155
    %s158 = sphi 0, %s157
    %s172 = sphi 0, %s158
    %s176 = sphi 0, %s176
    %s178 = sphi 0, %s176
    %s179 = sphi 0, %s178
    %s193 = sphi 0, %s179
    %s197 = sphi 0, %s197
    %s199 = sphi 0, %s197
    %s200 = sphi 0, %s199
    %s214 = sphi 0, %s200
    %s218 = sphi 0, %s218
    %s220 = sphi 0, %s218
    %s221 = sphi 0, %s220
    %s235 = sphi 0, %s221
    %s241 = sphi 0, %s243
    %s244 = sphi 0, %s241
    %s245 = sphi 0, %s244
    %s261 = sphi 0, %s245
  $region4: #{net_forward.9} parent=0 // loop_header_branch
    %19 = sbr.rel (%p17) target = $region8
  $region5: #{net_forward.9} parent=0 // loop_body
    %s21 = ssub.s32 %s16, 1
    %s22 = ssub.s32 %s16, 2
    %s23 = sadd.s32 %s16, 1
    %s24 = ssub.s32 %s16, %s23
    %p25 = scmp.eq.s32.totalorder %s24, 0
    %s27 = sadd.s32 %s26, 1
    %s28 = scalar_select %p25, %s26, %s27
    %p31 = pneg %p25
    %p32 = scmp.eq.s32.totalorder %s16, 1
    %p33 = por %p31, %p32
    %p34 = scmp.ne.s32.totalorder %s26, %s29
    %p35 = scmp.eq.s32.totalorder %s16, 0
    %p36 = por %p34, %p35
    %p37 = scmp.ne.s32.totalorder %s26, %s29
    %p38 = scmp.eq.s32.totalorder %s21, 1
    %p39 = por %p37, %p38
    %p40 = scmp.ne.s32.totalorder %s29, %s30
    %p41 = scmp.eq.s32.totalorder %s21, 0
    %p42 = por %p40, %p41
    %p43 = scmp.ne.s32.totalorder %s29, %s30
    %p44 = scmp.eq.s32.totalorder %s22, 1
    %p45 = por %p43, %p44
    %p47 = scmp.ne.s32.totalorder %s30, %s46
    %p48 = scmp.eq.s32.totalorder %s22, 0
    %p49 = por %p47, %p48
    %s51 = sadd.s32 %s50, 1
    %p54 = scmp.eq.s32.totalorder %s16, 1
    %p55 = scmp.ne.s32.totalorder %s50, %s52
    %p56 = scmp.eq.s32.totalorder %s16, 0
    %p57 = por %p55, %p56
    %p58 = scmp.ne.s32.totalorder %s50, %s52
    %p59 = scmp.eq.s32.totalorder %s21, 1
    %p60 = por %p58, %p59
    %p61 = scmp.ne.s32.totalorder %s52, %s53
    %p62 = scmp.eq.s32.totalorder %s21, 0
    %p63 = por %p61, %p62
    %p64 = scmp.ne.s32.totalorder %s52, %s53
    %p65 = scmp.eq.s32.totalorder %s22, 1
    %p66 = por %p64, %p65
    %p68 = scmp.ne.s32.totalorder %s53, %s67
    %p69 = scmp.eq.s32.totalorder %s22, 0
    %p70 = por %p68, %p69
    %s72 = sadd.s32 %s71, 1
    %p75 = scmp.eq.s32.totalorder %s16, 1
    %p76 = scmp.ne.s32.totalorder %s71, %s73
    %p77 = scmp.eq.s32.totalorder %s16, 0
    %p78 = por %p76, %p77
    %p79 = scmp.ne.s32.totalorder %s71, %s73
    %p80 = scmp.eq.s32.totalorder %s21, 1
    %p81 = por %p79, %p80
    %p82 = scmp.ne.s32.totalorder %s73, %s74
    %p83 = scmp.eq.s32.totalorder %s21, 0
    %p84 = por %p82, %p83
    %p85 = scmp.ne.s32.totalorder %s73, %s74
    %p86 = scmp.eq.s32.totalorder %s22, 1
    %p87 = por %p85, %p86
    %p89 = scmp.ne.s32.totalorder %s74, %s88
    %p90 = scmp.eq.s32.totalorder %s22, 0
    %p91 = por %p89, %p90
    %s93 = sadd.s32 %s92, 1
    %p96 = scmp.eq.s32.totalorder %s16, 1
    %p97 = scmp.ne.s32.totalorder %s92, %s94
    %p98 = scmp.eq.s32.totalorder %s16, 0
    %p99 = por %p97, %p98
    %p100 = scmp.ne.s32.totalorder %s92, %s94
    %p101 = scmp.eq.s32.totalorder %s21, 1
    %p102 = por %p100, %p101
    %p103 = scmp.ne.s32.totalorder %s94, %s95
    %p104 = scmp.eq.s32.totalorder %s21, 0
    %p105 = por %p103, %p104
    %p106 = scmp.ne.s32.totalorder %s94, %s95
    %p107 = scmp.eq.s32.totalorder %s22, 1
    %p108 = por %p106, %p107
    %p110 = scmp.ne.s32.totalorder %s95, %s109
    %p111 = scmp.eq.s32.totalorder %s22, 0
    %p112 = por %p110, %p111
    %s114 = sadd.s32 %s113, 1
    %p117 = scmp.eq.s32.totalorder %s16, 1
    %p118 = scmp.ne.s32.totalorder %s113, %s115
    %p119 = scmp.eq.s32.totalorder %s16, 0
    %p120 = por %p118, %p119
    %p121 = scmp.ne.s32.totalorder %s113, %s115
    %p122 = scmp.eq.s32.totalorder %s21, 1
    %p123 = por %p121, %p122
    %p124 = scmp.ne.s32.totalorder %s115, %s116
    %p125 = scmp.eq.s32.totalorder %s21, 0
    %p126 = por %p124, %p125
    %p127 = scmp.ne.s32.totalorder %s115, %s116
    %p128 = scmp.eq.s32.totalorder %s22, 1
    %p129 = por %p127, %p128
    %p131 = scmp.ne.s32.totalorder %s116, %s130
    %p132 = scmp.eq.s32.totalorder %s22, 0
    %p133 = por %p131, %p132
    %s135 = sadd.s32 %s134, 1
    %p138 = scmp.eq.s32.totalorder %s16, 1
    %p139 = scmp.ne.s32.totalorder %s134, %s136
    %p140 = scmp.eq.s32.totalorder %s16, 0
    %p141 = por %p139, %p140
    %p142 = scmp.ne.s32.totalorder %s134, %s136
    %p143 = scmp.eq.s32.totalorder %s21, 1
    %p144 = por %p142, %p143
    %p145 = scmp.ne.s32.totalorder %s136, %s137
    %p146 = scmp.eq.s32.totalorder %s21, 0
    %p147 = por %p145, %p146
    %p148 = scmp.ne.s32.totalorder %s136, %s137
    %p149 = scmp.eq.s32.totalorder %s22, 1
    %p150 = por %p148, %p149
    %p152 = scmp.ne.s32.totalorder %s137, %s151
    %p153 = scmp.eq.s32.totalorder %s22, 0
    %p154 = por %p152, %p153
    %s156 = sadd.s32 %s155, 1
    %p159 = scmp.eq.s32.totalorder %s16, 1
    %p160 = scmp.ne.s32.totalorder %s155, %s157
    %p161 = scmp.eq.s32.totalorder %s16, 0
    %p162 = por %p160, %p161
    %p163 = scmp.ne.s32.totalorder %s155, %s157
    %p164 = scmp.eq.s32.totalorder %s21, 1
    %p165 = por %p163, %p164
    %p166 = scmp.ne.s32.totalorder %s157, %s158
    %p167 = scmp.eq.s32.totalorder %s21, 0
    %p168 = por %p166, %p167
    %p169 = scmp.ne.s32.totalorder %s157, %s158
    %p170 = scmp.eq.s32.totalorder %s22, 1
    %p171 = por %p169, %p170
    %p173 = scmp.ne.s32.totalorder %s158, %s172
    %p174 = scmp.eq.s32.totalorder %s22, 0
    %p175 = por %p173, %p174
    %s177 = sadd.s32 %s176, 1
    %p180 = scmp.eq.s32.totalorder %s16, 1
    %p181 = scmp.ne.s32.totalorder %s176, %s178
    %p182 = scmp.eq.s32.totalorder %s16, 0
    %p183 = por %p181, %p182
    %p184 = scmp.ne.s32.totalorder %s176, %s178
    %p185 = scmp.eq.s32.totalorder %s21, 1
    %p186 = por %p184, %p185
    %p187 = scmp.ne.s32.totalorder %s178, %s179
    %p188 = scmp.eq.s32.totalorder %s21, 0
    %p189 = por %p187, %p188
    %p190 = scmp.ne.s32.totalorder %s178, %s179
    %p191 = scmp.eq.s32.totalorder %s22, 1
    %p192 = por %p190, %p191
    %p194 = scmp.ne.s32.totalorder %s179, %s193
    %p195 = scmp.eq.s32.totalorder %s22, 0
    %p196 = por %p194, %p195
    %s198 = sadd.s32 %s197, 1
    %p201 = scmp.eq.s32.totalorder %s16, 1
    %p202 = scmp.ne.s32.totalorder %s197, %s199
    %p203 = scmp.eq.s32.totalorder %s16, 0
    %p204 = por %p202, %p203
    %p205 = scmp.ne.s32.totalorder %s197, %s199
    %p206 = scmp.eq.s32.totalorder %s21, 1
    %p207 = por %p205, %p206
    %p208 = scmp.ne.s32.totalorder %s199, %s200
    %p209 = scmp.eq.s32.totalorder %s21, 0
    %p210 = por %p208, %p209
    %p211 = scmp.ne.s32.totalorder %s199, %s200
    %p212 = scmp.eq.s32.totalorder %s22, 1
    %p213 = por %p211, %p212
    %p215 = scmp.ne.s32.totalorder %s200, %s214
    %p216 = scmp.eq.s32.totalorder %s22, 0
    %p217 = por %p215, %p216
    %s219 = sadd.s32 %s218, 1
    %p222 = scmp.eq.s32.totalorder %s16, 1
    %p223 = scmp.ne.s32.totalorder %s218, %s220
    %p224 = scmp.eq.s32.totalorder %s16, 0
    %p225 = por %p223, %p224
    %p226 = scmp.ne.s32.totalorder %s218, %s220
    %p227 = scmp.eq.s32.totalorder %s21, 1
    %p228 = por %p226, %p227
    %p229 = scmp.ne.s32.totalorder %s220, %s221
    %p230 = scmp.eq.s32.totalorder %s21, 0
    %p231 = por %p229, %p230
    %p232 = scmp.ne.s32.totalorder %s220, %s221
    %p233 = scmp.eq.s32.totalorder %s22, 1
    %p234 = por %p232, %p233
    %p236 = scmp.ne.s32.totalorder %s221, %s235
    %p237 = scmp.eq.s32.totalorder %s22, 0
    %p238 = por %p236, %p237
    %s239 = ssub.s32 %s16, %s23
    %p240 = scmp.eq.s32.totalorder %s239, 0
    %s242 = sadd.s32 %s241, 1
    %s243 = scalar_select %p240, %s241, %s242
    %p246 = pneg %p240
    %p247 = scmp.eq.s32.totalorder %s16, 1
    %p248 = por %p246, %p247
    %p249 = scmp.ne.s32.totalorder %s241, %s244
    %p250 = scmp.eq.s32.totalorder %s16, 0
    %p251 = por %p249, %p250
    %p252 = scmp.ne.s32.totalorder %s241, %s244
    %p253 = scmp.eq.s32.totalorder %s21, 1
    %p254 = por %p252, %p253
    %p255 = scmp.ne.s32.totalorder %s244, %s245
    %p256 = scmp.eq.s32.totalorder %s21, 0
    %p257 = por %p255, %p256
    %p258 = scmp.ne.s32.totalorder %s244, %s245
    %p259 = scmp.eq.s32.totalorder %s22, 1
    %p260 = por %p258, %p259
    %p262 = scmp.ne.s32.totalorder %s245, %s261
    %p263 = scmp.eq.s32.totalorder %s22, 0
    %p264 = por %p262, %p263
    %p265 = scmp.le.s32.totalorder 1, %s16
    %p266 = scmp.lt.s32.totalorder %s16, 3
    %p267 = pnand %p265, %p266
    %p268 = pneg %p267
    // Predicated region
    $region9: #{net_forward.9} parent=5 // pred_check
      _
    $region10: #{net_forward.9} parent=5 // pred_check_branch
      %270 = sbr.rel (%p267) target = $region12
    $region11: #{net_forward.9} parent=5 // pred_region
      %s271 = ssub.s32 %s16, 1
      // Predicated region
      $region13: #{net_forward.9} parent=11 // pred_check
        %p272 = pneg %p63
      $region14: #{net_forward.9} parent=11 // pred_check_branch
        %274 = sbr.rel (%p272) target = $region16
      $region15: #{net_forward.9} parent=11 // pred_region
        _
      $region16: #{net_forward.9} parent=11 // pred_fallthru
        _
      // Predicated region
      $region17: #{net_forward.9} parent=11 // pred_check
        %p275 = pneg %p84
      $region18: #{net_forward.9} parent=11 // pred_check_branch
        %277 = sbr.rel (%p275) target = $region20
      $region19: #{net_forward.9} parent=11 // pred_region
        _
      $region20: #{net_forward.9} parent=11 // pred_fallthru
        _
      // Predicated region
      $region21: #{net_forward.9} parent=11 // pred_check
        %p278 = pneg %p105
      $region22: #{net_forward.9} parent=11 // pred_check_branch
        %280 = sbr.rel (%p278) target = $region24
      $region23: #{net_forward.9} parent=11 // pred_region
        _
      $region24: #{net_forward.9} parent=11 // pred_fallthru
        _
      // Predicated region
      $region25: #{net_forward.9} parent=11 // pred_check
        %p281 = pneg %p126
      $region26: #{net_forward.9} parent=11 // pred_check_branch
        %283 = sbr.rel (%p281) target = $region28
      $region27: #{net_forward.9} parent=11 // pred_region
        _
      $region28: #{net_forward.9} parent=11 // pred_fallthru
        _
      // Predicated region
      $region29: #{net_forward.9} parent=11 // pred_check
        %p284 = pneg %p147
      $region30: #{net_forward.9} parent=11 // pred_check_branch
        %286 = sbr.rel (%p284) target = $region32
      $region31: #{net_forward.9} parent=11 // pred_region
        _
      $region32: #{net_forward.9} parent=11 // pred_fallthru
        _
      // Predicated region
      $region33: #{net_forward.9} parent=11 // pred_check
        %p287 = pneg %p168
      $region34: #{net_forward.9} parent=11 // pred_check_branch
        %289 = sbr.rel (%p287) target = $region36
      $region35: #{net_forward.9} parent=11 // pred_region
        _
      $region36: #{net_forward.9} parent=11 // pred_fallthru
        _
      // Predicated region
      $region37: #{net_forward.9} parent=11 // pred_check
        %p290 = pneg %p189
      $region38: #{net_forward.9} parent=11 // pred_check_branch
        %292 = sbr.rel (%p290) target = $region40
      $region39: #{net_forward.9} parent=11 // pred_region
        _
      $region40: #{net_forward.9} parent=11 // pred_fallthru
        _
      // Predicated region
      $region41: #{net_forward.9} parent=11 // pred_check
        %p293 = pneg %p210
      $region42: #{net_forward.9} parent=11 // pred_check_branch
        %295 = sbr.rel (%p293) target = $region44
      $region43: #{net_forward.9} parent=11 // pred_region
        _
      $region44: #{net_forward.9} parent=11 // pred_fallthru
        _
      // Predicated region
      $region45: #{net_forward.9} parent=11 // pred_check
        %p296 = pneg %p231
      $region46: #{net_forward.9} parent=11 // pred_check_branch
        %298 = sbr.rel (%p296) target = $region48
      $region47: #{net_forward.9} parent=11 // pred_region
        _
      $region48: #{net_forward.9} parent=11 // pred_fallthru
        _
    $region12: #{net_forward.9} parent=5 // pred_fallthru
      _
    %p299 = scmp.lt.s32.totalorder %s16, 2
    // Predicated region
    $region49: #{net_forward.9} parent=5 // pred_check
      %p300 = pneg %p299
    $region50: #{net_forward.9} parent=5 // pred_check_branch
      %302 = sbr.rel (%p300) target = $region52
    $region51: #{net_forward.9} parent=5 // pred_region
      // Predicated region
      $region53: #{net_forward.9} parent=51 // pred_check
        %p303 = pneg %p36
      $region54: #{net_forward.9} parent=51 // pred_check_branch
        %305 = sbr.rel (%p303) target = $region56
      $region55: #{net_forward.9} parent=51 // pred_region
        %p306 = scmp.lt.s32.totalorder %s16, 1
        %s307 = scalar_select %p306, %s16, 1
        %s308 = smul.addr %s307, 2
        %s309 = smul.addr %s308, 4
        %s310 = scalar_lea.vmem %s0, %s309
      $region56: #{net_forward.9} parent=51 // pred_fallthru
        _
    $region52: #{net_forward.9} parent=5 // pred_fallthru
      _
    %p311 = scmp.le.s32.totalorder 1, %s16
    %p312 = scmp.lt.s32.totalorder %s16, 3
    %p313 = pnand %p311, %p312
    %p314 = pneg %p313
    // Predicated region
    $region57: #{net_forward.9} parent=5 // pred_check
      _
    $region58: #{net_forward.9} parent=5 // pred_check_branch
      %316 = sbr.rel (%p313) target = $region60
    $region59: #{net_forward.9} parent=5 // pred_region
      %s317 = ssub.s32 %s16, 1
      %p318 = scmp.lt.s32.totalorder %s21, 1
      %s319 = scalar_select %p318, %s21, 1
      %s320 = smul.addr %s319, 2
      %s321 = smul.addr %s320, 4
      %s322 = scalar_lea.vmem %s0, %s321
      %p323 = pneg %p42
      %p324 = pneg %p39
      %p325 = pneg %p63
      %p326 = pneg %p60
      %p327 = pneg %p84
      %p328 = pneg %p81
      %p329 = pneg %p105
      %p330 = pneg %p102
      %p331 = pneg %p126
      %p332 = pneg %p123
      %p333 = pneg %p147
      %p334 = pneg %p144
      %p335 = pneg %p168
      %p336 = pneg %p165
      %p337 = pneg %p189
      %p338 = pneg %p186
      %p339 = pneg %p210
      %p340 = pneg %p207
      %p341 = pneg %p231
      %p342 = pneg %p228
      %p343 = pneg %p257
      %p344 = pneg %p254
      %p345 = scmp.lt.s32.totalorder %s21, 1
      %s346 = scalar_select %p345, %s21, 1
      %s347 = smul.addr %s346, 3
      %s348 = smul.addr %s347, 4
      %s349 = scalar_lea.vmem %s10, %s348
      %p350 = scmp.lt.s32.totalorder %s21, 1
      %s351 = scalar_select %p350, %s21, 1
      %s352 = smul.addr %s351, 2
      %s353 = smul.addr %s352, 4
      %s354 = scalar_lea.vmem %s0, %s353
      %p355 = scmp.lt.s32.totalorder %s21, 1
      %s356 = scalar_select %p355, %s21, 1
      %s357 = smul.addr %s356, 3
      %s358 = smul.addr %s357, 4
      %s359 = scalar_lea.vmem %s10, %s358
      %v361 = vld [vmem:[%s354] sm:$0xf]
      %v362 = vld [vmem:[%s354 + $0x4] sm:$0xf]
      %v363 = vld [vmem:[%s1] sm:$0xff]
      %v364 = vld [vmem:[%s1 + $0x8] sm:$0xff]
      %v365 = vld [vmem:[%s1 + $0x10] sm:$0xff]
      %v366 = vld [vmem:[%s1 + $0x18] sm:$0xff]
      %v367 = vld [vmem:[%s1 + $0x20] sm:$0xff]
      %v368 = vld [vmem:[%s1 + $0x28] sm:$0xff]
      %v369 = vld [vmem:[%s1 + $0x30] sm:$0xff]
      %v370 = vld [vmem:[%s1 + $0x38] sm:$0xff]
      %v371 = vld [vmem:[%s1 + $0x40] sm:$0xff]
      %v372 = vld [vmem:[%s1 + $0x48] sm:$0xff]
      %v373 = vld [vmem:[%s1 + $0x50] sm:$0xff]
      %v374 = vld [vmem:[%s1 + $0x58] sm:$0xff]
      %v375 = vld [vmem:[%s1 + $0x60] sm:$0xff]
      %v376 = vld [vmem:[%s1 + $0x68] sm:$0xff]
      %v377 = vld [vmem:[%s1 + $0x70] sm:$0xff]
      %v378 = vld [vmem:[%s1 + $0x78] sm:$0xff]
      %v381 = vunpack.c.l.b16 %v361
      %v382 = vunpack.c.l.b16 %v362
      %v383 = vpack.c.b16 %v382, %v381
      %v400 = vunpack.c.l.b16 %v363
      %v401 = vunpack.c.h.b16 %v363
      %v402 = vunpack.c.l.b16 %v364
      %v403 = vunpack.c.h.b16 %v364
      %v404 = vunpack.c.l.b16 %v365
      %v405 = vunpack.c.h.b16 %v365
      %v406 = vunpack.c.l.b16 %v366
      %v407 = vunpack.c.h.b16 %v366
      %v408 = vunpack.c.l.b16 %v367
      %v409 = vunpack.c.h.b16 %v367
      %v410 = vunpack.c.l.b16 %v368
      %v411 = vunpack.c.h.b16 %v368
      %v412 = vunpack.c.l.b16 %v369
      %v413 = vunpack.c.h.b16 %v369
      %v414 = vunpack.c.l.b16 %v370
      %v415 = vunpack.c.h.b16 %v370
      %v416 = vunpack.c.l.b16 %v371
      %v417 = vunpack.c.h.b16 %v371
      %v418 = vunpack.c.l.b16 %v372
      %v419 = vunpack.c.h.b16 %v372
      %v420 = vunpack.c.l.b16 %v373
      %v421 = vunpack.c.h.b16 %v373
      %v422 = vunpack.c.l.b16 %v374
      %v423 = vunpack.c.h.b16 %v374
      %v424 = vunpack.c.l.b16 %v375
      %v425 = vunpack.c.h.b16 %v375
      %v426 = vunpack.c.l.b16 %v376
      %v427 = vunpack.c.h.b16 %v376
      %v428 = vunpack.c.l.b16 %v377
      %v429 = vunpack.c.h.b16 %v377
      %v430 = vunpack.c.l.b16 %v378
      %v431 = vunpack.c.h.b16 %v378
      %v432 = vpack.c.b16 %v404, %v400
      %v433 = vpack.c.b16 %v405, %v401
      %v434 = vpack.c.b16 %v406, %v402
      %v435 = vpack.c.b16 %v407, %v403
      %v436 = vpack.c.b16 %v412, %v408
      %v437 = vpack.c.b16 %v413, %v409
      %v438 = vpack.c.b16 %v414, %v410
      %v439 = vpack.c.b16 %v415, %v411
      %v440 = vpack.c.b16 %v420, %v416
      %v441 = vpack.c.b16 %v421, %v417
      %v442 = vpack.c.b16 %v422, %v418
      %v443 = vpack.c.b16 %v423, %v419
      %v444 = vpack.c.b16 %v428, %v424
      %v445 = vpack.c.b16 %v429, %v425
      %v446 = vpack.c.b16 %v430, %v426
      %v447 = vpack.c.b16 %v431, %v427
      %vm464 = vcmask 523264
      %v466 = vsel %vm464, %v383, 0
      %468 = vmatprep.subr.bf16.mxu0 %v433
      %469 = vmatpush1.bf16.msra.mxu0 %v432
      %470 = vmatprep.subr.bf16.mxu0 %v437
      %471 = vmatpush1.bf16.msra.mxu0 %v436
      %472 = vmatprep.subr.bf16.mxu0 %v441
      %473 = vmatpush1.bf16.msra.mxu0 %v440
      %474 = vmatprep.subr.bf16.mxu0 %v445
      %475 = vmatpush1.bf16.msra.mxu0 %v444
      %476 = vmatprep.subr.bf16.mxu0 0
      %477 = vmatpush1.bf16.msra.mxu0 0
      %478 = vmatprep.subr.bf16.mxu0 0
      %479 = vmatpush1.bf16.msra.mxu0 0
      %480 = vmatprep.subr.bf16.mxu0 0
      %481 = vmatpush1.bf16.msra.mxu0 0
      %482 = vmatprep.subr.bf16.mxu0 0
      %483 = vmatpush1.bf16.msra.mxu0 0
      %484 = vmatprep.subr.bf16.mxu0 0
      %485 = vmatpush1.bf16.msra.mxu0 0
      %486 = vmatprep.subr.bf16.mxu0 0
      %487 = vmatpush1.bf16.msra.mxu0 0
      %488 = vmatprep.subr.bf16.mxu0 0
      %489 = vmatpush1.bf16.msra.mxu0 0
      %490 = vmatprep.subr.bf16.mxu0 0
      %491 = vmatpush1.bf16.msra.mxu0 0
      %492 = vmatprep.subr.bf16.mxu0 0
      %493 = vmatpush1.bf16.msra.mxu0 0
      %494 = vmatprep.subr.bf16.mxu0 0
      %495 = vmatpush1.bf16.msra.mxu0 0
      %496 = vmatprep.subr.bf16.mxu0 0
      %497 = vmatpush1.bf16.msra.mxu0 0
      %498 = vmatprep.subr.bf16.mxu0 0
      %499 = vmatpush1.bf16.msra.mxu0 0
      %500 = vmatprep.mubr.bf16.mxu0 0
      %501 = vmatmul.mubr.bf16.gmra.mrb[0].mxu0 %v466
      %v502 = vpop.f32.mrb[0].mxu0
      %v503 = vadd.f32 0.0, %v502
      %v504 = vpop.f32.mrb[0].mxu0
      %v505 = vadd.f32 0.0, %v504
      %v506 = vpop.f32.mrb[0].mxu0
      %v507 = vadd.f32 0.0, %v506
      %v508 = vpop.f32.mrb[0].mxu0
      %v509 = vadd.f32 0.0, %v508
      %510 = vdwg.mxu0
      %511 = vmatprep.subr.bf16.mxu0 %v435
      %512 = vmatpush1.bf16.msra.mxu0 %v434
      %513 = vmatprep.subr.bf16.mxu0 %v439
      %514 = vmatpush1.bf16.msra.mxu0 %v438
      %515 = vmatprep.subr.bf16.mxu0 %v443
      %516 = vmatpush1.bf16.msra.mxu0 %v442
      %517 = vmatprep.subr.bf16.mxu0 %v447
      %518 = vmatpush1.bf16.msra.mxu0 %v446
      %519 = vmatprep.subr.bf16.mxu0 0
      %520 = vmatpush1.bf16.msra.mxu0 0
      %521 = vmatprep.subr.bf16.mxu0 0
      %522 = vmatpush1.bf16.msra.mxu0 0
      %523 = vmatprep.subr.bf16.mxu0 0
      %524 = vmatpush1.bf16.msra.mxu0 0
      %525 = vmatprep.subr.bf16.mxu0 0
      %526 = vmatpush1.bf16.msra.mxu0 0
      %527 = vmatprep.subr.bf16.mxu0 0
      %528 = vmatpush1.bf16.msra.mxu0 0
      %529 = vmatprep.subr.bf16.mxu0 0
      %530 = vmatpush1.bf16.msra.mxu0 0
      %531 = vmatprep.subr.bf16.mxu0 0
      %532 = vmatpush1.bf16.msra.mxu0 0
      %533 = vmatprep.subr.bf16.mxu0 0
      %534 = vmatpush1.bf16.msra.mxu0 0
      %535 = vmatprep.subr.bf16.mxu0 0
      %536 = vmatpush1.bf16.msra.mxu0 0
      %537 = vmatprep.subr.bf16.mxu0 0
      %538 = vmatpush1.bf16.msra.mxu0 0
      %539 = vmatprep.subr.bf16.mxu0 0
      %540 = vmatpush1.bf16.msra.mxu0 0
      %541 = vmatprep.subr.bf16.mxu0 0
      %542 = vmatpush1.bf16.msra.mxu0 0
      %543 = vmatprep.mubr.bf16.mxu0 0
      %544 = vmatmul.mubr.bf16.gmra.mrb[0].mxu0 %v466
      %v545 = vpop.f32.mrb[0].mxu0
      %v546 = vadd.f32 0.0, %v545
      %v547 = vpop.f32.mrb[0].mxu0
      %v548 = vadd.f32 0.0, %v547
      %v549 = vpop.f32.mrb[0].mxu0
      %v550 = vadd.f32 0.0, %v549
      %v551 = vpop.f32.mrb[0].mxu0
      %v552 = vadd.f32 0.0, %v551
      %553 = vdwg.mxu0
      %v554 = vpack.c.bf16 %v507, %v503
      %v555 = vpack.c.bf16 %v509, %v505
      %v556 = vpack.c.bf16 %v550, %v546
      %v557 = vpack.c.bf16 %v552, %v548
      %558 = vst [vmem:[#allocation2] sm:$0xff] %v554
      %559 = vst [vmem:[#allocation2 + $0x8] sm:$0xff] %v555
      %560 = vst [vmem:[#allocation2 + $0x10] sm:$0xff] %v556
      %vm561 = vcmask 932864
      %562 = vst.msk [vmem:[#allocation2 + $0x18] sm:$0xff] %vm561, %v557
      %v563 = vld [vmem:[#allocation2] sm:$0xff]
      %v564 = vld [vmem:[#allocation2 + $0x8] sm:$0xff]
      %v565 = vld [vmem:[#allocation2 + $0x10] sm:$0xff]
      %v566 = vld [vmem:[#allocation2 + $0x18] sm:$0xff]
      %567 = vst [vmem:[#allocation3] sm:$0xff] %v563
      %568 = vst [vmem:[#allocation3 + $0x8] sm:$0xff] %v564
      %569 = vst [vmem:[#allocation3 + $0x10] sm:$0xff] %v565
      %vm570 = vcmask 621568
      %571 = vst.msk [vmem:[#allocation3 + $0x18] sm:$0xff] %vm570, %v566
      %v572 = vld [vmem:[#allocation2] sm:$0xff]
      %v573 = vld [vmem:[#allocation2 + $0x8] sm:$0xff]
      %v574 = vld [vmem:[#allocation2 + $0x10] sm:$0xff]
      %v575 = vld [vmem:[#allocation2 + $0x18] sm:$0xff]
      %580 = vrot.lane.b32.xlu0 %v572, 127
      %v581 = vpop.permute.xlu0 %580
      %582 = vrot.lane.b32.xlu0 %v573, 127
      %v583 = vpop.permute.xlu0 %582
      %584 = vrot.lane.b32.xlu0 %v574, 127
      %v585 = vpop.permute.xlu0 %584
      %586 = vrot.lane.b32.xlu0 %v575, 127
      %v587 = vpop.permute.xlu0 %586
      %vm588 = vcmask 1039360
      %v589 = vsel %vm588, %v581, %v583
      %v590 = vsel %vm588, %v583, %v585
      %v591 = vsel %vm588, %v585, %v587
      %596 = vst [vmem:[#allocation3 + $0x20] sm:$0xff] %v589
      %597 = vst [vmem:[#allocation3 + $0x28] sm:$0xff] %v590
      %598 = vst [vmem:[#allocation3 + $0x30] sm:$0xff] %v591
      %599 = vst.msk [vmem:[#allocation3 + $0x38] sm:$0xff] %vm570, %v587
      %v600 = vld [vmem:[#allocation2] sm:$0xff]
      %v601 = vld [vmem:[#allocation2 + $0x8] sm:$0xff]
      %v602 = vld [vmem:[#allocation2 + $0x10] sm:$0xff]
      %v603 = vld [vmem:[#allocation2 + $0x18] sm:$0xff]
      %608 = vrot.lane.b32.xlu0 %v600, 126
      %v609 = vpop.permute.xlu0 %608
      %610 = vrot.lane.b32.xlu0 %v601, 126
      %v611 = vpop.permute.xlu0 %610
      %612 = vrot.lane.b32.xlu0 %v602, 126
      %v613 = vpop.permute.xlu0 %612
      %614 = vrot.lane.b32.xlu0 %v603, 126
      %v615 = vpop.permute.xlu0 %614
      %vm616 = vcmask 1031168
      %v617 = vsel %vm616, %v609, %v611
      %v618 = vsel %vm616, %v611, %v613
      %v619 = vsel %vm616, %v613, %v615
      %624 = vst [vmem:[#allocation3 + $0x40] sm:$0xff] %v617
      %625 = vst [vmem:[#allocation3 + $0x48] sm:$0xff] %v618
      %626 = vst [vmem:[#allocation3 + $0x50] sm:$0xff] %v619
      %627 = vst.msk [vmem:[#allocation3 + $0x58] sm:$0xff] %vm570, %v615
      %v628 = vld [vmem:[#allocation2] sm:$0xff]
      %v629 = vld [vmem:[#allocation2 + $0x8] sm:$0xff]
      %v630 = vld [vmem:[#allocation2 + $0x10] sm:$0xff]
      %v631 = vld [vmem:[#allocation2 + $0x18] sm:$0xff]
      %636 = vrot.lane.b32.xlu0 %v628, 110
      %v637 = vpop.permute.xlu0 %636
      %638 = vrot.lane.b32.xlu0 %v629, 110
      %v639 = vpop.permute.xlu0 %638
      %640 = vrot.lane.b32.xlu0 %v630, 110
      %v641 = vpop.permute.xlu0 %640
      %642 = vrot.lane.b32.xlu0 %v631, 110
      %v643 = vpop.permute.xlu0 %642
      %vm644 = vcmask 900096
      %v645 = vsel %vm644, %v637, %v639
      %v646 = vsel %vm644, %v639, %v641
      %v647 = vsel %vm644, %v641, %v643
      %652 = vst [vmem:[#allocation3 + $0x60] sm:$0xff] %v645
      %653 = vst [vmem:[#allocation3 + $0x68] sm:$0xff] %v646
      %654 = vst [vmem:[#allocation3 + $0x70] sm:$0xff] %v647
      %655 = vst.msk [vmem:[#allocation3 + $0x78] sm:$0xff] %vm570, %v643
      %v656 = vld [vmem:[#allocation2] sm:$0xff]
      %v657 = vld [vmem:[#allocation2 + $0x8] sm:$0xff]
      %v658 = vld [vmem:[#allocation2 + $0x10] sm:$0xff]
      %v659 = vld [vmem:[#allocation2 + $0x18] sm:$0xff]
      %664 = vrot.lane.b32.xlu0 %v656, 109
      %v665 = vpop.permute.xlu0 %664
      %666 = vrot.lane.b32.xlu0 %v657, 109
      %v667 = vpop.permute.xlu0 %666
      %668 = vrot.lane.b32.xlu0 %v658, 109
      %v669 = vpop.permute.xlu0 %668
      %670 = vrot.lane.b32.xlu0 %v659, 109
      %v671 = vpop.permute.xlu0 %670
      %vm672 = vcmask 891904
      %v673 = vsel %vm672, %v665, %v667
      %v674 = vsel %vm672, %v667, %v669
      %v675 = vsel %vm672, %v669, %v671
      %680 = vst [vmem:[#allocation3 + $0x80] sm:$0xff] %v673
      %681 = vst [vmem:[#allocation3 + $0x88] sm:$0xff] %v674
      %682 = vst [vmem:[#allocation3 + $0x90] sm:$0xff] %v675
      %683 = vst.msk [vmem:[#allocation3 + $0x98] sm:$0xff] %vm570, %v671
      %v684 = vld [vmem:[#allocation2] sm:$0xff]
      %v685 = vld [vmem:[#allocation2 + $0x8] sm:$0xff]
      %v686 = vld [vmem:[#allocation2 + $0x10] sm:$0xff]
      %v687 = vld [vmem:[#allocation2 + $0x18] sm:$0xff]
      %692 = vrot.lane.b32.xlu0 %v684, 108
      %v693 = vpop.permute.xlu0 %692
      %694 = vrot.lane.b32.xlu0 %v685, 108
      %v695 = vpop.permute.xlu0 %694
      %696 = vrot.lane.b32.xlu0 %v686, 108
      %v697 = vpop.permute.xlu0 %696
      %698 = vrot.lane.b32.xlu0 %v687, 108
      %v699 = vpop.permute.xlu0 %698
      %vm700 = vcmask 883712
      %v701 = vsel %vm700, %v693, %v695
      %v702 = vsel %vm700, %v695, %v697
      %v703 = vsel %vm700, %v697, %v699
      %708 = vst [vmem:[#allocation3 + $0xa0] sm:$0xff] %v701
      %709 = vst [vmem:[#allocation3 + $0xa8] sm:$0xff] %v702
      %710 = vst [vmem:[#allocation3 + $0xb0] sm:$0xff] %v703
      %711 = vst.msk [vmem:[#allocation3 + $0xb8] sm:$0xff] %vm570, %v699
      %v712 = vld [vmem:[#allocation2] sm:$0xff]
      %v713 = vld [vmem:[#allocation2 + $0x8] sm:$0xff]
      %v714 = vld [vmem:[#allocation2 + $0x10] sm:$0xff]
      %v715 = vld [vmem:[#allocation2 + $0x18] sm:$0xff]
      %720 = vrot.lane.b32.xlu0 %v712, 92
      %v721 = vpop.permute.xlu0 %720
      %722 = vrot.lane.b32.xlu0 %v713, 92
      %v723 = vpop.permute.xlu0 %722
      %724 = vrot.lane.b32.xlu0 %v714, 92
      %v725 = vpop.permute.xlu0 %724
      %726 = vrot.lane.b32.xlu0 %v715, 92
      %v727 = vpop.permute.xlu0 %726
      %vm728 = vcmask 752640
      %v729 = vsel %vm728, %v721, %v723
      %v730 = vsel %vm728, %v723, %v725
      %v731 = vsel %vm728, %v725, %v727
      %736 = vst [vmem:[#allocation3 + $0xc0] sm:$0xff] %v729
      %737 = vst [vmem:[#allocation3 + $0xc8] sm:$0xff] %v730
      %738 = vst [vmem:[#allocation3 + $0xd0] sm:$0xff] %v731
      %739 = vst.msk [vmem:[#allocation3 + $0xd8] sm:$0xff] %vm570, %v727
      %v740 = vld [vmem:[#allocation2] sm:$0xff]
      %v741 = vld [vmem:[#allocation2 + $0x8] sm:$0xff]
      %v742 = vld [vmem:[#allocation2 + $0x10] sm:$0xff]
      %v743 = vld [vmem:[#allocation2 + $0x18] sm:$0xff]
      %748 = vrot.lane.b32.xlu0 %v740, 91
      %v749 = vpop.permute.xlu0 %748
      %750 = vrot.lane.b32.xlu0 %v741, 91
      %v751 = vpop.permute.xlu0 %750
      %752 = vrot.lane.b32.xlu0 %v742, 91
      %v753 = vpop.permute.xlu0 %752
      %754 = vrot.lane.b32.xlu0 %v743, 91
      %v755 = vpop.permute.xlu0 %754
      %vm756 = vcmask 744448
      %v757 = vsel %vm756, %v749, %v751
      %v758 = vsel %vm756, %v751, %v753
      %v759 = vsel %vm756, %v753, %v755
      %764 = vst [vmem:[#allocation3 + $0xe0] sm:$0xff] %v757
      %765 = vst [vmem:[#allocation3 + $0xe8] sm:$0xff] %v758
      %766 = vst [vmem:[#allocation3 + $0xf0] sm:$0xff] %v759
      %767 = vst.msk [vmem:[#allocation3 + $0xf8] sm:$0xff] %vm570, %v755
      %v768 = vld [vmem:[#allocation2] sm:$0xff]
      %v769 = vld [vmem:[#allocation2 + $0x8] sm:$0xff]
      %v770 = vld [vmem:[#allocation2 + $0x10] sm:$0xff]
      %v771 = vld [vmem:[#allocation2 + $0x18] sm:$0xff]
      %776 = vrot.lane.b32.xlu0 %v768, 90
      %v777 = vpop.permute.xlu0 %776
      %778 = vrot.lane.b32.xlu0 %v769, 90
      %v779 = vpop.permute.xlu0 %778
      %780 = vrot.lane.b32.xlu0 %v770, 90
      %v781 = vpop.permute.xlu0 %780
      %782 = vrot.lane.b32.xlu0 %v771, 90
      %v783 = vpop.permute.xlu0 %782
      %vm784 = vcmask 736256
      %v785 = vsel %vm784, %v777, %v779
      %v786 = vsel %vm784, %v779, %v781
      %v787 = vsel %vm784, %v781, %v783
      %792 = vst [vmem:[#allocation3 + $0x100] sm:$0xff] %v785
      %793 = vst [vmem:[#allocation3 + $0x108] sm:$0xff] %v786
      %794 = vst [vmem:[#allocation3 + $0x110] sm:$0xff] %v787
      %795 = vst.msk [vmem:[#allocation3 + $0x118] sm:$0xff] %vm570, %v783
      %v796 = vld [vmem:[%s2] sm:$0xff]
      %v797 = vld [vmem:[#allocation3] sm:$0xff]
      %v798 = vld [vmem:[#allocation3 + $0x8] sm:$0xff]
      %v799 = vld [vmem:[#allocation3 + $0x10] sm:$0xff]
      %v800 = vld [vmem:[#allocation3 + $0x18] sm:$0xff]
      %v801 = vld [vmem:[#allocation3 + $0x20] sm:$0xff]
      %v802 = vld [vmem:[#allocation3 + $0x28] sm:$0xff]
      %v803 = vld [vmem:[#allocation3 + $0x30] sm:$0xff]
      %v804 = vld [vmem:[#allocation3 + $0x38] sm:$0xff]
      %v805 = vld [vmem:[#allocation3 + $0x40] sm:$0xff]
      %v806 = vld [vmem:[#allocation3 + $0x48] sm:$0xff]
      %v807 = vld [vmem:[#allocation3 + $0x50] sm:$0xff]
      %v808 = vld [vmem:[#allocation3 + $0x58] sm:$0xff]
      %v809 = vld [vmem:[#allocation3 + $0x60] sm:$0xff]
      %v810 = vld [vmem:[#allocation3 + $0x68] sm:$0xff]
      %v811 = vld [vmem:[#allocation3 + $0x70] sm:$0xff]
      %v812 = vld [vmem:[#allocation3 + $0x78] sm:$0xff]
      %v813 = vld [vmem:[#allocation3 + $0x80] sm:$0xff]
      %v814 = vld [vmem:[#allocation3 + $0x88] sm:$0xff]
      %v815 = vld [vmem:[#allocation3 + $0x90] sm:$0xff]
      %v816 = vld [vmem:[#allocation3 + $0x98] sm:$0xff]
      %v817 = vld [vmem:[#allocation3 + $0xa0] sm:$0xff]
      %v818 = vld [vmem:[#allocation3 + $0xa8] sm:$0xff]
      %v819 = vld [vmem:[#allocation3 + $0xb0] sm:$0xff]
      %v820 = vld [vmem:[#allocation3 + $0xb8] sm:$0xff]
      %v821 = vld [vmem:[#allocation3 + $0xc0] sm:$0xff]
      %v822 = vld [vmem:[#allocation3 + $0xc8] sm:$0xff]
      %v823 = vld [vmem:[#allocation3 + $0xd0] sm:$0xff]
      %v824 = vld [vmem:[#allocation3 + $0xd8] sm:$0xff]
      %v825 = vld [vmem:[#allocation3 + $0xe0] sm:$0xff]
      %v826 = vld [vmem:[#allocation3 + $0xe8] sm:$0xff]
      %v827 = vld [vmem:[#allocation3 + $0xf0] sm:$0xff]
      %v828 = vld [vmem:[#allocation3 + $0xf8] sm:$0xff]
      %v829 = vld [vmem:[#allocation3 + $0x100] sm:$0xff]
      %v830 = vld [vmem:[#allocation3 + $0x108] sm:$0xff]
      %v831 = vld [vmem:[#allocation3 + $0x110] sm:$0xff]
      %v832 = vld [vmem:[#allocation3 + $0x118] sm:$0xff]
      %v833 = vld [vmem:[%s3] sm:$0xff]
      %835 = vset.pattern.permute.xlu0 0
      %836 = vperm.xlu0 %835, %v833
      %v837 = vpop.permute.xlu0 %836
      %v840 = vunpack.c.l.b16 %v796
      %v841 = vunpack.c.h.b16 %v796
      %v842 = vpack.c.b16 %v840, %v840
      %v843 = vpack.c.b16 %v841, %v841
      %vm845 = vcmask 130048
      %v847 = vsel %vm845, %v843, 0
      %849 = vmatprep.subr.bf16.mxu0 %v798
      %850 = vmatpush1.bf16.msra.mxu0 %v797
      %851 = vmatprep.subr.bf16.mxu0 %v802
      %852 = vmatpush1.bf16.msra.mxu0 %v801
      %853 = vmatprep.subr.bf16.mxu0 %v806
      %854 = vmatpush1.bf16.msra.mxu0 %v805
      %855 = vmatprep.subr.bf16.mxu0 %v810
      %856 = vmatpush1.bf16.msra.mxu0 %v809
      %857 = vmatprep.subr.bf16.mxu0 %v814
      %858 = vmatpush1.bf16.msra.mxu0 %v813
      %859 = vmatprep.subr.bf16.mxu0 %v818
      %860 = vmatpush1.bf16.msra.mxu0 %v817
      %861 = vmatprep.subr.bf16.mxu0 %v822
      %862 = vmatpush1.bf16.msra.mxu0 %v821
      %863 = vmatprep.subr.bf16.mxu0 %v826
      %864 = vmatpush1.bf16.msra.mxu0 %v825
      %865 = vmatprep.subr.bf16.mxu0 %v830
      %866 = vmatpush1.bf16.msra.mxu0 %v829
      %867 = vmatprep.subr.bf16.mxu0 0
      %868 = vmatpush1.bf16.msra.mxu0 0
      %869 = vmatprep.subr.bf16.mxu0 0
      %870 = vmatpush1.bf16.msra.mxu0 0
      %871 = vmatprep.subr.bf16.mxu0 0
      %872 = vmatpush1.bf16.msra.mxu0 0
      %873 = vmatprep.subr.bf16.mxu0 0
      %874 = vmatpush1.bf16.msra.mxu0 0
      %875 = vmatprep.subr.bf16.mxu0 0
      %876 = vmatpush1.bf16.msra.mxu0 0
      %877 = vmatprep.subr.bf16.mxu0 0
      %878 = vmatpush1.bf16.msra.mxu0 0
      %879 = vmatprep.subr.bf16.mxu0 0
      %880 = vmatpush1.bf16.msra.mxu0 0
      %881 = vmatprep.mubr.bf16.mxu0 %v847
      %882 = vmatmul.mubr.bf16.gmra.mrb[0].mxu0 %v842
      %v883 = vpop.f32.mrb[0].mxu0
      %v884 = vadd.f32 %v837, %v883
      %v885 = vpop.f32.mrb[0].mxu0
      %v886 = vadd.f32 %v837, %v885
      %v887 = vpop.f32.mrb[0].mxu0
      %v888 = vpop.f32.mrb[0].mxu0
      %889 = vdwg.mxu0
      %890 = vmatprep.subr.bf16.mxu0 %v800
      %891 = vmatpush1.bf16.msra.mxu0 %v799
      %892 = vmatprep.subr.bf16.mxu0 %v804
      %893 = vmatpush1.bf16.msra.mxu0 %v803
      %894 = vmatprep.subr.bf16.mxu0 %v808
      %895 = vmatpush1.bf16.msra.mxu0 %v807
      %896 = vmatprep.subr.bf16.mxu0 %v812
      %897 = vmatpush1.bf16.msra.mxu0 %v811
      %898 = vmatprep.subr.bf16.mxu0 %v816
      %899 = vmatpush1.bf16.msra.mxu0 %v815
      %900 = vmatprep.subr.bf16.mxu0 %v820
      %901 = vmatpush1.bf16.msra.mxu0 %v819
      %902 = vmatprep.subr.bf16.mxu0 %v824
      %903 = vmatpush1.bf16.msra.mxu0 %v823
      %904 = vmatprep.subr.bf16.mxu0 %v828
      %905 = vmatpush1.bf16.msra.mxu0 %v827
      %906 = vmatprep.subr.bf16.mxu0 %v832
      %907 = vmatpush1.bf16.msra.mxu0 %v831
      %908 = vmatprep.subr.bf16.mxu0 0
      %909 = vmatpush1.bf16.msra.mxu0 0
      %910 = vmatprep.subr.bf16.mxu0 0
      %911 = vmatpush1.bf16.msra.mxu0 0
      %912 = vmatprep.subr.bf16.mxu0 0
      %913 = vmatpush1.bf16.msra.mxu0 0
      %914 = vmatprep.subr.bf16.mxu0 0
      %915 = vmatpush1.bf16.msra.mxu0 0
      %916 = vmatprep.subr.bf16.mxu0 0
      %917 = vmatpush1.bf16.msra.mxu0 0
      %918 = vmatprep.subr.bf16.mxu0 0
      %919 = vmatpush1.bf16.msra.mxu0 0
      %920 = vmatprep.subr.bf16.mxu0 0
      %921 = vmatpush1.bf16.msra.mxu0 0
      %922 = vmatprep.mubr.bf16.mxu0 %v847
      %923 = vmatmul.mubr.bf16.gmra.mrb[0].mxu0 %v842
      %v924 = vpop.f32.mrb[0].mxu0
      %v925 = vadd.f32 %v837, %v924
      %v926 = vpop.f32.mrb[0].mxu0
      %v927 = vadd.f32 %v837, %v926
      %v928 = vpop.f32.mrb[0].mxu0
      %v929 = vpop.f32.mrb[0].mxu0
      %930 = vdwg.mxu0
      %v931 = vmax.f32 %v884, 0.0
      %v932 = vmax.f32 %v886, 0.0
      %v933 = vmax.f32 %v925, 0.0
      %v934 = vmax.f32 %v927, 0.0
      %v935 = vld [vmem:[%s8] sm:$0xf]
      %v937 = vlaneseq
      %v938 = vshrl.u32 %v937, 7
      %v939 = vsub.s32 0, %v938
      %v940 = vrot.slane %v935, %v939
      %v941 = vlaneseq
      %v942 = vshrl.u32 %v941, 7
      %v943 = vsub.s32 1, %v942
      %v944 = vrot.slane %v935, %v943
      %v945 = vlaneseq
      %v946 = vshrl.u32 %v945, 7
      %v947 = vsub.s32 2, %v946
      %v948 = vrot.slane %v935, %v947
      %v949 = vlaneseq
      %v950 = vshrl.u32 %v949, 7
      %v951 = vsub.s32 3, %v950
      %v952 = vrot.slane %v935, %v951
      %v957 = vmul.f32 %v931, %v940
      %v958 = vmul.f32 %v932, %v944
      %v959 = vmul.f32 %v933, %v948
      %v960 = vmul.f32 %v934, %v952
      %v961 = vpack.c.bf16 %v957, %v957
      %v962 = vpack.c.bf16 %v958, %v958
      %v963 = vpack.c.bf16 %v959, %v959
      %v964 = vpack.c.bf16 %v960, %v960
      %v969 = vunpack.c.l.b16 %v961
      %v970 = vunpack.c.l.b16 %v962
      %v971 = vunpack.c.l.b16 %v963
      %v972 = vunpack.c.l.b16 %v964
      %v973 = vpack.c.b16 %v970, %v969
      %v974 = vpack.c.b16 %v972, %v971
      %977 = vst [vmem:[#allocation6] sm:$0xff] %v973
      %vm978 = vcmask 1043456
      %vm979 = vcmask 621572
      %vm980 = vmor %vm979, %vm978
      %981 = vst.msk [vmem:[#allocation6 + $0x8] sm:$0xff] %vm980, %v974
      %v982 = vld [vmem:[#allocation6] sm:$0xff]
      %v983 = vld [vmem:[#allocation6 + $0x8] sm:$0xff]
      %984 = vst [vmem:[#allocation4] sm:$0xff] %v982
      %vm985 = vcmask 310276
      %vm986 = vmor %vm985, %vm978
      %987 = vst.msk [vmem:[#allocation4 + $0x8] sm:$0xff] %vm986, %v983
      %v988 = vld [vmem:[#allocation6] sm:$0xff]
      %v989 = vld [vmem:[#allocation6 + $0x8] sm:$0xff]
      %992 = vrot.lane.b32.xlu0 %v988, 127
      %v993 = vpop.permute.xlu0 %992
      %994 = vrot.lane.b32.xlu0 %v989, 127
      %v995 = vpop.permute.xlu0 %994
      %v996 = vrot.slane %v993, 4
      %v997 = vrot.slane %v995, 4
      %vm998 = vcmask 1043456
      %v999 = vsel %vm998, %v996, %v997
      %v1000 = vsel %vm588, %v993, %v999
      %v1001 = vsel %vm588, %v995, %v997
      %1004 = vst [vmem:[#allocation4 + $0x10] sm:$0xff] %v1000
      %1005 = vst.msk [vmem:[#allocation4 + $0x18] sm:$0xff] %vm986, %v1001
      %v1006 = vld [vmem:[#allocation6] sm:$0xff]
      %v1007 = vld [vmem:[#allocation6 + $0x8] sm:$0xff]
      %1010 = vrot.lane.b32.xlu0 %v1006, 126
      %v1011 = vpop.permute.xlu0 %1010
      %1012 = vrot.lane.b32.xlu0 %v1007, 126
      %v1013 = vpop.permute.xlu0 %1012
      %v1014 = vrot.slane %v1011, 4
      %v1015 = vrot.slane %v1013, 4
      %v1016 = vsel %vm998, %v1014, %v1015
      %v1017 = vsel %vm616, %v1011, %v1016
      %v1018 = vsel %vm616, %v1013, %v1015
      %1021 = vst [vmem:[#allocation4 + $0x20] sm:$0xff] %v1017
      %1022 = vst.msk [vmem:[#allocation4 + $0x28] sm:$0xff] %vm986, %v1018
      %v1023 = vld [vmem:[#allocation6] sm:$0xff]
      %v1024 = vld [vmem:[#allocation6 + $0x8] sm:$0xff]
      %1027 = vrot.lane.b32.xlu0 %v1023, 110
      %v1028 = vpop.permute.xlu0 %1027
      %1029 = vrot.lane.b32.xlu0 %v1024, 110
      %v1030 = vpop.permute.xlu0 %1029
      %v1031 = vrot.slane %v1028, 4
      %v1032 = vrot.slane %v1030, 4
      %v1033 = vsel %vm998, %v1031, %v1032
      %v1034 = vsel %vm644, %v1028, %v1033
      %v1035 = vsel %vm644, %v1030, %v1032
      %1038 = vst [vmem:[#allocation4 + $0x30] sm:$0xff] %v1034
      %1039 = vst.msk [vmem:[#allocation4 + $0x38] sm:$0xff] %vm986, %v1035
      %v1040 = vld [vmem:[#allocation6] sm:$0xff]
      %v1041 = vld [vmem:[#allocation6 + $0x8] sm:$0xff]
      %1044 = vrot.lane.b32.xlu0 %v1040, 109
      %v1045 = vpop.permute.xlu0 %1044
      %1046 = vrot.lane.b32.xlu0 %v1041, 109
      %v1047 = vpop.permute.xlu0 %1046
      %v1048 = vrot.slane %v1045, 4
      %v1049 = vrot.slane %v1047, 4
      %v1050 = vsel %vm998, %v1048, %v1049
      %v1051 = vsel %vm672, %v1045, %v1050
      %v1052 = vsel %vm672, %v1047, %v1049
      %1055 = vst [vmem:[#allocation4 + $0x40] sm:$0xff] %v1051
      %1056 = vst.msk [vmem:[#allocation4 + $0x48] sm:$0xff] %vm986, %v1052
      %v1057 = vld [vmem:[#allocation6] sm:$0xff]
      %v1058 = vld [vmem:[#allocation6 + $0x8] sm:$0xff]
      %1061 = vrot.lane.b32.xlu0 %v1057, 108
      %v1062 = vpop.permute.xlu0 %1061
      %1063 = vrot.lane.b32.xlu0 %v1058, 108
      %v1064 = vpop.permute.xlu0 %1063
      %v1065 = vrot.slane %v1062, 4
      %v1066 = vrot.slane %v1064, 4
      %v1067 = vsel %vm998, %v1065, %v1066
      %v1068 = vsel %vm700, %v1062, %v1067
      %v1069 = vsel %vm700, %v1064, %v1066
      %1072 = vst [vmem:[#allocation4 + $0x50] sm:$0xff] %v1068
      %1073 = vst.msk [vmem:[#allocation4 + $0x58] sm:$0xff] %vm986, %v1069
      %v1074 = vld [vmem:[#allocation6] sm:$0xff]
      %v1075 = vld [vmem:[#allocation6 + $0x8] sm:$0xff]
      %1078 = vrot.lane.b32.xlu0 %v1074, 92
      %v1079 = vpop.permute.xlu0 %1078
      %1080 = vrot.lane.b32.xlu0 %v1075, 92
      %v1081 = vpop.permute.xlu0 %1080
      %v1082 = vrot.slane %v1079, 4
      %v1083 = vrot.slane %v1081, 4
      %v1084 = vsel %vm998, %v1082, %v1083
      %v1085 = vsel %vm728, %v1079, %v1084
      %v1086 = vsel %vm728, %v1081, %v1083
      %1089 = vst [vmem:[#allocation4 + $0x60] sm:$0xff] %v1085
      %1090 = vst.msk [vmem:[#allocation4 + $0x68] sm:$0xff] %vm986, %v1086
      %v1091 = vld [vmem:[#allocation6] sm:$0xff]
      %v1092 = vld [vmem:[#allocation6 + $0x8] sm:$0xff]
      %1095 = vrot.lane.b32.xlu0 %v1091, 91
      %v1096 = vpop.permute.xlu0 %1095
      %1097 = vrot.lane.b32.xlu0 %v1092, 91
      %v1098 = vpop.permute.xlu0 %1097
      %v1099 = vrot.slane %v1096, 4
      %v1100 = vrot.slane %v1098, 4
      %v1101 = vsel %vm998, %v1099, %v1100
      %v1102 = vsel %vm756, %v1096, %v1101
      %v1103 = vsel %vm756, %v1098, %v1100
      %1106 = vst [vmem:[#allocation4 + $0x70] sm:$0xff] %v1102
      %1107 = vst.msk [vmem:[#allocation4 + $0x78] sm:$0xff] %vm986, %v1103
      %v1108 = vld [vmem:[#allocation6] sm:$0xff]
      %v1109 = vld [vmem:[#allocation6 + $0x8] sm:$0xff]
      %1112 = vrot.lane.b32.xlu0 %v1108, 90
      %v1113 = vpop.permute.xlu0 %1112
      %1114 = vrot.lane.b32.xlu0 %v1109, 90
      %v1115 = vpop.permute.xlu0 %1114
      %v1116 = vrot.slane %v1113, 4
      %v1117 = vrot.slane %v1115, 4
      %v1118 = vsel %vm998, %v1116, %v1117
      %v1119 = vsel %vm784, %v1113, %v1118
      %v1120 = vsel %vm784, %v1115, %v1117
      %1123 = vst [vmem:[#allocation4 + $0x80] sm:$0xff] %v1119
      %1124 = vst.msk [vmem:[#allocation4 + $0x88] sm:$0xff] %vm986, %v1120
      %v1125 = vld [vmem:[%s4] sm:$0xf]
      %v1126 = vld [vmem:[#allocation4] sm:$0xff]
      %v1127 = vld [vmem:[#allocation4 + $0x8] sm:$0xff]
      %v1128 = vld [vmem:[#allocation4 + $0x10] sm:$0xff]
      %v1129 = vld [vmem:[#allocation4 + $0x18] sm:$0xff]
      %v1130 = vld [vmem:[#allocation4 + $0x20] sm:$0xff]
      %v1131 = vld [vmem:[#allocation4 + $0x28] sm:$0xff]
      %v1132 = vld [vmem:[#allocation4 + $0x30] sm:$0xff]
      %v1133 = vld [vmem:[#allocation4 + $0x38] sm:$0xff]
      %v1134 = vld [vmem:[#allocation4 + $0x40] sm:$0xff]
      %v1135 = vld [vmem:[#allocation4 + $0x48] sm:$0xff]
      %v1136 = vld [vmem:[#allocation4 + $0x50] sm:$0xff]
      %v1137 = vld [vmem:[#allocation4 + $0x58] sm:$0xff]
      %v1138 = vld [vmem:[#allocation4 + $0x60] sm:$0xff]
      %v1139 = vld [vmem:[#allocation4 + $0x68] sm:$0xff]
      %v1140 = vld [vmem:[#allocation4 + $0x70] sm:$0xff]
      %v1141 = vld [vmem:[#allocation4 + $0x78] sm:$0xff]
      %v1142 = vld [vmem:[#allocation4 + $0x80] sm:$0xff]
      %v1143 = vld [vmem:[#allocation4 + $0x88] sm:$0xff]
      %v1144 = vld [vmem:[%s5] sm:$0xff]
      %1146 = vset.pattern.permute.xlu0 0
      %1147 = vperm.xlu0 %1146, %v1144
      %v1148 = vpop.permute.xlu0 %1147
      %v1168 = vunpack.c.l.b16 %v1126
      %v1169 = vunpack.c.h.b16 %v1126
      %v1170 = vunpack.c.l.b16 %v1127
      %v1171 = vunpack.c.h.b16 %v1127
      %v1172 = vunpack.c.l.b16 %v1128
      %v1173 = vunpack.c.h.b16 %v1128
      %v1174 = vunpack.c.l.b16 %v1129
      %v1175 = vunpack.c.h.b16 %v1129
      %v1176 = vunpack.c.l.b16 %v1130
      %v1177 = vunpack.c.h.b16 %v1130
      %v1178 = vunpack.c.l.b16 %v1131
      %v1179 = vunpack.c.h.b16 %v1131
      %v1180 = vunpack.c.l.b16 %v1132
      %v1181 = vunpack.c.h.b16 %v1132
      %v1182 = vunpack.c.l.b16 %v1133
      %v1183 = vunpack.c.h.b16 %v1133
      %v1184 = vunpack.c.l.b16 %v1134
      %v1185 = vunpack.c.h.b16 %v1134
      %v1186 = vunpack.c.l.b16 %v1135
      %v1187 = vunpack.c.h.b16 %v1135
      %v1188 = vunpack.c.l.b16 %v1136
      %v1189 = vunpack.c.h.b16 %v1136
      %v1190 = vunpack.c.l.b16 %v1137
      %v1191 = vunpack.c.h.b16 %v1137
      %v1192 = vunpack.c.l.b16 %v1138
      %v1193 = vunpack.c.h.b16 %v1138
      %v1194 = vunpack.c.l.b16 %v1139
      %v1195 = vunpack.c.h.b16 %v1139
      %v1196 = vunpack.c.l.b16 %v1140
      %v1197 = vunpack.c.h.b16 %v1140
      %v1198 = vunpack.c.l.b16 %v1141
      %v1199 = vunpack.c.h.b16 %v1141
      %v1200 = vunpack.c.l.b16 %v1142
      %v1201 = vunpack.c.h.b16 %v1142
      %v1202 = vunpack.c.l.b16 %v1143
      %v1203 = vunpack.c.h.b16 %v1143
      %v1204 = vpack.c.b16 %v1172, %v1168
      %v1205 = vpack.c.b16 %v1173, %v1169
      %v1206 = vpack.c.b16 %v1174, %v1170
      %v1207 = vpack.c.b16 %v1175, %v1171
      %v1208 = vpack.c.b16 %v1180, %v1176
      %v1209 = vpack.c.b16 %v1181, %v1177
      %v1210 = vpack.c.b16 %v1182, %v1178
      %v1211 = vpack.c.b16 %v1183, %v1179
      %v1212 = vpack.c.b16 %v1188, %v1184
      %v1213 = vpack.c.b16 %v1189, %v1185
      %v1214 = vpack.c.b16 %v1190, %v1186
      %v1215 = vpack.c.b16 %v1191, %v1187
      %v1216 = vpack.c.b16 %v1196, %v1192
      %v1217 = vpack.c.b16 %v1197, %v1193
      %v1218 = vpack.c.b16 %v1198, %v1194
      %v1219 = vpack.c.b16 %v1199, %v1195
      %v1220 = vpack.c.b16 %v1200, %v1200
      %v1221 = vpack.c.b16 %v1201, %v1201
      %v1222 = vpack.c.b16 %v1202, %v1202
      %v1223 = vpack.c.b16 %v1203, %v1203
      %vm1240 = vcmask 588800
      %v1242 = vsel %vm1240, %v1125, 0
      %v1245 = vsel %vm978, %v1220, 0
      %v1248 = vsel %vm978, %v1221, 0
      %v1251 = vsel %vm978, %v1222, 0
      %v1254 = vsel %vm978, %v1223, 0
      %1256 = vmatprep.subr.bf16.mxu0 %v1205
      %1257 = vmatpush1.bf16.msra.mxu0 %v1204
      %1258 = vmatprep.subr.bf16.mxu0 %v1209
      %1259 = vmatpush1.bf16.msra.mxu0 %v1208
      %1260 = vmatprep.subr.bf16.mxu0 %v1213
      %1261 = vmatpush1.bf16.msra.mxu0 %v1212
      %1262 = vmatprep.subr.bf16.mxu0 %v1217
      %1263 = vmatpush1.bf16.msra.mxu0 %v1216
      %1264 = vmatprep.subr.bf16.mxu0 %v1248
      %1265 = vmatpush1.bf16.msra.mxu0 %v1245
      %1266 = vmatprep.subr.bf16.mxu0 0
      %1267 = vmatpush1.bf16.msra.mxu0 0
      %1268 = vmatprep.subr.bf16.mxu0 0
      %1269 = vmatpush1.bf16.msra.mxu0 0
      %1270 = vmatprep.subr.bf16.mxu0 0
      %1271 = vmatpush1.bf16.msra.mxu0 0
      %1272 = vmatprep.subr.bf16.mxu0 0
      %1273 = vmatpush1.bf16.msra.mxu0 0
      %1274 = vmatprep.subr.bf16.mxu0 0
      %1275 = vmatpush1.bf16.msra.mxu0 0
      %1276 = vmatprep.subr.bf16.mxu0 0
      %1277 = vmatpush1.bf16.msra.mxu0 0
      %1278 = vmatprep.subr.bf16.mxu0 0
      %1279 = vmatpush1.bf16.msra.mxu0 0
      %1280 = vmatprep.subr.bf16.mxu0 0
      %1281 = vmatpush1.bf16.msra.mxu0 0
      %1282 = vmatprep.subr.bf16.mxu0 0
      %1283 = vmatpush1.bf16.msra.mxu0 0
      %1284 = vmatprep.subr.bf16.mxu0 0
      %1285 = vmatpush1.bf16.msra.mxu0 0
      %1286 = vmatprep.subr.bf16.mxu0 0
      %1287 = vmatpush1.bf16.msra.mxu0 0
      %1288 = vmatprep.mubr.bf16.mxu0 0
      %1289 = vmatmul.mubr.bf16.gmra.mrb[0].mxu0 %v1242
      %v1290 = vpop.f32.mrb[0].mxu0
      %v1291 = vadd.f32 %v1148, %v1290
      %v1292 = vpop.f32.mrb[0].mxu0
      %v1293 = vadd.f32 %v1148, %v1292
      %v1294 = vpop.f32.mrb[0].mxu0
      %v1295 = vpop.f32.mrb[0].mxu0
      %1296 = vdwg.mxu0
      %1297 = vmatprep.subr.bf16.mxu0 %v1207
      %1298 = vmatpush1.bf16.msra.mxu0 %v1206
      %1299 = vmatprep.subr.bf16.mxu0 %v1211
      %1300 = vmatpush1.bf16.msra.mxu0 %v1210
      %1301 = vmatprep.subr.bf16.mxu0 %v1215
      %1302 = vmatpush1.bf16.msra.mxu0 %v1214
      %1303 = vmatprep.subr.bf16.mxu0 %v1219
      %1304 = vmatpush1.bf16.msra.mxu0 %v1218
      %1305 = vmatprep.subr.bf16.mxu0 %v1254
      %1306 = vmatpush1.bf16.msra.mxu0 %v1251
      %1307 = vmatprep.subr.bf16.mxu0 0
      %1308 = vmatpush1.bf16.msra.mxu0 0
      %1309 = vmatprep.subr.bf16.mxu0 0
      %1310 = vmatpush1.bf16.msra.mxu0 0
      %1311 = vmatprep.subr.bf16.mxu0 0
      %1312 = vmatpush1.bf16.msra.mxu0 0
      %1313 = vmatprep.subr.bf16.mxu0 0
      %1314 = vmatpush1.bf16.msra.mxu0 0
      %1315 = vmatprep.subr.bf16.mxu0 0
      %1316 = vmatpush1.bf16.msra.mxu0 0
      %1317 = vmatprep.subr.bf16.mxu0 0
      %1318 = vmatpush1.bf16.msra.mxu0 0
      %1319 = vmatprep.subr.bf16.mxu0 0
      %1320 = vmatpush1.bf16.msra.mxu0 0
      %1321 = vmatprep.subr.bf16.mxu0 0
      %1322 = vmatpush1.bf16.msra.mxu0 0
      %1323 = vmatprep.subr.bf16.mxu0 0
      %1324 = vmatpush1.bf16.msra.mxu0 0
      %1325 = vmatprep.subr.bf16.mxu0 0
      %1326 = vmatpush1.bf16.msra.mxu0 0
      %1327 = vmatprep.subr.bf16.mxu0 0
      %1328 = vmatpush1.bf16.msra.mxu0 0
      %1329 = vmatprep.mubr.bf16.mxu0 0
      %1330 = vmatmul.mubr.bf16.gmra.mrb[0].mxu0 %v1242
      %v1331 = vpop.f32.mrb[0].mxu0
      %v1332 = vadd.f32 %v1148, %v1331
      %v1333 = vpop.f32.mrb[0].mxu0
      %v1334 = vadd.f32 %v1148, %v1333
      %v1335 = vpop.f32.mrb[0].mxu0
      %v1336 = vpop.f32.mrb[0].mxu0
      %1337 = vdwg.mxu0
      %v1338 = vmax.f32 %v1291, 0.0
      %v1339 = vmax.f32 %v1293, 0.0
      %v1340 = vmax.f32 %v1332, 0.0
      %v1341 = vmax.f32 %v1334, 0.0
      %v1342 = vld [vmem:[%s9] sm:$0xf]
      %v1344 = vlaneseq
      %v1345 = vshrl.u32 %v1344, 7
      %v1346 = vsub.s32 0, %v1345
      %v1347 = vrot.slane %v1342, %v1346
      %v1348 = vlaneseq
      %v1349 = vshrl.u32 %v1348, 7
      %v1350 = vsub.s32 1, %v1349
      %v1351 = vrot.slane %v1342, %v1350
      %v1352 = vlaneseq
      %v1353 = vshrl.u32 %v1352, 7
      %v1354 = vsub.s32 2, %v1353
      %v1355 = vrot.slane %v1342, %v1354
      %v1356 = vlaneseq
      %v1357 = vshrl.u32 %v1356, 7
      %v1358 = vsub.s32 3, %v1357
      %v1359 = vrot.slane %v1342, %v1358
      %v1364 = vmul.f32 %v1338, %v1347
      %v1365 = vmul.f32 %v1339, %v1351
      %v1366 = vmul.f32 %v1340, %v1355
      %v1367 = vmul.f32 %v1341, %v1359
      %v1368 = vpack.c.bf16 %v1364, %v1364
      %v1369 = vpack.c.bf16 %v1365, %v1365
      %v1370 = vpack.c.bf16 %v1366, %v1366
      %v1371 = vpack.c.bf16 %v1367, %v1367
      %v1376 = vunpack.c.l.b16 %v1368
      %v1377 = vunpack.c.l.b16 %v1369
      %v1378 = vunpack.c.l.b16 %v1370
      %v1379 = vunpack.c.l.b16 %v1371
      %v1380 = vpack.c.b16 %v1377, %v1376
      %v1381 = vpack.c.b16 %v1379, %v1378
      %1384 = vst [vmem:[#allocation7] sm:$0xff] %v1380
      %1385 = vst.msk [vmem:[#allocation7 + $0x8] sm:$0xff] %vm986, %v1381
      %v1386 = vld [vmem:[#allocation7] sm:$0xff]
      %v1387 = vld [vmem:[#allocation7 + $0x8] sm:$0xf]
      %1388 = vst [vmem:[#allocation5] sm:$0xff] %v1386
      %1389 = vst [vmem:[#allocation5 + $0x8] sm:$0xf] %v1387
      %v1390 = vld [vmem:[#allocation7] sm:$0xff]
      %v1391 = vld [vmem:[#allocation7 + $0x8] sm:$0xff]
      %1394 = vrot.lane.b32.xlu0 %v1390, 127
      %v1395 = vpop.permute.xlu0 %1394
      %1396 = vrot.lane.b32.xlu0 %v1391, 127
      %v1397 = vpop.permute.xlu0 %1396
      %v1398 = vrot.slane %v1395, 4
      %v1399 = vrot.slane %v1397, 4
      %v1400 = vsel %vm998, %v1398, %v1399
      %v1401 = vsel %vm588, %v1395, %v1400
      %v1402 = vsel %vm588, %v1397, %v1399
      %1405 = vst [vmem:[#allocation5 + $0xc] sm:$0xff] %v1401
      %1406 = vst [vmem:[#allocation5 + $0x14] sm:$0xf] %v1402
      %v1407 = vld [vmem:[#allocation7] sm:$0xff]
      %v1408 = vld [vmem:[#allocation7 + $0x8] sm:$0xff]
      %1411 = vrot.lane.b32.xlu0 %v1407, 126
      %v1412 = vpop.permute.xlu0 %1411
      %1413 = vrot.lane.b32.xlu0 %v1408, 126
      %v1414 = vpop.permute.xlu0 %1413
      %v1415 = vrot.slane %v1412, 4
      %v1416 = vrot.slane %v1414, 4
      %v1417 = vsel %vm998, %v1415, %v1416
      %v1418 = vsel %vm616, %v1412, %v1417
      %v1419 = vsel %vm616, %v1414, %v1416
      %1422 = vst [vmem:[#allocation5 + $0x18] sm:$0xff] %v1418
      %1423 = vst [vmem:[#allocation5 + $0x20] sm:$0xf] %v1419
      %v1424 = vld [vmem:[#allocation7] sm:$0xff]
      %v1425 = vld [vmem:[#allocation7 + $0x8] sm:$0xff]
      %1428 = vrot.lane.b32.xlu0 %v1424, 110
      %v1429 = vpop.permute.xlu0 %1428
      %1430 = vrot.lane.b32.xlu0 %v1425, 110
      %v1431 = vpop.permute.xlu0 %1430
      %v1432 = vrot.slane %v1429, 4
      %v1433 = vrot.slane %v1431, 4
      %v1434 = vsel %vm998, %v1432, %v1433
      %v1435 = vsel %vm644, %v1429, %v1434
      %v1436 = vsel %vm644, %v1431, %v1433
      %1439 = vst [vmem:[#allocation5 + $0x24] sm:$0xff] %v1435
      %1440 = vst [vmem:[#allocation5 + $0x2c] sm:$0xf] %v1436
      %v1441 = vld [vmem:[#allocation7] sm:$0xff]
      %v1442 = vld [vmem:[#allocation7 + $0x8] sm:$0xff]
      %1445 = vrot.lane.b32.xlu0 %v1441, 109
      %v1446 = vpop.permute.xlu0 %1445
      %1447 = vrot.lane.b32.xlu0 %v1442, 109
      %v1448 = vpop.permute.xlu0 %1447
      %v1449 = vrot.slane %v1446, 4
      %v1450 = vrot.slane %v1448, 4
      %v1451 = vsel %vm998, %v1449, %v1450
      %v1452 = vsel %vm672, %v1446, %v1451
      %v1453 = vsel %vm672, %v1448, %v1450
      %1456 = vst [vmem:[#allocation5 + $0x30] sm:$0xff] %v1452
      %1457 = vst [vmem:[#allocation5 + $0x38] sm:$0xf] %v1453
      %v1458 = vld [vmem:[#allocation7] sm:$0xff]
      %v1459 = vld [vmem:[#allocation7 + $0x8] sm:$0xff]
      %1462 = vrot.lane.b32.xlu0 %v1458, 108
      %v1463 = vpop.permute.xlu0 %1462
      %1464 = vrot.lane.b32.xlu0 %v1459, 108
      %v1465 = vpop.permute.xlu0 %1464
      %v1466 = vrot.slane %v1463, 4
      %v1467 = vrot.slane %v1465, 4
      %v1468 = vsel %vm998, %v1466, %v1467
      %v1469 = vsel %vm700, %v1463, %v1468
      %v1470 = vsel %vm700, %v1465, %v1467
      %1473 = vst [vmem:[#allocation5 + $0x3c] sm:$0xff] %v1469
      %1474 = vst [vmem:[#allocation5 + $0x44] sm:$0xf] %v1470
      %v1475 = vld [vmem:[#allocation7] sm:$0xff]
      %v1476 = vld [vmem:[#allocation7 + $0x8] sm:$0xff]
      %1479 = vrot.lane.b32.xlu0 %v1475, 92
      %v1480 = vpop.permute.xlu0 %1479
      %1481 = vrot.lane.b32.xlu0 %v1476, 92
      %v1482 = vpop.permute.xlu0 %1481
      %v1483 = vrot.slane %v1480, 4
      %v1484 = vrot.slane %v1482, 4
      %v1485 = vsel %vm998, %v1483, %v1484
      %v1486 = vsel %vm728, %v1480, %v1485
      %v1487 = vsel %vm728, %v1482, %v1484
      %1490 = vst [vmem:[#allocation5 + $0x48] sm:$0xff] %v1486
      %1491 = vst [vmem:[#allocation5 + $0x50] sm:$0xf] %v1487
      %v1492 = vld [vmem:[#allocation7] sm:$0xff]
      %v1493 = vld [vmem:[#allocation7 + $0x8] sm:$0xff]
      %1496 = vrot.lane.b32.xlu0 %v1492, 91
      %v1497 = vpop.permute.xlu0 %1496
      %1498 = vrot.lane.b32.xlu0 %v1493, 91
      %v1499 = vpop.permute.xlu0 %1498
      %v1500 = vrot.slane %v1497, 4
      %v1501 = vrot.slane %v1499, 4
      %v1502 = vsel %vm998, %v1500, %v1501
      %v1503 = vsel %vm756, %v1497, %v1502
      %v1504 = vsel %vm756, %v1499, %v1501
      %1507 = vst [vmem:[#allocation5 + $0x54] sm:$0xff] %v1503
      %1508 = vst [vmem:[#allocation5 + $0x5c] sm:$0xf] %v1504
      %v1509 = vld [vmem:[#allocation7] sm:$0xff]
      %v1510 = vld [vmem:[#allocation7 + $0x8] sm:$0xff]
      %1513 = vrot.lane.b32.xlu0 %v1509, 90
      %v1514 = vpop.permute.xlu0 %1513
      %1515 = vrot.lane.b32.xlu0 %v1510, 90
      %v1516 = vpop.permute.xlu0 %1515
      %v1517 = vrot.slane %v1514, 4
      %v1518 = vrot.slane %v1516, 4
      %v1519 = vsel %vm998, %v1517, %v1518
      %v1520 = vsel %vm784, %v1514, %v1519
      %v1521 = vsel %vm784, %v1516, %v1518
      %1524 = vst [vmem:[#allocation5 + $0x60] sm:$0xff] %v1520
      %1525 = vst [vmem:[#allocation5 + $0x68] sm:$0xf] %v1521
      %v1526 = vld [vmem:[%s6] sm:$0x3]
      %v1527 = vld [vmem:[#allocation5] sm:$0xff]
      %v1528 = vld [vmem:[#allocation5 + $0x8] sm:$0xf]
      %v1529 = vld [vmem:[#allocation5 + $0xc] sm:$0xff]
      %v1530 = vld [vmem:[#allocation5 + $0x14] sm:$0xf]
      %v1531 = vld [vmem:[#allocation5 + $0x18] sm:$0xff]
      %v1532 = vld [vmem:[#allocation5 + $0x20] sm:$0xf]
      %v1533 = vld [vmem:[#allocation5 + $0x24] sm:$0xff]
      %v1534 = vld [vmem:[#allocation5 + $0x2c] sm:$0xf]
      %v1535 = vld [vmem:[#allocation5 + $0x30] sm:$0xff]
      %v1536 = vld [vmem:[#allocation5 + $0x38] sm:$0xf]
      %v1537 = vld [vmem:[#allocation5 + $0x3c] sm:$0xff]
      %v1538 = vld [vmem:[#allocation5 + $0x44] sm:$0xf]
      %v1539 = vld [vmem:[#allocation5 + $0x48] sm:$0xff]
      %v1540 = vld [vmem:[#allocation5 + $0x50] sm:$0xf]
      %v1541 = vld [vmem:[#allocation5 + $0x54] sm:$0xff]
      %v1542 = vld [vmem:[#allocation5 + $0x5c] sm:$0xf]
      %v1543 = vld [vmem:[#allocation5 + $0x60] sm:$0xff]
      %v1544 = vld [vmem:[#allocation5 + $0x68] sm:$0xf]
      %v1545 = vld [vmem:[%s7] sm:$0x7]
      %1547 = vset.pattern.permute.xlu0 0
      %1548 = vperm.xlu0 %1547, %v1545
      %v1549 = vpop.permute.xlu0 %1548
      %v1569 = vunpack.c.l.b16 %v1527
      %v1570 = vunpack.c.h.b16 %v1527
      %v1571 = vunpack.c.l.b16 %v1528
      %v1572 = vunpack.c.l.b16 %v1529
      %v1573 = vunpack.c.h.b16 %v1529
      %v1574 = vunpack.c.l.b16 %v1530
      %v1575 = vunpack.c.l.b16 %v1531
      %v1576 = vunpack.c.h.b16 %v1531
      %v1577 = vunpack.c.l.b16 %v1532
      %v1578 = vunpack.c.l.b16 %v1533
      %v1579 = vunpack.c.h.b16 %v1533
      %v1580 = vunpack.c.l.b16 %v1534
      %v1581 = vunpack.c.l.b16 %v1535
      %v1582 = vunpack.c.h.b16 %v1535
      %v1583 = vunpack.c.l.b16 %v1536
      %v1584 = vunpack.c.l.b16 %v1537
      %v1585 = vunpack.c.h.b16 %v1537
      %v1586 = vunpack.c.l.b16 %v1538
      %v1587 = vunpack.c.l.b16 %v1539
      %v1588 = vunpack.c.h.b16 %v1539
      %v1589 = vunpack.c.l.b16 %v1540
      %v1590 = vunpack.c.l.b16 %v1541
      %v1591 = vunpack.c.h.b16 %v1541
      %v1592 = vunpack.c.l.b16 %v1542
      %v1593 = vunpack.c.l.b16 %v1543
      %v1594 = vunpack.c.h.b16 %v1543
      %v1595 = vunpack.c.l.b16 %v1544
      %v1596 = vpack.c.b16 %v1572, %v1569
      %v1597 = vpack.c.b16 %v1573, %v1570
      %v1598 = vpack.c.b16 %v1574, %v1571
      %v1599 = vpack.c.b16 %v1578, %v1575
      %v1600 = vpack.c.b16 %v1579, %v1576
      %v1601 = vpack.c.b16 %v1580, %v1577
      %v1602 = vpack.c.b16 %v1584, %v1581
      %v1603 = vpack.c.b16 %v1585, %v1582
      %v1604 = vpack.c.b16 %v1586, %v1583
      %v1605 = vpack.c.b16 %v1590, %v1587
      %v1606 = vpack.c.b16 %v1591, %v1588
      %v1607 = vpack.c.b16 %v1592, %v1589
      %v1608 = vpack.c.b16 %v1593, %v1593
      %v1609 = vpack.c.b16 %v1594, %v1594
      %v1610 = vpack.c.b16 %v1595, %v1595
      %v1624 = vsel %vm1240, %v1526, 0
      %v1627 = vsel %vm978, %v1608, 0
      %v1630 = vsel %vm978, %v1609, 0
      %v1633 = vsel %vm978, %v1610, 0
      %1635 = vmatprep.subr.bf16.mxu0 %v1597
      %1636 = vmatpush1.bf16.msra.mxu0 %v1596
      %1637 = vmatprep.subr.bf16.mxu0 %v1600
      %1638 = vmatpush1.bf16.msra.mxu0 %v1599
      %1639 = vmatprep.subr.bf16.mxu0 %v1603
      %1640 = vmatpush1.bf16.msra.mxu0 %v1602
      %1641 = vmatprep.subr.bf16.mxu0 %v1606
      %1642 = vmatpush1.bf16.msra.mxu0 %v1605
      %1643 = vmatprep.subr.bf16.mxu0 %v1630
      %1644 = vmatpush1.bf16.msra.mxu0 %v1627
      %1645 = vmatprep.subr.bf16.mxu0 0
      %1646 = vmatpush1.bf16.msra.mxu0 0
      %1647 = vmatprep.subr.bf16.mxu0 0
      %1648 = vmatpush1.bf16.msra.mxu0 0
      %1649 = vmatprep.subr.bf16.mxu0 0
      %1650 = vmatpush1.bf16.msra.mxu0 0
      %1651 = vmatprep.subr.bf16.mxu0 0
      %1652 = vmatpush1.bf16.msra.mxu0 0
      %1653 = vmatprep.subr.bf16.mxu0 0
      %1654 = vmatpush1.bf16.msra.mxu0 0
      %1655 = vmatprep.subr.bf16.mxu0 0
      %1656 = vmatpush1.bf16.msra.mxu0 0
      %1657 = vmatprep.subr.bf16.mxu0 0
      %1658 = vmatpush1.bf16.msra.mxu0 0
      %1659 = vmatprep.subr.bf16.mxu0 0
      %1660 = vmatpush1.bf16.msra.mxu0 0
      %1661 = vmatprep.subr.bf16.mxu0 0
      %1662 = vmatpush1.bf16.msra.mxu0 0
      %1663 = vmatprep.subr.bf16.mxu0 0
      %1664 = vmatpush1.bf16.msra.mxu0 0
      %1665 = vmatprep.subr.bf16.mxu0 0
      %1666 = vmatpush1.bf16.msra.mxu0 0
      %1667 = vmatprep.mubr.bf16.mxu0 0
      %1668 = vmatmul.mubr.bf16.gmra.mrb[0].mxu0 %v1624
      %v1669 = vpop.f32.mrb[0].mxu0
      %v1670 = vadd.f32 %v1549, %v1669
      %v1671 = vpop.f32.mrb[0].mxu0
      %v1672 = vadd.f32 %v1549, %v1671
      %v1673 = vpop.f32.mrb[0].mxu0
      %v1674 = vpop.f32.mrb[0].mxu0
      %1675 = vdwg.mxu0
      %1676 = vmatprep.subr.bf16.mxu0 0
      %1677 = vmatpush1.bf16.msra.mxu0 %v1598
      %1678 = vmatprep.subr.bf16.mxu0 0
      %1679 = vmatpush1.bf16.msra.mxu0 %v1601
      %1680 = vmatprep.subr.bf16.mxu0 0
      %1681 = vmatpush1.bf16.msra.mxu0 %v1604
      %1682 = vmatprep.subr.bf16.mxu0 0
      %1683 = vmatpush1.bf16.msra.mxu0 %v1607
      %1684 = vmatprep.subr.bf16.mxu0 0
      %1685 = vmatpush1.bf16.msra.mxu0 %v1633
      %1686 = vmatprep.subr.bf16.mxu0 0
      %1687 = vmatpush1.bf16.msra.mxu0 0
      %1688 = vmatprep.subr.bf16.mxu0 0
      %1689 = vmatpush1.bf16.msra.mxu0 0
      %1690 = vmatprep.subr.bf16.mxu0 0
      %1691 = vmatpush1.bf16.msra.mxu0 0
      %1692 = vmatprep.subr.bf16.mxu0 0
      %1693 = vmatpush1.bf16.msra.mxu0 0
      %1694 = vmatprep.subr.bf16.mxu0 0
      %1695 = vmatpush1.bf16.msra.mxu0 0
      %1696 = vmatprep.subr.bf16.mxu0 0
      %1697 = vmatpush1.bf16.msra.mxu0 0
      %1698 = vmatprep.subr.bf16.mxu0 0
      %1699 = vmatpush1.bf16.msra.mxu0 0
      %1700 = vmatprep.subr.bf16.mxu0 0
      %1701 = vmatpush1.bf16.msra.mxu0 0
      %1702 = vmatprep.subr.bf16.mxu0 0
      %1703 = vmatpush1.bf16.msra.mxu0 0
      %1704 = vmatprep.subr.bf16.mxu0 0
      %1705 = vmatpush1.bf16.msra.mxu0 0
      %1706 = vmatprep.subr.bf16.mxu0 0
      %1707 = vmatpush1.bf16.msra.mxu0 0
      %1708 = vmatprep.mubr.bf16.mxu0 0
      %1709 = vmatmul.mubr.bf16.gmra.mrb[0].mxu0 %v1624
      %v1710 = vpop.f32.mrb[0].mxu0
      %v1711 = vadd.f32 %v1549, %v1710
      %v1712 = vpop.f32.mrb[0].mxu0
      %v1713 = vpop.f32.mrb[0].mxu0
      %v1714 = vpop.f32.mrb[0].mxu0
      %1715 = vdwg.mxu0
      %v1716 = vmul.f32 %v1670, 0.5
      %v1717 = vmul.f32 %v1672, 0.5
      %v1718 = vmul.f32 %v1711, 0.5
      %v1719 = vtanh.pop %v1716
      %v1720 = vtanh.pop %v1717
      %v1721 = vtanh.pop %v1718
      %v1722 = vadd.f32 %v1719, 1.0
      %v1723 = vadd.f32 %v1720, 1.0
      %v1724 = vadd.f32 %v1721, 1.0
      %v1725 = vmul.f32 %v1722, 0.5
      %v1726 = vmul.f32 %v1723, 0.5
      %v1727 = vmul.f32 %v1724, 0.5
      %v1730 = vcombine.low %v1725, %v1726
      %1732 = vst [vmem:[%s359] sm:$0x77] %v1730
      %1733 = vst [vmem:[%s359 + $0x8] sm:$0x7] %v1727
      %p1734 = scmp.lt.s32.totalorder %s21, 1
      %s1735 = scalar_select %p1734, %s21, 1
      %s1736 = smul.addr %s1735, 3
      %s1737 = smul.addr %s1736, 4
      %s1738 = scalar_lea.vmem %s10, %s1737
      // Predicated region
      $region61: #{net_forward.9} parent=59 // pred_check
        %p1739 = pneg %p254
      $region62: #{net_forward.9} parent=59 // pred_check_branch
        %1741 = sbr.rel (%p1739) target = $region64
      $region63: #{net_forward.9} parent=59 // pred_region
        _
      $region64: #{net_forward.9} parent=59 // pred_fallthru
        _
    $region60: #{net_forward.9} parent=5 // pred_fallthru
      _
    %p1742 = scmp.le.s32.totalorder 2, %s16
    // Predicated region
    $region65: #{net_forward.9} parent=5 // pred_check
      %p1743 = pneg %p1742
    $region66: #{net_forward.9} parent=5 // pred_check_branch
      %1745 = sbr.rel (%p1743) target = $region68
    $region67: #{net_forward.9} parent=5 // pred_region
      %s1746 = ssub.s32 %s16, 2
      // Predicated region
      $region69: #{net_forward.9} parent=67 // pred_check
        %p1747 = pneg %p260
      $region70: #{net_forward.9} parent=67 // pred_check_branch
        %1749 = sbr.rel (%p1747) target = $region72
      $region71: #{net_forward.9} parent=67 // pred_region
        %p1750 = scmp.lt.s32.totalorder %s22, 1
        %s1751 = scalar_select %p1750, %s22, 1
        %s1752 = smul.addr %s1751, 3
        %s1753 = smul.addr %s1752, 4
        %s1754 = scalar_lea.vmem %s10, %s1753
      $region72: #{net_forward.9} parent=67 // pred_fallthru
        _
    $region68: #{net_forward.9} parent=5 // pred_fallthru
      _
  $region6: #{net_forward.9} parent=0 // loop_footer
    %s20 = sadd.s32 1, %s16
  $region7: #{net_forward.9} parent=0 // loop_footer_branch
    %15 = sbr.rel target = $region3
  $region8: #{net_forward.9} parent=0 // loop_exit
    _

</llo_original>
